<compile_context>
chip_gen: v7x
topology: tpu7x:2x2x1
jax: 0.10.0
libtpu: 0.0.40
codegen_flags: <defaults>
</compile_context>

<pallas_src>
import functools

import jax
import jax.numpy as jnp
from jax import lax
from jax.experimental import pallas as pl
from jax.experimental.pallas import tpu as pltpu


_TAPS = tuple((dy, dx) for dy in (-1, 0, 1) for dx in (-1, 0, 1))


def _make_tap_masks_f32(H, W):
    """(9, H*W) f32 validity masks for each 3x3 tap ('same' zero padding).

    Batch-invariant, computed once in the wrapper.  Mask correctness relies on
    single-roll wraps (k = dy*W + dx) being fully masked at row/column borders,
    which holds for 3x3 / pad=1 (would need rework for other kernel sizes).
    """
    HW = H * W
    p = jnp.arange(HW, dtype=jnp.int32)
    y = p // W
    x = p % W
    rows = []
    for dy, dx in _TAPS:
        m = jnp.ones((HW,), dtype=jnp.bool_)
        if dy == -1:
            m = m & (y >= 1)
        elif dy == 1:
            m = m & (y <= H - 2)
        if dx == -1:
            m = m & (x >= 1)
        elif dx == 1:
            m = m & (x <= W - 2)
        rows.append(m)
    return jnp.stack(rows, axis=0).astype(jnp.float32)


def _conv3x3_taps(inp_f32, weight_refs, masks_ref, H, W, cdtype):
    """'Same' 3x3 conv(s) of inp_f32 (Cin, H*W) via per-tap accumulation.

    For each tap: lane-roll the flattened image, zero out-of-image positions
    with the precomputed mask (f32 elementwise, v5e-safe), then accumulate
    W_t @ tap for every weight ref (only the dot operands use `cdtype`).
    weight_refs: list of (9, Cout_i, Cin) refs.  Returns list of (Cout_i, HW)
    float32 accumulators (bias NOT added).  No (9*Cin, HW) im2col matrix is
    ever materialized.
    """
    HW = H * W
    accs = [None] * len(weight_refs)
    for t, (dy, dx) in enumerate(_TAPS):
        k = dy * W + dx
        tap = inp_f32 if k == 0 else pltpu.roll(inp_f32, shift=(-k) % HW, axis=1)
        if (dy, dx) != (0, 0):
            tap = masks_ref[t:t + 1] * tap          # center tap needs no mask
        tap_c = tap.astype(cdtype)
        for i, wref in enumerate(weight_refs):
            c = jnp.dot(wref[t], tap_c, preferred_element_type=jnp.float32)
            accs[i] = c if accs[i] is None else accs[i] + c
    return accs


def _invblock_kernel(x_ref, masks_ref, winv1_ref, winv2_ref,
                     wf_ref, bf_ref, wh_ref, bh_ref, wg_ref, bg_ref,
                     out_ref, *, H, W, split_len1, split_len2, clamp):
    s1, s2 = split_len1, split_len2
    cdtype = x_ref.dtype
    x = x_ref[0]                                                   # (C, HW)

    # Invertible 1x1 conv; weights pre-split so x1/x2 need no sublane slicing.
    x1 = jnp.dot(winv1_ref[...], x, preferred_element_type=jnp.float32)  # (s1, HW)
    x2 = jnp.dot(winv2_ref[...], x, preferred_element_type=jnp.float32)  # (s2, HW)

    # y1 = x1 + F(x2)
    (f_out,) = _conv3x3_taps(x2, [wf_ref], masks_ref, H, W, cdtype)
    y1 = x1 + f_out + bf_ref[...]

    # H and G convs share the rolled/masked taps of y1.
    h_out, g_out = _conv3x3_taps(y1, [wh_ref, wg_ref], masks_ref, H, W, cdtype)
    s = clamp * (jax.nn.sigmoid(h_out + bh_ref[...]) * 2.0 - 1.0)
    y2 = x2 * jnp.exp(s) + g_out + bg_ref[...]

    # Lane-dense sub-slice stores (no concatenated output temp / relayout).
    out_ref[0, 0:s1, :] = y1.astype(out_ref.dtype)
    out_ref[0, s1:s1 + s2, :] = y2.astype(out_ref.dtype)


def invblock_forward(x_nchw, params, *, split_len1, clamp=0.8,
                     compute_dtype=jnp.float32):
    B, C, H, W = x_nchw.shape
    s1 = split_len1
    s2 = C - s1
    HW = H * W
    assert HW % 128 == 0, "flattened spatial dim must be lane-aligned"

    x = x_nchw.reshape(B, C, HW).astype(compute_dtype)
    masks = _make_tap_masks_f32(H, W)                              # (9, HW) f32

    def pack_conv(w):   # (Cout, Cin, 3, 3) -> (9, Cout, Cin), tap-major (_TAPS order)
        co, ci = w.shape[0], w.shape[1]
        return jnp.transpose(w, (2, 3, 0, 1)).reshape(9, co, ci).astype(compute_dtype)

    winv = params['winv'].astype(compute_dtype)
    winv1, winv2 = winv[:s1], winv[s1:]
    wf9 = pack_conv(params['wf'])                                  # (9, s1, s2)
    wh9 = pack_conv(params['wh'])                                  # (9, s2, s1)
    wg9 = pack_conv(params['wg'])                                  # (9, s2, s1)
    bf = params['bf'].reshape(s1, 1).astype(jnp.float32)
    bh = params['bh'].reshape(s2, 1).astype(jnp.float32)
    bg = params['bg'].reshape(s2, 1).astype(jnp.float32)

    kernel = functools.partial(_invblock_kernel, H=H, W=W,
                               split_len1=s1, split_len2=s2, clamp=clamp)

    def resident_spec(arr):        # whole array, same block every grid step
        zeros = (0,) * arr.ndim
        return pl.BlockSpec(arr.shape, lambda b, _z=zeros: _z)

    # Per-step VMEM working-set estimate so the scoped limit never bounds the
    # pipeline (capped at v7x's 64 MiB physical VMEM).
    in_bytes = jnp.dtype(compute_dtype).itemsize
    est = (2 * C * HW * in_bytes        # x block, double-buffered
           + 2 * C * HW * 4             # out block, double-buffered
           + 9 * HW * 4                 # resident tap masks
           + 12 * C * HW * 4)           # x1/x2/y1/y2/h/g/tap f32 temporaries
    vmem_limit = int(min(max(32 * 2**20, 2 * est), 64 * 2**20))

    out = pl.pallas_call(
        kernel,
        out_shape=jax.ShapeDtypeStruct((B, C, HW), jnp.float32),
        grid_spec=pltpu.PrefetchScalarGridSpec(
            num_scalar_prefetch=0,
            grid=(B,),
            in_specs=[
                pl.BlockSpec((1, C, HW), lambda b: (b, 0, 0)),
                resident_spec(masks),
                resident_spec(winv1), resident_spec(winv2),
                resident_spec(wf9), resident_spec(bf),
                resident_spec(wh9), resident_spec(bh),
                resident_spec(wg9), resident_spec(bg),
            ],
            out_specs=pl.BlockSpec((1, C, HW), lambda b: (b, 0, 0)),
        ),
        compiler_params=pltpu.CompilerParams(
            dimension_semantics=("parallel",),       # batch fully independent
            vmem_limit_bytes=vmem_limit),
    )(x, masks, winv1, winv2, wf9, bf, wh9, bh, wg9, bg)

    return out.reshape(B, C, H, W)


def init_params(key, channel_num, channel_split_num):
    s1 = channel_split_num
    s2 = channel_num - s1
    keys = jax.random.split(key, 7)

    # InvertibleConv1x1: random orthogonal init (QR of a normal matrix).
    winv = jnp.linalg.qr(
        jax.random.normal(keys[0], (channel_num, channel_num), dtype=jnp.float32))[0]

    def conv_w(k, cout, cin, scale=0.1):
        return scale * jax.random.normal(k, (cout, cin, 3, 3), dtype=jnp.float32)

    def conv_b(k, cout, scale=0.1):
        return scale * jax.random.normal(k, (cout,), dtype=jnp.float32)

    return dict(
        winv=winv,
        wf=conv_w(keys[1], s1, s2), bf=conv_b(keys[2], s1),   # F: s2 -> s1
        wh=conv_w(keys[3], s2, s1), bh=conv_b(keys[4], s2),   # H: s1 -> s2
        wg=conv_w(keys[5], s2, s1), bg=conv_b(keys[6], s2),   # G: s1 -> s2
    )


def invblock_reference(x_nchw, params, *, split_len1, clamp=0.8):
    """Pure-JAX reference matching the PyTorch forward semantics (NCHW)."""
    s1 = split_len1
    x = x_nchw.astype(jnp.float32)
    z = jnp.einsum('oc,bchw->bohw', params['winv'], x)
    x1, x2 = z[:, :s1], z[:, s1:]

    def conv(inp, w, b):
        y = lax.conv_general_dilated(inp, w, (1, 1), 'SAME',
                                     dimension_numbers=('NCHW', 'OIHW', 'NCHW'))
        return y + b.reshape(1, -1, 1, 1)

    y1 = x1 + conv(x2, params['wf'], params['bf'])
    s = clamp * (jax.nn.sigmoid(conv(y1, params['wh'], params['bh'])) * 2.0 - 1.0)
    y2 = x2 * jnp.exp(s) + conv(y1, params['wg'], params['bg'])
    return jnp.concatenate([y1, y2], axis=1)


if __name__ == "__main__":
    key = jax.random.PRNGKey(0)
    k_x, k_p = jax.random.split(key)

    B, C, H, W = 2, 4, 16, 16
    channel_split_num = 2   # split_len1 = 2, split_len2 = 2

    x = jax.random.normal(k_x, (B, C, H, W), dtype=jnp.float32)
    params = init_params(k_p, C, channel_split_num)

    ref = jax.block_until_ready(
        invblock_reference(x, params, split_len1=channel_split_num))

    # f32 matmul operands: tight tolerance.
    out_f32 = jax.block_until_ready(
        invblock_forward(x, params, split_len1=channel_split_num))
    assert out_f32.shape == (B, C, H, W), out_f32.shape
    err_f32 = float(jnp.max(jnp.abs(out_f32 - ref)))
    assert err_f32 < 2e-4, f"f32 mismatch vs reference: {err_f32}"

    # bf16 matmul operands (v6e/v7x HBM-traffic optimization): loose tolerance.
    out_bf16 = jax.block_until_ready(
        invblock_forward(x, params, split_len1=channel_split_num,
                         compute_dtype=jnp.bfloat16))
    err_bf16 = float(jnp.max(jnp.abs(out_bf16 - ref)))
    assert err_bf16 < 1e-1, f"bf16 mismatch vs reference: {err_bf16}"

    print("KERNEL_OK")
</pallas_src>

<mosaic_0001>
module attributes {stable_mosaic.version = 11 : i64} {
  func.func @_invblock_kernel(%arg0: i32, %arg1: memref<1x4x256xf32, #tpu.memory_space<vmem>>, %arg2: memref<9x256xf32, #tpu.memory_space<vmem>>, %arg3: memref<2x4xf32, #tpu.memory_space<vmem>>, %arg4: memref<2x4xf32, #tpu.memory_space<vmem>>, %arg5: memref<9x2x2xf32, #tpu.memory_space<vmem>>, %arg6: memref<2x1xf32, #tpu.memory_space<vmem>>, %arg7: memref<9x2x2xf32, #tpu.memory_space<vmem>>, %arg8: memref<2x1xf32, #tpu.memory_space<vmem>>, %arg9: memref<9x2x2xf32, #tpu.memory_space<vmem>>, %arg10: memref<2x1xf32, #tpu.memory_space<vmem>>, %arg11: memref<1x4x256xf32, #tpu.memory_space<vmem>>) attributes {dimension_semantics = [#tpu.dimension_semantics<parallel>], iteration_bounds = array<i64: 2>, scalar_prefetch = 0 : i64, scratch_operands = 0 : i64, tpu.core_type = #tpu.core_type<tc>, window_params = [{transform_indices = @transform_0, window_bounds = array<i64: 1, 4, 256>}, {pipeline_mode = #tpu.pipeline_mode<synchronous>, transform_indices = @transform_1, window_bounds = array<i64: 9, 256>}, {pipeline_mode = #tpu.pipeline_mode<synchronous>, transform_indices = @transform_2, window_bounds = array<i64: 2, 4>}, {pipeline_mode = #tpu.pipeline_mode<synchronous>, transform_indices = @transform_3, window_bounds = array<i64: 2, 4>}, {pipeline_mode = #tpu.pipeline_mode<synchronous>, transform_indices = @transform_4, window_bounds = array<i64: 9, 2, 2>}, {pipeline_mode = #tpu.pipeline_mode<synchronous>, transform_indices = @transform_5, window_bounds = array<i64: 2, 1>}, {pipeline_mode = #tpu.pipeline_mode<synchronous>, transform_indices = @transform_6, window_bounds = array<i64: 9, 2, 2>}, {pipeline_mode = #tpu.pipeline_mode<synchronous>, transform_indices = @transform_7, window_bounds = array<i64: 2, 1>}, {pipeline_mode = #tpu.pipeline_mode<synchronous>, transform_indices = @transform_8, window_bounds = array<i64: 9, 2, 2>}, {pipeline_mode = #tpu.pipeline_mode<synchronous>, transform_indices = @transform_9, window_bounds = array<i64: 2, 1>}, {transform_indices = @transform_10, window_bounds = array<i64: 1, 4, 256>}]} {
    %c0 = arith.constant 0 : index
    %c0_0 = arith.constant 0 : index
    %c0_1 = arith.constant 0 : index
    %0 = vector.load %arg1[%c0, %c0_0, %c0_1] : memref<1x4x256xf32, #tpu.memory_space<vmem>>, vector<1x4x256xf32>
    %1 = vector.shape_cast %0 : vector<1x4x256xf32> to vector<4x256xf32>
    %c0_2 = arith.constant 0 : index
    %c0_3 = arith.constant 0 : index
    %2 = vector.load %arg3[%c0_2, %c0_3] : memref<2x4xf32, #tpu.memory_space<vmem>>, vector<2x4xf32>
    %cst = arith.constant dense<0.000000e+00> : vector<2x256xf32>
    %3 = tpu.matmul %2, %1, %cst {dimension_numbers = #tpu.dot_dimension_numbers<[1], [0], [0], [1], [0, 0, 1, 1], [], []>} : vector<2x4xf32>, vector<4x256xf32>, vector<2x256xf32> -> vector<2x256xf32>
    %c0_4 = arith.constant 0 : index
    %c0_5 = arith.constant 0 : index
    %4 = vector.load %arg4[%c0_4, %c0_5] : memref<2x4xf32, #tpu.memory_space<vmem>>, vector<2x4xf32>
    %cst_6 = arith.constant dense<0.000000e+00> : vector<2x256xf32>
    %5 = tpu.matmul %4, %1, %cst_6 {dimension_numbers = #tpu.dot_dimension_numbers<[1], [0], [0], [1], [0, 0, 1, 1], [], []>} : vector<2x4xf32>, vector<4x256xf32>, vector<2x256xf32> -> vector<2x256xf32>
    %c17_i32 = arith.constant 17 : i32
    %6 = tpu.dynamic_rotate %5 by %c17_i32 dim 1 : vector<2x256xf32>, i32 -> vector<2x256xf32>
    %c0_7 = arith.constant 0 : index
    %c0_8 = arith.constant 0 : index
    %7 = vector.load %arg2[%c0_7, %c0_8] : memref<9x256xf32, #tpu.memory_space<vmem>>, vector<1x256xf32>
    %8 = vector.broadcast %7 : vector<1x256xf32> to vector<2x256xf32>
    %9 = arith.mulf %8, %6 : vector<2x256xf32>
    %c0_9 = arith.constant 0 : index
    %c0_10 = arith.constant 0 : index
    %c0_11 = arith.constant 0 : index
    %10 = vector.load %arg5[%c0_9, %c0_10, %c0_11] : memref<9x2x2xf32, #tpu.memory_space<vmem>>, vector<1x2x2xf32>
    %11 = vector.shape_cast %10 : vector<1x2x2xf32> to vector<2x2xf32>
    %cst_12 = arith.constant dense<0.000000e+00> : vector<2x256xf32>
    %12 = tpu.matmul %11, %9, %cst_12 {dimension_numbers = #tpu.dot_dimension_numbers<[1], [0], [0], [1], [0, 0, 1, 1], [], []>} : vector<2x2xf32>, vector<2x256xf32>, vector<2x256xf32> -> vector<2x256xf32>
    %c16_i32 = arith.constant 16 : i32
    %13 = tpu.dynamic_rotate %5 by %c16_i32 dim 1 : vector<2x256xf32>, i32 -> vector<2x256xf32>
    %c1 = arith.constant 1 : index
    %c0_13 = arith.constant 0 : index
    %14 = vector.load %arg2[%c1, %c0_13] : memref<9x256xf32, #tpu.memory_space<vmem>>, vector<1x256xf32>
    %15 = vector.broadcast %14 : vector<1x256xf32> to vector<2x256xf32>
    %16 = arith.mulf %15, %13 : vector<2x256xf32>
    %c1_14 = arith.constant 1 : index
    %c0_15 = arith.constant 0 : index
    %c0_16 = arith.constant 0 : index
    %17 = vector.load %arg5[%c1_14, %c0_15, %c0_16] : memref<9x2x2xf32, #tpu.memory_space<vmem>>, vector<1x2x2xf32>
    %18 = vector.shape_cast %17 : vector<1x2x2xf32> to vector<2x2xf32>
    %cst_17 = arith.constant dense<0.000000e+00> : vector<2x256xf32>
    %19 = tpu.matmul %18, %16, %cst_17 {dimension_numbers = #tpu.dot_dimension_numbers<[1], [0], [0], [1], [0, 0, 1, 1], [], []>} : vector<2x2xf32>, vector<2x256xf32>, vector<2x256xf32> -> vector<2x256xf32>
    %20 = arith.addf %12, %19 : vector<2x256xf32>
    %c15_i32 = arith.constant 15 : i32
    %21 = tpu.dynamic_rotate %5 by %c15_i32 dim 1 : vector<2x256xf32>, i32 -> vector<2x256xf32>
    %c2 = arith.constant 2 : index
    %c0_18 = arith.constant 0 : index
    %22 = vector.load %arg2[%c2, %c0_18] : memref<9x256xf32, #tpu.memory_space<vmem>>, vector<1x256xf32>
    %23 = vector.broadcast %22 : vector<1x256xf32> to vector<2x256xf32>
    %24 = arith.mulf %23, %21 : vector<2x256xf32>
    %c2_19 = arith.constant 2 : index
    %c0_20 = arith.constant 0 : index
    %c0_21 = arith.constant 0 : index
    %25 = vector.load %arg5[%c2_19, %c0_20, %c0_21] : memref<9x2x2xf32, #tpu.memory_space<vmem>>, vector<1x2x2xf32>
    %26 = vector.shape_cast %25 : vector<1x2x2xf32> to vector<2x2xf32>
    %cst_22 = arith.constant dense<0.000000e+00> : vector<2x256xf32>
    %27 = tpu.matmul %26, %24, %cst_22 {dimension_numbers = #tpu.dot_dimension_numbers<[1], [0], [0], [1], [0, 0, 1, 1], [], []>} : vector<2x2xf32>, vector<2x256xf32>, vector<2x256xf32> -> vector<2x256xf32>
    %28 = arith.addf %20, %27 : vector<2x256xf32>
    %c1_i32 = arith.constant 1 : i32
    %29 = tpu.dynamic_rotate %5 by %c1_i32 dim 1 : vector<2x256xf32>, i32 -> vector<2x256xf32>
    %c3 = arith.constant 3 : index
    %c0_23 = arith.constant 0 : index
    %30 = vector.load %arg2[%c3, %c0_23] : memref<9x256xf32, #tpu.memory_space<vmem>>, vector<1x256xf32>
    %31 = vector.broadcast %30 : vector<1x256xf32> to vector<2x256xf32>
    %32 = arith.mulf %31, %29 : vector<2x256xf32>
    %c3_24 = arith.constant 3 : index
    %c0_25 = arith.constant 0 : index
    %c0_26 = arith.constant 0 : index
    %33 = vector.load %arg5[%c3_24, %c0_25, %c0_26] : memref<9x2x2xf32, #tpu.memory_space<vmem>>, vector<1x2x2xf32>
    %34 = vector.shape_cast %33 : vector<1x2x2xf32> to vector<2x2xf32>
    %cst_27 = arith.constant dense<0.000000e+00> : vector<2x256xf32>
    %35 = tpu.matmul %34, %32, %cst_27 {dimension_numbers = #tpu.dot_dimension_numbers<[1], [0], [0], [1], [0, 0, 1, 1], [], []>} : vector<2x2xf32>, vector<2x256xf32>, vector<2x256xf32> -> vector<2x256xf32>
    %36 = arith.addf %28, %35 : vector<2x256xf32>
    %c4 = arith.constant 4 : index
    %c0_28 = arith.constant 0 : index
    %c0_29 = arith.constant 0 : index
    %37 = vector.load %arg5[%c4, %c0_28, %c0_29] : memref<9x2x2xf32, #tpu.memory_space<vmem>>, vector<1x2x2xf32>
    %38 = vector.shape_cast %37 : vector<1x2x2xf32> to vector<2x2xf32>
    %cst_30 = arith.constant dense<0.000000e+00> : vector<2x256xf32>
    %39 = tpu.matmul %38, %5, %cst_30 {dimension_numbers = #tpu.dot_dimension_numbers<[1], [0], [0], [1], [0, 0, 1, 1], [], []>} : vector<2x2xf32>, vector<2x256xf32>, vector<2x256xf32> -> vector<2x256xf32>
    %40 = arith.addf %36, %39 : vector<2x256xf32>
    %c255_i32 = arith.constant 255 : i32
    %41 = tpu.dynamic_rotate %5 by %c255_i32 dim 1 : vector<2x256xf32>, i32 -> vector<2x256xf32>
    %c5 = arith.constant 5 : index
    %c0_31 = arith.constant 0 : index
    %42 = vector.load %arg2[%c5, %c0_31] : memref<9x256xf32, #tpu.memory_space<vmem>>, vector<1x256xf32>
    %43 = vector.broadcast %42 : vector<1x256xf32> to vector<2x256xf32>
    %44 = arith.mulf %43, %41 : vector<2x256xf32>
    %c5_32 = arith.constant 5 : index
    %c0_33 = arith.constant 0 : index
    %c0_34 = arith.constant 0 : index
    %45 = vector.load %arg5[%c5_32, %c0_33, %c0_34] : memref<9x2x2xf32, #tpu.memory_space<vmem>>, vector<1x2x2xf32>
    %46 = vector.shape_cast %45 : vector<1x2x2xf32> to vector<2x2xf32>
    %cst_35 = arith.constant dense<0.000000e+00> : vector<2x256xf32>
    %47 = tpu.matmul %46, %44, %cst_35 {dimension_numbers = #tpu.dot_dimension_numbers<[1], [0], [0], [1], [0, 0, 1, 1], [], []>} : vector<2x2xf32>, vector<2x256xf32>, vector<2x256xf32> -> vector<2x256xf32>
    %48 = arith.addf %40, %47 : vector<2x256xf32>
    %c241_i32 = arith.constant 241 : i32
    %49 = tpu.dynamic_rotate %5 by %c241_i32 dim 1 : vector<2x256xf32>, i32 -> vector<2x256xf32>
    %c6 = arith.constant 6 : index
    %c0_36 = arith.constant 0 : index
    %50 = vector.load %arg2[%c6, %c0_36] : memref<9x256xf32, #tpu.memory_space<vmem>>, vector<1x256xf32>
    %51 = vector.broadcast %50 : vector<1x256xf32> to vector<2x256xf32>
    %52 = arith.mulf %51, %49 : vector<2x256xf32>
    %c6_37 = arith.constant 6 : index
    %c0_38 = arith.constant 0 : index
    %c0_39 = arith.constant 0 : index
    %53 = vector.load %arg5[%c6_37, %c0_38, %c0_39] : memref<9x2x2xf32, #tpu.memory_space<vmem>>, vector<1x2x2xf32>
    %54 = vector.shape_cast %53 : vector<1x2x2xf32> to vector<2x2xf32>
    %cst_40 = arith.constant dense<0.000000e+00> : vector<2x256xf32>
    %55 = tpu.matmul %54, %52, %cst_40 {dimension_numbers = #tpu.dot_dimension_numbers<[1], [0], [0], [1], [0, 0, 1, 1], [], []>} : vector<2x2xf32>, vector<2x256xf32>, vector<2x256xf32> -> vector<2x256xf32>
    %56 = arith.addf %48, %55 : vector<2x256xf32>
    %c240_i32 = arith.constant 240 : i32
    %57 = tpu.dynamic_rotate %5 by %c240_i32 dim 1 : vector<2x256xf32>, i32 -> vector<2x256xf32>
    %c7 = arith.constant 7 : index
    %c0_41 = arith.constant 0 : index
    %58 = vector.load %arg2[%c7, %c0_41] : memref<9x256xf32, #tpu.memory_space<vmem>>, vector<1x256xf32>
    %59 = vector.broadcast %58 : vector<1x256xf32> to vector<2x256xf32>
    %60 = arith.mulf %59, %57 : vector<2x256xf32>
    %c7_42 = arith.constant 7 : index
    %c0_43 = arith.constant 0 : index
    %c0_44 = arith.constant 0 : index
    %61 = vector.load %arg5[%c7_42, %c0_43, %c0_44] : memref<9x2x2xf32, #tpu.memory_space<vmem>>, vector<1x2x2xf32>
    %62 = vector.shape_cast %61 : vector<1x2x2xf32> to vector<2x2xf32>
    %cst_45 = arith.constant dense<0.000000e+00> : vector<2x256xf32>
    %63 = tpu.matmul %62, %60, %cst_45 {dimension_numbers = #tpu.dot_dimension_numbers<[1], [0], [0], [1], [0, 0, 1, 1], [], []>} : vector<2x2xf32>, vector<2x256xf32>, vector<2x256xf32> -> vector<2x256xf32>
    %64 = arith.addf %56, %63 : vector<2x256xf32>
    %c239_i32 = arith.constant 239 : i32
    %65 = tpu.dynamic_rotate %5 by %c239_i32 dim 1 : vector<2x256xf32>, i32 -> vector<2x256xf32>
    %c8 = arith.constant 8 : index
    %c0_46 = arith.constant 0 : index
    %66 = vector.load %arg2[%c8, %c0_46] : memref<9x256xf32, #tpu.memory_space<vmem>>, vector<1x256xf32>
    %67 = vector.broadcast %66 : vector<1x256xf32> to vector<2x256xf32>
    %68 = arith.mulf %67, %65 : vector<2x256xf32>
    %c8_47 = arith.constant 8 : index
    %c0_48 = arith.constant 0 : index
    %c0_49 = arith.constant 0 : index
    %69 = vector.load %arg5[%c8_47, %c0_48, %c0_49] : memref<9x2x2xf32, #tpu.memory_space<vmem>>, vector<1x2x2xf32>
    %70 = vector.shape_cast %69 : vector<1x2x2xf32> to vector<2x2xf32>
    %cst_50 = arith.constant dense<0.000000e+00> : vector<2x256xf32>
    %71 = tpu.matmul %70, %68, %cst_50 {dimension_numbers = #tpu.dot_dimension_numbers<[1], [0], [0], [1], [0, 0, 1, 1], [], []>} : vector<2x2xf32>, vector<2x256xf32>, vector<2x256xf32> -> vector<2x256xf32>
    %72 = arith.addf %64, %71 : vector<2x256xf32>
    %73 = arith.addf %3, %72 : vector<2x256xf32>
    %c0_51 = arith.constant 0 : index
    %c0_52 = arith.constant 0 : index
    %74 = vector.load %arg6[%c0_51, %c0_52] : memref<2x1xf32, #tpu.memory_space<vmem>>, vector<2x1xf32>
    %75 = vector.broadcast %74 : vector<2x1xf32> to vector<2x256xf32>
    %76 = arith.addf %73, %75 : vector<2x256xf32>
    %c17_i32_53 = arith.constant 17 : i32
    %77 = tpu.dynamic_rotate %76 by %c17_i32_53 dim 1 : vector<2x256xf32>, i32 -> vector<2x256xf32>
    %c0_54 = arith.constant 0 : index
    %c0_55 = arith.constant 0 : index
    %78 = vector.load %arg2[%c0_54, %c0_55] : memref<9x256xf32, #tpu.memory_space<vmem>>, vector<1x256xf32>
    %79 = vector.broadcast %78 : vector<1x256xf32> to vector<2x256xf32>
    %80 = arith.mulf %79, %77 : vector<2x256xf32>
    %c0_56 = arith.constant 0 : index
    %c0_57 = arith.constant 0 : index
    %c0_58 = arith.constant 0 : index
    %81 = vector.load %arg7[%c0_56, %c0_57, %c0_58] : memref<9x2x2xf32, #tpu.memory_space<vmem>>, vector<1x2x2xf32>
    %82 = vector.shape_cast %81 : vector<1x2x2xf32> to vector<2x2xf32>
    %cst_59 = arith.constant dense<0.000000e+00> : vector<2x256xf32>
    %83 = tpu.matmul %82, %80, %cst_59 {dimension_numbers = #tpu.dot_dimension_numbers<[1], [0], [0], [1], [0, 0, 1, 1], [], []>} : vector<2x2xf32>, vector<2x256xf32>, vector<2x256xf32> -> vector<2x256xf32>
    %c0_60 = arith.constant 0 : index
    %c0_61 = arith.constant 0 : index
    %c0_62 = arith.constant 0 : index
    %84 = vector.load %arg9[%c0_60, %c0_61, %c0_62] : memref<9x2x2xf32, #tpu.memory_space<vmem>>, vector<1x2x2xf32>
    %85 = vector.shape_cast %84 : vector<1x2x2xf32> to vector<2x2xf32>
    %cst_63 = arith.constant dense<0.000000e+00> : vector<2x256xf32>
    %86 = tpu.matmul %85, %80, %cst_63 {dimension_numbers = #tpu.dot_dimension_numbers<[1], [0], [0], [1], [0, 0, 1, 1], [], []>} : vector<2x2xf32>, vector<2x256xf32>, vector<2x256xf32> -> vector<2x256xf32>
    %c16_i32_64 = arith.constant 16 : i32
    %87 = tpu.dynamic_rotate %76 by %c16_i32_64 dim 1 : vector<2x256xf32>, i32 -> vector<2x256xf32>
    %c1_65 = arith.constant 1 : index
    %c0_66 = arith.constant 0 : index
    %88 = vector.load %arg2[%c1_65, %c0_66] : memref<9x256xf32, #tpu.memory_space<vmem>>, vector<1x256xf32>
    %89 = vector.broadcast %88 : vector<1x256xf32> to vector<2x256xf32>
    %90 = arith.mulf %89, %87 : vector<2x256xf32>
    %c1_67 = arith.constant 1 : index
    %c0_68 = arith.constant 0 : index
    %c0_69 = arith.constant 0 : index
    %91 = vector.load %arg7[%c1_67, %c0_68, %c0_69] : memref<9x2x2xf32, #tpu.memory_space<vmem>>, vector<1x2x2xf32>
    %92 = vector.shape_cast %91 : vector<1x2x2xf32> to vector<2x2xf32>
    %cst_70 = arith.constant dense<0.000000e+00> : vector<2x256xf32>
    %93 = tpu.matmul %92, %90, %cst_70 {dimension_numbers = #tpu.dot_dimension_numbers<[1], [0], [0], [1], [0, 0, 1, 1], [], []>} : vector<2x2xf32>, vector<2x256xf32>, vector<2x256xf32> -> vector<2x256xf32>
    %94 = arith.addf %83, %93 : vector<2x256xf32>
    %c1_71 = arith.constant 1 : index
    %c0_72 = arith.constant 0 : index
    %c0_73 = arith.constant 0 : index
    %95 = vector.load %arg9[%c1_71, %c0_72, %c0_73] : memref<9x2x2xf32, #tpu.memory_space<vmem>>, vector<1x2x2xf32>
    %96 = vector.shape_cast %95 : vector<1x2x2xf32> to vector<2x2xf32>
    %cst_74 = arith.constant dense<0.000000e+00> : vector<2x256xf32>
    %97 = tpu.matmul %96, %90, %cst_74 {dimension_numbers = #tpu.dot_dimension_numbers<[1], [0], [0], [1], [0, 0, 1, 1], [], []>} : vector<2x2xf32>, vector<2x256xf32>, vector<2x256xf32> -> vector<2x256xf32>
    %98 = arith.addf %86, %97 : vector<2x256xf32>
    %c15_i32_75 = arith.constant 15 : i32
    %99 = tpu.dynamic_rotate %76 by %c15_i32_75 dim 1 : vector<2x256xf32>, i32 -> vector<2x256xf32>
    %c2_76 = arith.constant 2 : index
    %c0_77 = arith.constant 0 : index
    %100 = vector.load %arg2[%c2_76, %c0_77] : memref<9x256xf32, #tpu.memory_space<vmem>>, vector<1x256xf32>
    %101 = vector.broadcast %100 : vector<1x256xf32> to vector<2x256xf32>
    %102 = arith.mulf %101, %99 : vector<2x256xf32>
    %c2_78 = arith.constant 2 : index
    %c0_79 = arith.constant 0 : index
    %c0_80 = arith.constant 0 : index
    %103 = vector.load %arg7[%c2_78, %c0_79, %c0_80] : memref<9x2x2xf32, #tpu.memory_space<vmem>>, vector<1x2x2xf32>
    %104 = vector.shape_cast %103 : vector<1x2x2xf32> to vector<2x2xf32>
    %cst_81 = arith.constant dense<0.000000e+00> : vector<2x256xf32>
    %105 = tpu.matmul %104, %102, %cst_81 {dimension_numbers = #tpu.dot_dimension_numbers<[1], [0], [0], [1], [0, 0, 1, 1], [], []>} : vector<2x2xf32>, vector<2x256xf32>, vector<2x256xf32> -> vector<2x256xf32>
    %106 = arith.addf %94, %105 : vector<2x256xf32>
    %c2_82 = arith.constant 2 : index
    %c0_83 = arith.constant 0 : index
    %c0_84 = arith.constant 0 : index
    %107 = vector.load %arg9[%c2_82, %c0_83, %c0_84] : memref<9x2x2xf32, #tpu.memory_space<vmem>>, vector<1x2x2xf32>
    %108 = vector.shape_cast %107 : vector<1x2x2xf32> to vector<2x2xf32>
    %cst_85 = arith.constant dense<0.000000e+00> : vector<2x256xf32>
    %109 = tpu.matmul %108, %102, %cst_85 {dimension_numbers = #tpu.dot_dimension_numbers<[1], [0], [0], [1], [0, 0, 1, 1], [], []>} : vector<2x2xf32>, vector<2x256xf32>, vector<2x256xf32> -> vector<2x256xf32>
    %110 = arith.addf %98, %109 : vector<2x256xf32>
    %c1_i32_86 = arith.constant 1 : i32
    %111 = tpu.dynamic_rotate %76 by %c1_i32_86 dim 1 : vector<2x256xf32>, i32 -> vector<2x256xf32>
    %c3_87 = arith.constant 3 : index
    %c0_88 = arith.constant 0 : index
    %112 = vector.load %arg2[%c3_87, %c0_88] : memref<9x256xf32, #tpu.memory_space<vmem>>, vector<1x256xf32>
    %113 = vector.broadcast %112 : vector<1x256xf32> to vector<2x256xf32>
    %114 = arith.mulf %113, %111 : vector<2x256xf32>
    %c3_89 = arith.constant 3 : index
    %c0_90 = arith.constant 0 : index
    %c0_91 = arith.constant 0 : index
    %115 = vector.load %arg7[%c3_89, %c0_90, %c0_91] : memref<9x2x2xf32, #tpu.memory_space<vmem>>, vector<1x2x2xf32>
    %116 = vector.shape_cast %115 : vector<1x2x2xf32> to vector<2x2xf32>
    %cst_92 = arith.constant dense<0.000000e+00> : vector<2x256xf32>
    %117 = tpu.matmul %116, %114, %cst_92 {dimension_numbers = #tpu.dot_dimension_numbers<[1], [0], [0], [1], [0, 0, 1, 1], [], []>} : vector<2x2xf32>, vector<2x256xf32>, vector<2x256xf32> -> vector<2x256xf32>
    %118 = arith.addf %106, %117 : vector<2x256xf32>
    %c3_93 = arith.constant 3 : index
    %c0_94 = arith.constant 0 : index
    %c0_95 = arith.constant 0 : index
    %119 = vector.load %arg9[%c3_93, %c0_94, %c0_95] : memref<9x2x2xf32, #tpu.memory_space<vmem>>, vector<1x2x2xf32>
    %120 = vector.shape_cast %119 : vector<1x2x2xf32> to vector<2x2xf32>
    %cst_96 = arith.constant dense<0.000000e+00> : vector<2x256xf32>
    %121 = tpu.matmul %120, %114, %cst_96 {dimension_numbers = #tpu.dot_dimension_numbers<[1], [0], [0], [1], [0, 0, 1, 1], [], []>} : vector<2x2xf32>, vector<2x256xf32>, vector<2x256xf32> -> vector<2x256xf32>
    %122 = arith.addf %110, %121 : vector<2x256xf32>
    %c4_97 = arith.constant 4 : index
    %c0_98 = arith.constant 0 : index
    %c0_99 = arith.constant 0 : index
    %123 = vector.load %arg7[%c4_97, %c0_98, %c0_99] : memref<9x2x2xf32, #tpu.memory_space<vmem>>, vector<1x2x2xf32>
    %124 = vector.shape_cast %123 : vector<1x2x2xf32> to vector<2x2xf32>
    %cst_100 = arith.constant dense<0.000000e+00> : vector<2x256xf32>
    %125 = tpu.matmul %124, %76, %cst_100 {dimension_numbers = #tpu.dot_dimension_numbers<[1], [0], [0], [1], [0, 0, 1, 1], [], []>} : vector<2x2xf32>, vector<2x256xf32>, vector<2x256xf32> -> vector<2x256xf32>
    %126 = arith.addf %118, %125 : vector<2x256xf32>
    %c4_101 = arith.constant 4 : index
    %c0_102 = arith.constant 0 : index
    %c0_103 = arith.constant 0 : index
    %127 = vector.load %arg9[%c4_101, %c0_102, %c0_103] : memref<9x2x2xf32, #tpu.memory_space<vmem>>, vector<1x2x2xf32>
    %128 = vector.shape_cast %127 : vector<1x2x2xf32> to vector<2x2xf32>
    %cst_104 = arith.constant dense<0.000000e+00> : vector<2x256xf32>
    %129 = tpu.matmul %128, %76, %cst_104 {dimension_numbers = #tpu.dot_dimension_numbers<[1], [0], [0], [1], [0, 0, 1, 1], [], []>} : vector<2x2xf32>, vector<2x256xf32>, vector<2x256xf32> -> vector<2x256xf32>
    %130 = arith.addf %122, %129 : vector<2x256xf32>
    %c255_i32_105 = arith.constant 255 : i32
    %131 = tpu.dynamic_rotate %76 by %c255_i32_105 dim 1 : vector<2x256xf32>, i32 -> vector<2x256xf32>
    %c5_106 = arith.constant 5 : index
    %c0_107 = arith.constant 0 : index
    %132 = vector.load %arg2[%c5_106, %c0_107] : memref<9x256xf32, #tpu.memory_space<vmem>>, vector<1x256xf32>
    %133 = vector.broadcast %132 : vector<1x256xf32> to vector<2x256xf32>
    %134 = arith.mulf %133, %131 : vector<2x256xf32>
    %c5_108 = arith.constant 5 : index
    %c0_109 = arith.constant 0 : index
    %c0_110 = arith.constant 0 : index
    %135 = vector.load %arg7[%c5_108, %c0_109, %c0_110] : memref<9x2x2xf32, #tpu.memory_space<vmem>>, vector<1x2x2xf32>
    %136 = vector.shape_cast %135 : vector<1x2x2xf32> to vector<2x2xf32>
    %cst_111 = arith.constant dense<0.000000e+00> : vector<2x256xf32>
    %137 = tpu.matmul %136, %134, %cst_111 {dimension_numbers = #tpu.dot_dimension_numbers<[1], [0], [0], [1], [0, 0, 1, 1], [], []>} : vector<2x2xf32>, vector<2x256xf32>, vector<2x256xf32> -> vector<2x256xf32>
    %138 = arith.addf %126, %137 : vector<2x256xf32>
    %c5_112 = arith.constant 5 : index
    %c0_113 = arith.constant 0 : index
    %c0_114 = arith.constant 0 : index
    %139 = vector.load %arg9[%c5_112, %c0_113, %c0_114] : memref<9x2x2xf32, #tpu.memory_space<vmem>>, vector<1x2x2xf32>
    %140 = vector.shape_cast %139 : vector<1x2x2xf32> to vector<2x2xf32>
    %cst_115 = arith.constant dense<0.000000e+00> : vector<2x256xf32>
    %141 = tpu.matmul %140, %134, %cst_115 {dimension_numbers = #tpu.dot_dimension_numbers<[1], [0], [0], [1], [0, 0, 1, 1], [], []>} : vector<2x2xf32>, vector<2x256xf32>, vector<2x256xf32> -> vector<2x256xf32>
    %142 = arith.addf %130, %141 : vector<2x256xf32>
    %c241_i32_116 = arith.constant 241 : i32
    %143 = tpu.dynamic_rotate %76 by %c241_i32_116 dim 1 : vector<2x256xf32>, i32 -> vector<2x256xf32>
    %c6_117 = arith.constant 6 : index
    %c0_118 = arith.constant 0 : index
    %144 = vector.load %arg2[%c6_117, %c0_118] : memref<9x256xf32, #tpu.memory_space<vmem>>, vector<1x256xf32>
    %145 = vector.broadcast %144 : vector<1x256xf32> to vector<2x256xf32>
    %146 = arith.mulf %145, %143 : vector<2x256xf32>
    %c6_119 = arith.constant 6 : index
    %c0_120 = arith.constant 0 : index
    %c0_121 = arith.constant 0 : index
    %147 = vector.load %arg7[%c6_119, %c0_120, %c0_121] : memref<9x2x2xf32, #tpu.memory_space<vmem>>, vector<1x2x2xf32>
    %148 = vector.shape_cast %147 : vector<1x2x2xf32> to vector<2x2xf32>
    %cst_122 = arith.constant dense<0.000000e+00> : vector<2x256xf32>
    %149 = tpu.matmul %148, %146, %cst_122 {dimension_numbers = #tpu.dot_dimension_numbers<[1], [0], [0], [1], [0, 0, 1, 1], [], []>} : vector<2x2xf32>, vector<2x256xf32>, vector<2x256xf32> -> vector<2x256xf32>
    %150 = arith.addf %138, %149 : vector<2x256xf32>
    %c6_123 = arith.constant 6 : index
    %c0_124 = arith.constant 0 : index
    %c0_125 = arith.constant 0 : index
    %151 = vector.load %arg9[%c6_123, %c0_124, %c0_125] : memref<9x2x2xf32, #tpu.memory_space<vmem>>, vector<1x2x2xf32>
    %152 = vector.shape_cast %151 : vector<1x2x2xf32> to vector<2x2xf32>
    %cst_126 = arith.constant dense<0.000000e+00> : vector<2x256xf32>
    %153 = tpu.matmul %152, %146, %cst_126 {dimension_numbers = #tpu.dot_dimension_numbers<[1], [0], [0], [1], [0, 0, 1, 1], [], []>} : vector<2x2xf32>, vector<2x256xf32>, vector<2x256xf32> -> vector<2x256xf32>
    %154 = arith.addf %142, %153 : vector<2x256xf32>
    %c240_i32_127 = arith.constant 240 : i32
    %155 = tpu.dynamic_rotate %76 by %c240_i32_127 dim 1 : vector<2x256xf32>, i32 -> vector<2x256xf32>
    %c7_128 = arith.constant 7 : index
    %c0_129 = arith.constant 0 : index
    %156 = vector.load %arg2[%c7_128, %c0_129] : memref<9x256xf32, #tpu.memory_space<vmem>>, vector<1x256xf32>
    %157 = vector.broadcast %156 : vector<1x256xf32> to vector<2x256xf32>
    %158 = arith.mulf %157, %155 : vector<2x256xf32>
    %c7_130 = arith.constant 7 : index
    %c0_131 = arith.constant 0 : index
    %c0_132 = arith.constant 0 : index
    %159 = vector.load %arg7[%c7_130, %c0_131, %c0_132] : memref<9x2x2xf32, #tpu.memory_space<vmem>>, vector<1x2x2xf32>
    %160 = vector.shape_cast %159 : vector<1x2x2xf32> to vector<2x2xf32>
    %cst_133 = arith.constant dense<0.000000e+00> : vector<2x256xf32>
    %161 = tpu.matmul %160, %158, %cst_133 {dimension_numbers = #tpu.dot_dimension_numbers<[1], [0], [0], [1], [0, 0, 1, 1], [], []>} : vector<2x2xf32>, vector<2x256xf32>, vector<2x256xf32> -> vector<2x256xf32>
    %162 = arith.addf %150, %161 : vector<2x256xf32>
    %c7_134 = arith.constant 7 : index
    %c0_135 = arith.constant 0 : index
    %c0_136 = arith.constant 0 : index
    %163 = vector.load %arg9[%c7_134, %c0_135, %c0_136] : memref<9x2x2xf32, #tpu.memory_space<vmem>>, vector<1x2x2xf32>
    %164 = vector.shape_cast %163 : vector<1x2x2xf32> to vector<2x2xf32>
    %cst_137 = arith.constant dense<0.000000e+00> : vector<2x256xf32>
    %165 = tpu.matmul %164, %158, %cst_137 {dimension_numbers = #tpu.dot_dimension_numbers<[1], [0], [0], [1], [0, 0, 1, 1], [], []>} : vector<2x2xf32>, vector<2x256xf32>, vector<2x256xf32> -> vector<2x256xf32>
    %166 = arith.addf %154, %165 : vector<2x256xf32>
    %c239_i32_138 = arith.constant 239 : i32
    %167 = tpu.dynamic_rotate %76 by %c239_i32_138 dim 1 : vector<2x256xf32>, i32 -> vector<2x256xf32>
    %c8_139 = arith.constant 8 : index
    %c0_140 = arith.constant 0 : index
    %168 = vector.load %arg2[%c8_139, %c0_140] : memref<9x256xf32, #tpu.memory_space<vmem>>, vector<1x256xf32>
    %169 = vector.broadcast %168 : vector<1x256xf32> to vector<2x256xf32>
    %170 = arith.mulf %169, %167 : vector<2x256xf32>
    %c8_141 = arith.constant 8 : index
    %c0_142 = arith.constant 0 : index
    %c0_143 = arith.constant 0 : index
    %171 = vector.load %arg7[%c8_141, %c0_142, %c0_143] : memref<9x2x2xf32, #tpu.memory_space<vmem>>, vector<1x2x2xf32>
    %172 = vector.shape_cast %171 : vector<1x2x2xf32> to vector<2x2xf32>
    %cst_144 = arith.constant dense<0.000000e+00> : vector<2x256xf32>
    %173 = tpu.matmul %172, %170, %cst_144 {dimension_numbers = #tpu.dot_dimension_numbers<[1], [0], [0], [1], [0, 0, 1, 1], [], []>} : vector<2x2xf32>, vector<2x256xf32>, vector<2x256xf32> -> vector<2x256xf32>
    %174 = arith.addf %162, %173 : vector<2x256xf32>
    %c8_145 = arith.constant 8 : index
    %c0_146 = arith.constant 0 : index
    %c0_147 = arith.constant 0 : index
    %175 = vector.load %arg9[%c8_145, %c0_146, %c0_147] : memref<9x2x2xf32, #tpu.memory_space<vmem>>, vector<1x2x2xf32>
    %176 = vector.shape_cast %175 : vector<1x2x2xf32> to vector<2x2xf32>
    %cst_148 = arith.constant dense<0.000000e+00> : vector<2x256xf32>
    %177 = tpu.matmul %176, %170, %cst_148 {dimension_numbers = #tpu.dot_dimension_numbers<[1], [0], [0], [1], [0, 0, 1, 1], [], []>} : vector<2x2xf32>, vector<2x256xf32>, vector<2x256xf32> -> vector<2x256xf32>
    %178 = arith.addf %166, %177 : vector<2x256xf32>
    %c0_149 = arith.constant 0 : index
    %c0_150 = arith.constant 0 : index
    %179 = vector.load %arg8[%c0_149, %c0_150] : memref<2x1xf32, #tpu.memory_space<vmem>>, vector<2x1xf32>
    %180 = vector.broadcast %179 : vector<2x1xf32> to vector<2x256xf32>
    %181 = arith.addf %174, %180 : vector<2x256xf32>
    %182 = arith.negf %181 : vector<2x256xf32>
    %183 = math.exp %182 : vector<2x256xf32>
    %cst_151 = arith.constant 1.000000e+00 : f32
    %184 = vector.broadcast %cst_151 : f32 to vector<2x256xf32>
    %185 = arith.addf %184, %183 : vector<2x256xf32>
    %186 = arith.divf %184, %185 : vector<2x256xf32>
    %cst_152 = arith.constant 2.000000e+00 : f32
    %187 = vector.broadcast %cst_152 : f32 to vector<2x256xf32>
    %188 = arith.mulf %186, %187 : vector<2x256xf32>
    %cst_153 = arith.constant 1.000000e+00 : f32
    %189 = vector.broadcast %cst_153 : f32 to vector<2x256xf32>
    %190 = arith.subf %188, %189 : vector<2x256xf32>
    %cst_154 = arith.constant 8.000000e-01 : f32
    %191 = vector.broadcast %cst_154 : f32 to vector<2x256xf32>
    %192 = arith.mulf %191, %190 : vector<2x256xf32>
    %193 = math.exp %192 : vector<2x256xf32>
    %194 = arith.mulf %5, %193 : vector<2x256xf32>
    %195 = arith.addf %194, %178 : vector<2x256xf32>
    %c0_155 = arith.constant 0 : index
    %c0_156 = arith.constant 0 : index
    %196 = vector.load %arg10[%c0_155, %c0_156] : memref<2x1xf32, #tpu.memory_space<vmem>>, vector<2x1xf32>
    %197 = vector.broadcast %196 : vector<2x1xf32> to vector<2x256xf32>
    %198 = arith.addf %195, %197 : vector<2x256xf32>
    %c0_157 = arith.constant 0 : index
    %c0_158 = arith.constant 0 : index
    %c0_159 = arith.constant 0 : index
    %199 = vector.load %arg11[%c0_157, %c0_158, %c0_159] : memref<1x4x256xf32, #tpu.memory_space<vmem>>, vector<1x2x256xf32>
    %200 = vector.shape_cast %199 : vector<1x2x256xf32> to vector<2x256xf32>
    %201 = vector.shape_cast %76 : vector<2x256xf32> to vector<1x2x256xf32>
    tpu.vector_store %arg11[%c0_157, %c0_158, %c0_159], %201 {strides = array<i32>} : memref<1x4x256xf32, #tpu.memory_space<vmem>>, vector<1x2x256xf32>,
    %c0_160 = arith.constant 0 : index
    %c2_161 = arith.constant 2 : index
    %c0_162 = arith.constant 0 : index
    %202 = vector.load %arg11[%c0_160, %c2_161, %c0_162] : memref<1x4x256xf32, #tpu.memory_space<vmem>>, vector<1x2x256xf32>
    %203 = vector.shape_cast %202 : vector<1x2x256xf32> to vector<2x256xf32>
    %204 = vector.shape_cast %198 : vector<2x256xf32> to vector<1x2x256xf32>
    tpu.vector_store %arg11[%c0_160, %c2_161, %c0_162], %204 {strides = array<i32>} : memref<1x4x256xf32, #tpu.memory_space<vmem>>, vector<1x2x256xf32>,
    return
  }
  func.func @transform_0(%arg0: i32) -> (i32, i32, i32) {
    %c0_i32 = arith.constant 0 : i32
    %c0_i32_0 = arith.constant 0 : i32
    %c0_i32_1 = arith.constant 0 : i32
    return %arg0, %c0_i32, %c0_i32_0 : i32, i32, i32
  }
  func.func @transform_1(%arg0: i32) -> (i32, i32) {
    %c0_i32 = arith.constant 0 : i32
    %c0_i32_0 = arith.constant 0 : i32
    %c0_i32_1 = arith.constant 0 : i32
    return %c0_i32, %c0_i32_0 : i32, i32
  }
  func.func @transform_2(%arg0: i32) -> (i32, i32) {
    %c0_i32 = arith.constant 0 : i32
    %c0_i32_0 = arith.constant 0 : i32
    %c0_i32_1 = arith.constant 0 : i32
    return %c0_i32, %c0_i32_0 : i32, i32
  }
  func.func @transform_3(%arg0: i32) -> (i32, i32) {
    %c0_i32 = arith.constant 0 : i32
    %c0_i32_0 = arith.constant 0 : i32
    %c0_i32_1 = arith.constant 0 : i32
    return %c0_i32, %c0_i32_0 : i32, i32
  }
  func.func @transform_4(%arg0: i32) -> (i32, i32, i32) {
    %c0_i32 = arith.constant 0 : i32
    %c0_i32_0 = arith.constant 0 : i32
    %c0_i32_1 = arith.constant 0 : i32
    %c0_i32_2 = arith.constant 0 : i32
    return %c0_i32, %c0_i32_0, %c0_i32_1 : i32, i32, i32
  }
  func.func @transform_5(%arg0: i32) -> (i32, i32) {
    %c0_i32 = arith.constant 0 : i32
    %c0_i32_0 = arith.constant 0 : i32
    %c0_i32_1 = arith.constant 0 : i32
    return %c0_i32, %c0_i32_0 : i32, i32
  }
  func.func @transform_6(%arg0: i32) -> (i32, i32, i32) {
    %c0_i32 = arith.constant 0 : i32
    %c0_i32_0 = arith.constant 0 : i32
    %c0_i32_1 = arith.constant 0 : i32
    %c0_i32_2 = arith.constant 0 : i32
    return %c0_i32, %c0_i32_0, %c0_i32_1 : i32, i32, i32
  }
  func.func @transform_7(%arg0: i32) -> (i32, i32) {
    %c0_i32 = arith.constant 0 : i32
    %c0_i32_0 = arith.constant 0 : i32
    %c0_i32_1 = arith.constant 0 : i32
    return %c0_i32, %c0_i32_0 : i32, i32
  }
  func.func @transform_8(%arg0: i32) -> (i32, i32, i32) {
    %c0_i32 = arith.constant 0 : i32
    %c0_i32_0 = arith.constant 0 : i32
    %c0_i32_1 = arith.constant 0 : i32
    %c0_i32_2 = arith.constant 0 : i32
    return %c0_i32, %c0_i32_0, %c0_i32_1 : i32, i32, i32
  }
  func.func @transform_9(%arg0: i32) -> (i32, i32) {
    %c0_i32 = arith.constant 0 : i32
    %c0_i32_0 = arith.constant 0 : i32
    %c0_i32_1 = arith.constant 0 : i32
    return %c0_i32, %c0_i32_0 : i32, i32
  }
  func.func @transform_10(%arg0: i32) -> (i32, i32, i32) {
    %c0_i32 = arith.constant 0 : i32
    %c0_i32_0 = arith.constant 0 : i32
    %c0_i32_1 = arith.constant 0 : i32
    return %arg0, %c0_i32, %c0_i32_0 : i32, i32, i32
  }
}

</mosaic_0001>

<llo_original>
// kernel: tpu_custom_call.1
$region0: #{tpu_custom_call.1}
  #allocation0 [shape = 'u32[]', space=smem, size = 0x4, offset = 0x4, fixed_abs, tag = 'smem constant byte address 0x4 - core index']
  #allocation1 [shape = 'u32[144,128]{1,0:T(1,128)}', space=vmem, size = 0x12000, scoped, tag = 'internal scratch']
  %s0 = inlined_call_operand.vmem [shape: f32[2,4,256], index: 0, kind: input, shape index: {}]
  %s1 = inlined_call_operand.vmem [shape: f32[9,256], index: 1, kind: input, shape index: {}]
  %s2 = inlined_call_operand.vmem [shape: f32[2,4], index: 2, kind: input, shape index: {}]
  %s3 = inlined_call_operand.vmem [shape: f32[2,4], index: 3, kind: input, shape index: {}]
  %s4 = inlined_call_operand.vmem [shape: f32[9,2,2], index: 4, kind: input, shape index: {}]
  %s5 = inlined_call_operand.vmem [shape: f32[2,1], index: 5, kind: input, shape index: {}]
  %s6 = inlined_call_operand.vmem [shape: f32[9,2,2], index: 6, kind: input, shape index: {}]
  %s7 = inlined_call_operand.vmem [shape: f32[2,1], index: 7, kind: input, shape index: {}]
  %s8 = inlined_call_operand.vmem [shape: f32[9,2,2], index: 8, kind: input, shape index: {}]
  %s9 = inlined_call_operand.vmem [shape: f32[2,1], index: 9, kind: input, shape index: {}]
  %s10 = inlined_call_operand.hbm [shape: f32[2,4,256], index: 10, kind: output, shape index: {}]
  %s11 = sld [smem:[#allocation0]]
  $region73: #{tpu_custom_call.1} parent=0
    _
  %s13 = ssub.s32 1, %s11
  %s14 = scalar_select 0, %s13, %s11
  $region1: #{tpu_custom_call.1} parent=0
    #allocation2 [shape = 'u8[8192]{0}', space=vmem, size = 0x2000, scoped, tag = 'output window, operand 0']
    #allocation3 [shape = 's32[2]{0}', space=sflag, size = 0x8, scoped, tag = 'scoped memory for tpu_custom_call.1']
    %15 = vsyncpa [#allocation3], 0
    %s16 = scalar_lea.sflag [#allocation3], 1
    %17 = vsyncpa %s16, 0
    loop: start=0, step=1, limit=4
    $region2: #{tpu_custom_call.1} parent=1 // loop_pre_header
      _
    $region3: #{tpu_custom_call.1} parent=1 // loop_header
      %s19 = sphi 0, %s23
      %p20 = scmp.ge.s32.totalorder %s19, 4
      %s29 = sphi 0, %s31
      %s32 = sphi 0, %s29
      %s33 = sphi 0, %s32
      %s49 = sphi 0, %s33
      %s53 = sphi 0, %s53
      %s55 = sphi 0, %s53
      %s56 = sphi 0, %s55
      %s70 = sphi 0, %s56
      %s74 = sphi 0, %s74
      %s76 = sphi 0, %s74
      %s77 = sphi 0, %s76
      %s91 = sphi 0, %s77
      %s95 = sphi 0, %s95
      %s97 = sphi 0, %s95
      %s98 = sphi 0, %s97
      %s112 = sphi 0, %s98
      %s116 = sphi 0, %s116
      %s118 = sphi 0, %s116
      %s119 = sphi 0, %s118
      %s133 = sphi 0, %s119
      %s137 = sphi 0, %s137
      %s139 = sphi 0, %s137
      %s140 = sphi 0, %s139
      %s154 = sphi 0, %s140
      %s158 = sphi 0, %s158
      %s160 = sphi 0, %s158
      %s161 = sphi 0, %s160
      %s175 = sphi 0, %s161
      %s179 = sphi 0, %s179
      %s181 = sphi 0, %s179
      %s182 = sphi 0, %s181
      %s196 = sphi 0, %s182
      %s200 = sphi 0, %s200
      %s202 = sphi 0, %s200
      %s203 = sphi 0, %s202
      %s217 = sphi 0, %s203
      %s221 = sphi 0, %s221
      %s223 = sphi 0, %s221
      %s224 = sphi 0, %s223
      %s238 = sphi 0, %s224
      %s244 = sphi 0, %s246
      %s247 = sphi 0, %s244
      %s248 = sphi 0, %s247
      %s264 = sphi 0, %s248
    $region4: #{tpu_custom_call.1} parent=1 // loop_header_branch
      %22 = sbr.rel (%p20) target = $region8
    $region5: #{tpu_custom_call.1} parent=1 // loop_body
      %s24 = ssub.s32 %s19, 1
      %s25 = ssub.s32 %s19, 2
      %s26 = sadd.s32 %s19, 1
      %s27 = ssub.s32 %s19, %s26
      %p28 = scmp.eq.s32.totalorder %s27, 0
      %s30 = sadd.s32 %s29, 1
      %s31 = scalar_select %p28, %s29, %s30
      %p34 = pneg %p28
      %p35 = scmp.eq.s32.totalorder %s19, 1
      %p36 = por %p34, %p35
      %p37 = scmp.ne.s32.totalorder %s29, %s32
      %p38 = scmp.eq.s32.totalorder %s19, 0
      %p39 = por %p37, %p38
      %p40 = scmp.ne.s32.totalorder %s29, %s32
      %p41 = scmp.eq.s32.totalorder %s24, 1
      %p42 = por %p40, %p41
      %p43 = scmp.ne.s32.totalorder %s32, %s33
      %p44 = scmp.eq.s32.totalorder %s24, 0
      %p45 = por %p43, %p44
      %p46 = scmp.ne.s32.totalorder %s32, %s33
      %p47 = scmp.eq.s32.totalorder %s25, 1
      %p48 = por %p46, %p47
      %p50 = scmp.ne.s32.totalorder %s33, %s49
      %p51 = scmp.eq.s32.totalorder %s25, 0
      %p52 = por %p50, %p51
      %s54 = sadd.s32 %s53, 1
      %p57 = scmp.eq.s32.totalorder %s19, 1
      %p58 = scmp.ne.s32.totalorder %s53, %s55
      %p59 = scmp.eq.s32.totalorder %s19, 0
      %p60 = por %p58, %p59
      %p61 = scmp.ne.s32.totalorder %s53, %s55
      %p62 = scmp.eq.s32.totalorder %s24, 1
      %p63 = por %p61, %p62
      %p64 = scmp.ne.s32.totalorder %s55, %s56
      %p65 = scmp.eq.s32.totalorder %s24, 0
      %p66 = por %p64, %p65
      %p67 = scmp.ne.s32.totalorder %s55, %s56
      %p68 = scmp.eq.s32.totalorder %s25, 1
      %p69 = por %p67, %p68
      %p71 = scmp.ne.s32.totalorder %s56, %s70
      %p72 = scmp.eq.s32.totalorder %s25, 0
      %p73 = por %p71, %p72
      %s75 = sadd.s32 %s74, 1
      %p78 = scmp.eq.s32.totalorder %s19, 1
      %p79 = scmp.ne.s32.totalorder %s74, %s76
      %p80 = scmp.eq.s32.totalorder %s19, 0
      %p81 = por %p79, %p80
      %p82 = scmp.ne.s32.totalorder %s74, %s76
      %p83 = scmp.eq.s32.totalorder %s24, 1
      %p84 = por %p82, %p83
      %p85 = scmp.ne.s32.totalorder %s76, %s77
      %p86 = scmp.eq.s32.totalorder %s24, 0
      %p87 = por %p85, %p86
      %p88 = scmp.ne.s32.totalorder %s76, %s77
      %p89 = scmp.eq.s32.totalorder %s25, 1
      %p90 = por %p88, %p89
      %p92 = scmp.ne.s32.totalorder %s77, %s91
      %p93 = scmp.eq.s32.totalorder %s25, 0
      %p94 = por %p92, %p93
      %s96 = sadd.s32 %s95, 1
      %p99 = scmp.eq.s32.totalorder %s19, 1
      %p100 = scmp.ne.s32.totalorder %s95, %s97
      %p101 = scmp.eq.s32.totalorder %s19, 0
      %p102 = por %p100, %p101
      %p103 = scmp.ne.s32.totalorder %s95, %s97
      %p104 = scmp.eq.s32.totalorder %s24, 1
      %p105 = por %p103, %p104
      %p106 = scmp.ne.s32.totalorder %s97, %s98
      %p107 = scmp.eq.s32.totalorder %s24, 0
      %p108 = por %p106, %p107
      %p109 = scmp.ne.s32.totalorder %s97, %s98
      %p110 = scmp.eq.s32.totalorder %s25, 1
      %p111 = por %p109, %p110
      %p113 = scmp.ne.s32.totalorder %s98, %s112
      %p114 = scmp.eq.s32.totalorder %s25, 0
      %p115 = por %p113, %p114
      %s117 = sadd.s32 %s116, 1
      %p120 = scmp.eq.s32.totalorder %s19, 1
      %p121 = scmp.ne.s32.totalorder %s116, %s118
      %p122 = scmp.eq.s32.totalorder %s19, 0
      %p123 = por %p121, %p122
      %p124 = scmp.ne.s32.totalorder %s116, %s118
      %p125 = scmp.eq.s32.totalorder %s24, 1
      %p126 = por %p124, %p125
      %p127 = scmp.ne.s32.totalorder %s118, %s119
      %p128 = scmp.eq.s32.totalorder %s24, 0
      %p129 = por %p127, %p128
      %p130 = scmp.ne.s32.totalorder %s118, %s119
      %p131 = scmp.eq.s32.totalorder %s25, 1
      %p132 = por %p130, %p131
      %p134 = scmp.ne.s32.totalorder %s119, %s133
      %p135 = scmp.eq.s32.totalorder %s25, 0
      %p136 = por %p134, %p135
      %s138 = sadd.s32 %s137, 1
      %p141 = scmp.eq.s32.totalorder %s19, 1
      %p142 = scmp.ne.s32.totalorder %s137, %s139
      %p143 = scmp.eq.s32.totalorder %s19, 0
      %p144 = por %p142, %p143
      %p145 = scmp.ne.s32.totalorder %s137, %s139
      %p146 = scmp.eq.s32.totalorder %s24, 1
      %p147 = por %p145, %p146
      %p148 = scmp.ne.s32.totalorder %s139, %s140
      %p149 = scmp.eq.s32.totalorder %s24, 0
      %p150 = por %p148, %p149
      %p151 = scmp.ne.s32.totalorder %s139, %s140
      %p152 = scmp.eq.s32.totalorder %s25, 1
      %p153 = por %p151, %p152
      %p155 = scmp.ne.s32.totalorder %s140, %s154
      %p156 = scmp.eq.s32.totalorder %s25, 0
      %p157 = por %p155, %p156
      %s159 = sadd.s32 %s158, 1
      %p162 = scmp.eq.s32.totalorder %s19, 1
      %p163 = scmp.ne.s32.totalorder %s158, %s160
      %p164 = scmp.eq.s32.totalorder %s19, 0
      %p165 = por %p163, %p164
      %p166 = scmp.ne.s32.totalorder %s158, %s160
      %p167 = scmp.eq.s32.totalorder %s24, 1
      %p168 = por %p166, %p167
      %p169 = scmp.ne.s32.totalorder %s160, %s161
      %p170 = scmp.eq.s32.totalorder %s24, 0
      %p171 = por %p169, %p170
      %p172 = scmp.ne.s32.totalorder %s160, %s161
      %p173 = scmp.eq.s32.totalorder %s25, 1
      %p174 = por %p172, %p173
      %p176 = scmp.ne.s32.totalorder %s161, %s175
      %p177 = scmp.eq.s32.totalorder %s25, 0
      %p178 = por %p176, %p177
      %s180 = sadd.s32 %s179, 1
      %p183 = scmp.eq.s32.totalorder %s19, 1
      %p184 = scmp.ne.s32.totalorder %s179, %s181
      %p185 = scmp.eq.s32.totalorder %s19, 0
      %p186 = por %p184, %p185
      %p187 = scmp.ne.s32.totalorder %s179, %s181
      %p188 = scmp.eq.s32.totalorder %s24, 1
      %p189 = por %p187, %p188
      %p190 = scmp.ne.s32.totalorder %s181, %s182
      %p191 = scmp.eq.s32.totalorder %s24, 0
      %p192 = por %p190, %p191
      %p193 = scmp.ne.s32.totalorder %s181, %s182
      %p194 = scmp.eq.s32.totalorder %s25, 1
      %p195 = por %p193, %p194
      %p197 = scmp.ne.s32.totalorder %s182, %s196
      %p198 = scmp.eq.s32.totalorder %s25, 0
      %p199 = por %p197, %p198
      %s201 = sadd.s32 %s200, 1
      %p204 = scmp.eq.s32.totalorder %s19, 1
      %p205 = scmp.ne.s32.totalorder %s200, %s202
      %p206 = scmp.eq.s32.totalorder %s19, 0
      %p207 = por %p205, %p206
      %p208 = scmp.ne.s32.totalorder %s200, %s202
      %p209 = scmp.eq.s32.totalorder %s24, 1
      %p210 = por %p208, %p209
      %p211 = scmp.ne.s32.totalorder %s202, %s203
      %p212 = scmp.eq.s32.totalorder %s24, 0
      %p213 = por %p211, %p212
      %p214 = scmp.ne.s32.totalorder %s202, %s203
      %p215 = scmp.eq.s32.totalorder %s25, 1
      %p216 = por %p214, %p215
      %p218 = scmp.ne.s32.totalorder %s203, %s217
      %p219 = scmp.eq.s32.totalorder %s25, 0
      %p220 = por %p218, %p219
      %s222 = sadd.s32 %s221, 1
      %p225 = scmp.eq.s32.totalorder %s19, 1
      %p226 = scmp.ne.s32.totalorder %s221, %s223
      %p227 = scmp.eq.s32.totalorder %s19, 0
      %p228 = por %p226, %p227
      %p229 = scmp.ne.s32.totalorder %s221, %s223
      %p230 = scmp.eq.s32.totalorder %s24, 1
      %p231 = por %p229, %p230
      %p232 = scmp.ne.s32.totalorder %s223, %s224
      %p233 = scmp.eq.s32.totalorder %s24, 0
      %p234 = por %p232, %p233
      %p235 = scmp.ne.s32.totalorder %s223, %s224
      %p236 = scmp.eq.s32.totalorder %s25, 1
      %p237 = por %p235, %p236
      %p239 = scmp.ne.s32.totalorder %s224, %s238
      %p240 = scmp.eq.s32.totalorder %s25, 0
      %p241 = por %p239, %p240
      %s242 = ssub.s32 %s19, %s26
      %p243 = scmp.eq.s32.totalorder %s242, 0
      %s245 = sadd.s32 %s244, 1
      %s246 = scalar_select %p243, %s244, %s245
      %p249 = pneg %p243
      %p250 = scmp.eq.s32.totalorder %s19, 1
      %p251 = por %p249, %p250
      %p252 = scmp.ne.s32.totalorder %s244, %s247
      %p253 = scmp.eq.s32.totalorder %s19, 0
      %p254 = por %p252, %p253
      %p255 = scmp.ne.s32.totalorder %s244, %s247
      %p256 = scmp.eq.s32.totalorder %s24, 1
      %p257 = por %p255, %p256
      %p258 = scmp.ne.s32.totalorder %s247, %s248
      %p259 = scmp.eq.s32.totalorder %s24, 0
      %p260 = por %p258, %p259
      %p261 = scmp.ne.s32.totalorder %s247, %s248
      %p262 = scmp.eq.s32.totalorder %s25, 1
      %p263 = por %p261, %p262
      %p265 = scmp.ne.s32.totalorder %s248, %s264
      %p266 = scmp.eq.s32.totalorder %s25, 0
      %p267 = por %p265, %p266
      %p268 = scmp.le.s32.totalorder 1, %s19
      %p269 = scmp.lt.s32.totalorder %s19, 3
      %p270 = pnand %p268, %p269
      %p271 = pneg %p270
      // Predicated region
      $region9: #{tpu_custom_call.1} parent=5 // pred_check
        _
      $region10: #{tpu_custom_call.1} parent=5 // pred_check_branch
        %273 = sbr.rel (%p270) target = $region12
      $region11: #{tpu_custom_call.1} parent=5 // pred_region
        %s274 = ssub.s32 %s19, 1
        // Predicated region
        $region13: #{tpu_custom_call.1} parent=11 // pred_check
          %p275 = pneg %p66
        $region14: #{tpu_custom_call.1} parent=11 // pred_check_branch
          %277 = sbr.rel (%p275) target = $region16
        $region15: #{tpu_custom_call.1} parent=11 // pred_region
          _
        $region16: #{tpu_custom_call.1} parent=11 // pred_fallthru
          _
        // Predicated region
        $region17: #{tpu_custom_call.1} parent=11 // pred_check
          %p278 = pneg %p87
        $region18: #{tpu_custom_call.1} parent=11 // pred_check_branch
          %280 = sbr.rel (%p278) target = $region20
        $region19: #{tpu_custom_call.1} parent=11 // pred_region
          _
        $region20: #{tpu_custom_call.1} parent=11 // pred_fallthru
          _
        // Predicated region
        $region21: #{tpu_custom_call.1} parent=11 // pred_check
          %p281 = pneg %p108
        $region22: #{tpu_custom_call.1} parent=11 // pred_check_branch
          %283 = sbr.rel (%p281) target = $region24
        $region23: #{tpu_custom_call.1} parent=11 // pred_region
          _
        $region24: #{tpu_custom_call.1} parent=11 // pred_fallthru
          _
        // Predicated region
        $region25: #{tpu_custom_call.1} parent=11 // pred_check
          %p284 = pneg %p129
        $region26: #{tpu_custom_call.1} parent=11 // pred_check_branch
          %286 = sbr.rel (%p284) target = $region28
        $region27: #{tpu_custom_call.1} parent=11 // pred_region
          _
        $region28: #{tpu_custom_call.1} parent=11 // pred_fallthru
          _
        // Predicated region
        $region29: #{tpu_custom_call.1} parent=11 // pred_check
          %p287 = pneg %p150
        $region30: #{tpu_custom_call.1} parent=11 // pred_check_branch
          %289 = sbr.rel (%p287) target = $region32
        $region31: #{tpu_custom_call.1} parent=11 // pred_region
          _
        $region32: #{tpu_custom_call.1} parent=11 // pred_fallthru
          _
        // Predicated region
        $region33: #{tpu_custom_call.1} parent=11 // pred_check
          %p290 = pneg %p171
        $region34: #{tpu_custom_call.1} parent=11 // pred_check_branch
          %292 = sbr.rel (%p290) target = $region36
        $region35: #{tpu_custom_call.1} parent=11 // pred_region
          _
        $region36: #{tpu_custom_call.1} parent=11 // pred_fallthru
          _
        // Predicated region
        $region37: #{tpu_custom_call.1} parent=11 // pred_check
          %p293 = pneg %p192
        $region38: #{tpu_custom_call.1} parent=11 // pred_check_branch
          %295 = sbr.rel (%p293) target = $region40
        $region39: #{tpu_custom_call.1} parent=11 // pred_region
          _
        $region40: #{tpu_custom_call.1} parent=11 // pred_fallthru
          _
        // Predicated region
        $region41: #{tpu_custom_call.1} parent=11 // pred_check
          %p296 = pneg %p213
        $region42: #{tpu_custom_call.1} parent=11 // pred_check_branch
          %298 = sbr.rel (%p296) target = $region44
        $region43: #{tpu_custom_call.1} parent=11 // pred_region
          _
        $region44: #{tpu_custom_call.1} parent=11 // pred_fallthru
          _
        // Predicated region
        $region45: #{tpu_custom_call.1} parent=11 // pred_check
          %p299 = pneg %p234
        $region46: #{tpu_custom_call.1} parent=11 // pred_check_branch
          %301 = sbr.rel (%p299) target = $region48
        $region47: #{tpu_custom_call.1} parent=11 // pred_region
          _
        $region48: #{tpu_custom_call.1} parent=11 // pred_fallthru
          _
      $region12: #{tpu_custom_call.1} parent=5 // pred_fallthru
        _
      %p302 = scmp.lt.s32.totalorder %s19, 2
      // Predicated region
      $region49: #{tpu_custom_call.1} parent=5 // pred_check
        %p303 = pneg %p302
      $region50: #{tpu_custom_call.1} parent=5 // pred_check_branch
        %305 = sbr.rel (%p303) target = $region52
      $region51: #{tpu_custom_call.1} parent=5 // pred_region
        // Predicated region
        $region53: #{tpu_custom_call.1} parent=51 // pred_check
          %p306 = pneg %p39
        $region54: #{tpu_custom_call.1} parent=51 // pred_check_branch
          %308 = sbr.rel (%p306) target = $region56
        $region55: #{tpu_custom_call.1} parent=51 // pred_region
          %p309 = scmp.lt.s32.totalorder %s19, 1
          %s310 = scalar_select %p309, %s19, 1
          %s311 = smul.addr %s310, 2
          %s312 = smul.addr %s311, 4
          %s313 = scalar_lea.vmem %s0, %s312
        $region56: #{tpu_custom_call.1} parent=51 // pred_fallthru
          _
      $region52: #{tpu_custom_call.1} parent=5 // pred_fallthru
        _
      %p314 = scmp.le.s32.totalorder 1, %s19
      %p315 = scmp.lt.s32.totalorder %s19, 3
      %p316 = pnand %p314, %p315
      %p317 = pneg %p316
      // Predicated region
      $region57: #{tpu_custom_call.1} parent=5 // pred_check
        _
      $region58: #{tpu_custom_call.1} parent=5 // pred_check_branch
        %319 = sbr.rel (%p316) target = $region60
      $region59: #{tpu_custom_call.1} parent=5 // pred_region
        %s320 = ssub.s32 %s19, 1
        %p321 = scmp.lt.s32.totalorder %s24, 1
        %s322 = scalar_select %p321, %s24, 1
        %s323 = smul.addr %s322, 2
        %s324 = smul.addr %s323, 4
        %s325 = scalar_lea.vmem %s0, %s324
        %p326 = pneg %p45
        %p327 = pneg %p42
        %p328 = pneg %p66
        %p329 = pneg %p63
        %p330 = pneg %p87
        %p331 = pneg %p84
        %p332 = pneg %p108
        %p333 = pneg %p105
        %p334 = pneg %p129
        %p335 = pneg %p126
        %p336 = pneg %p150
        %p337 = pneg %p147
        %p338 = pneg %p171
        %p339 = pneg %p168
        %p340 = pneg %p192
        %p341 = pneg %p189
        %p342 = pneg %p213
        %p343 = pneg %p210
        %p344 = pneg %p234
        %p345 = pneg %p231
        %p346 = pneg %p260
        %p347 = pneg %p257
        %s348 = sand.u32 %s247, 1
        %s349 = scalar_lea.sflag [#allocation3], %s348
        %s350 = sand.u32 %s247, 1
        %s351 = smul.addr %s350, 8
        %s352 = scalar_lea.vmem [#allocation2], %s351
        %p353 = scmp.lt.s32.totalorder %s24, 1
        %s354 = scalar_select %p353, %s24, 1
        %s355 = smul.addr %s354, 2
        %s356 = smul.addr %s355, 4
        %s357 = scalar_lea.vmem %s0, %s356
        %v358 = vld [vmem:[%s357] sm:$0xff]
        %v359 = vld [vmem:[%s2] sm:$0x3]
        %v360 = vld [vmem:[%s3] sm:$0x3]
        %v362 = vcombine.high %v358, %v358
        %vm363 = vcmask 31744
        %v365 = vsel %vm363, %v360, 0
        %vm367 = vcmask 1043456
        %v368 = vsel %vm367, %v358, 0
        %v370 = vsel %vm367, %v362, 0
        %372 = vmatprep.subr.mxu0 %v370
        %373 = vmatpush1.msra.mxu0 %v368
        %374 = vmatprep.subr.mxu0 0.0
        %375 = vmatpush1.msra.mxu0 0.0
        %376 = vmatprep.subr.mxu0 0.0
        %377 = vmatpush1.msra.mxu0 0.0
        %378 = vmatprep.subr.mxu0 0.0
        %379 = vmatpush1.msra.mxu0 0.0
        %380 = vmatprep.subr.mxu0 0.0
        %381 = vmatpush1.msra.mxu0 0.0
        %382 = vmatprep.subr.mxu0 0.0
        %383 = vmatpush1.msra.mxu0 0.0
        %384 = vmatprep.subr.mxu0 0.0
        %385 = vmatpush1.msra.mxu0 0.0
        %386 = vmatprep.subr.mxu0 0.0
        %387 = vmatpush1.msra.mxu0 0.0
        %388 = vmatprep.subr.mxu0 0.0
        %389 = vmatpush1.msra.mxu0 0.0
        %390 = vmatprep.subr.mxu0 0.0
        %391 = vmatpush1.msra.mxu0 0.0
        %392 = vmatprep.subr.mxu0 0.0
        %393 = vmatpush1.msra.mxu0 0.0
        %394 = vmatprep.subr.mxu0 0.0
        %395 = vmatpush1.msra.mxu0 0.0
        %396 = vmatprep.subr.mxu0 0.0
        %397 = vmatpush1.msra.mxu0 0.0
        %398 = vmatprep.subr.mxu0 0.0
        %399 = vmatpush1.msra.mxu0 0.0
        %400 = vmatprep.subr.mxu0 0.0
        %401 = vmatpush1.msra.mxu0 0.0
        %402 = vmatprep.subr.mxu0 0.0
        %403 = vmatpush1.msra.mxu0 0.0
        %404 = vmatprep.subr.mxu0 0.0
        %405 = vmatpush1.msra.mxu0 0.0
        %406 = vmatprep.subr.mxu0 0.0
        %407 = vmatpush1.msra.mxu0 0.0
        %408 = vmatprep.subr.mxu0 0.0
        %409 = vmatpush1.msra.mxu0 0.0
        %410 = vmatprep.subr.mxu0 0.0
        %411 = vmatpush1.msra.mxu0 0.0
        %412 = vmatprep.subr.mxu0 0.0
        %413 = vmatpush1.msra.mxu0 0.0
        %414 = vmatprep.subr.mxu0 0.0
        %415 = vmatpush1.msra.mxu0 0.0
        %416 = vmatprep.subr.mxu0 0.0
        %417 = vmatpush1.msra.mxu0 0.0
        %418 = vmatprep.subr.mxu0 0.0
        %419 = vmatpush1.msra.mxu0 0.0
        %420 = vmatprep.subr.mxu0 0.0
        %421 = vmatpush1.msra.mxu0 0.0
        %422 = vmatprep.subr.mxu0 0.0
        %423 = vmatpush1.msra.mxu0 0.0
        %424 = vmatprep.subr.mxu0 0.0
        %425 = vmatpush1.msra.mxu0 0.0
        %426 = vmatprep.subr.mxu0 0.0
        %427 = vmatpush1.msra.mxu0 0.0
        %428 = vmatprep.subr.mxu0 0.0
        %429 = vmatpush1.msra.mxu0 0.0
        %430 = vmatprep.subr.mxu0 0.0
        %431 = vmatpush1.msra.mxu0 0.0
        %432 = vmatprep.subr.mxu0 0.0
        %433 = vmatpush1.msra.mxu0 0.0
        %434 = vmatprep.subr.mxu0 0.0
        %435 = vmatpush1.msra.mxu0 0.0
        %436 = vmatprep.mubr.f32.mxu0 0.0
        %437 = vmatmul.mubr.f32.gmra.mrb[0].mxu0 %v365
        %v438 = vpop.f32.mrb[0].mxu0
        %v439 = vadd.f32 0.0, %v438
        %v440 = vpop.f32.mrb[0].mxu0
        %v441 = vadd.f32 0.0, %v440
        %442 = vdwg.mxu0
        %443 = vrot.lane.b32.xlu0 %v439, 17
        %v444 = vpop.permute.xlu0 %443
        %445 = vrot.lane.b32.xlu0 %v441, 17
        %v446 = vpop.permute.xlu0 %445
        %v447 = vlaneseq
        %v448 = vand.u32 %v447, 127
        %vm449 = vcmp.lt.s32.totalorder %v448, 17
        %v450 = vsel %vm449, %v444, %v446
        %v451 = vsel %vm449, %v446, %v444
        %v452 = vld [vmem:[%s1] ss:$8 sm:$0x3]
        %v454 = vlaneseq
        %v455 = vshrl.u32 %v454, 7
        %v456 = vsub.s32 0, %v455
        %v457 = vrot.slane %v452, %v456
        %v458 = vlaneseq
        %v459 = vshrl.u32 %v458, 7
        %v460 = vsub.s32 1, %v459
        %v461 = vrot.slane %v452, %v460
        %v464 = vmul.f32 %v457, %v451
        %v465 = vmul.f32 %v461, %v450
        %v466 = vld [vmem:[%s4] sm:$0x3]
        %467 = vrot.lane.b32.xlu0 %v439, 16
        %v468 = vpop.permute.xlu0 %467
        %469 = vrot.lane.b32.xlu0 %v441, 16
        %v470 = vpop.permute.xlu0 %469
        %vm471 = vcmp.lt.s32.totalorder %v448, 16
        %v472 = vsel %vm471, %v468, %v470
        %v473 = vsel %vm471, %v470, %v468
        %s474 = scalar_lea.vmem %s1, 1
        %v475 = vld [vmem:[%s474] ss:$8 sm:$0x3]
        %v477 = vlaneseq
        %v478 = vshrl.u32 %v477, 7
        %v479 = vsub.s32 0, %v478
        %v480 = vrot.slane %v475, %v479
        %v481 = vlaneseq
        %v482 = vshrl.u32 %v481, 7
        %v483 = vsub.s32 1, %v482
        %v484 = vrot.slane %v475, %v483
        %v487 = vmul.f32 %v480, %v473
        %v488 = vmul.f32 %v484, %v472
        %s489 = scalar_lea.vmem %s4, 2
        %v490 = vld [vmem:[%s489] sm:$0x3]
        %vm491 = vcmask 15360
        %v493 = vsel %vm491, %v490, 0
        %vm495 = vcmask 1041408
        %v497 = vsel %vm495, %v487, 0
        %v500 = vsel %vm495, %v488, 0
        %502 = vmatprep.subr.mxu0 %v500
        %503 = vmatpush1.msra.mxu0 %v497
        %504 = vmatprep.subr.mxu0 0.0
        %505 = vmatpush1.msra.mxu0 0.0
        %506 = vmatprep.subr.mxu0 0.0
        %507 = vmatpush1.msra.mxu0 0.0
        %508 = vmatprep.subr.mxu0 0.0
        %509 = vmatpush1.msra.mxu0 0.0
        %510 = vmatprep.subr.mxu0 0.0
        %511 = vmatpush1.msra.mxu0 0.0
        %512 = vmatprep.subr.mxu0 0.0
        %513 = vmatpush1.msra.mxu0 0.0
        %514 = vmatprep.subr.mxu0 0.0
        %515 = vmatpush1.msra.mxu0 0.0
        %516 = vmatprep.subr.mxu0 0.0
        %517 = vmatpush1.msra.mxu0 0.0
        %518 = vmatprep.subr.mxu0 0.0
        %519 = vmatpush1.msra.mxu0 0.0
        %520 = vmatprep.subr.mxu0 0.0
        %521 = vmatpush1.msra.mxu0 0.0
        %522 = vmatprep.subr.mxu0 0.0
        %523 = vmatpush1.msra.mxu0 0.0
        %524 = vmatprep.subr.mxu0 0.0
        %525 = vmatpush1.msra.mxu0 0.0
        %526 = vmatprep.subr.mxu0 0.0
        %527 = vmatpush1.msra.mxu0 0.0
        %528 = vmatprep.subr.mxu0 0.0
        %529 = vmatpush1.msra.mxu0 0.0
        %530 = vmatprep.subr.mxu0 0.0
        %531 = vmatpush1.msra.mxu0 0.0
        %532 = vmatprep.subr.mxu0 0.0
        %533 = vmatpush1.msra.mxu0 0.0
        %534 = vmatprep.subr.mxu0 0.0
        %535 = vmatpush1.msra.mxu0 0.0
        %536 = vmatprep.subr.mxu0 0.0
        %537 = vmatpush1.msra.mxu0 0.0
        %538 = vmatprep.subr.mxu0 0.0
        %539 = vmatpush1.msra.mxu0 0.0
        %540 = vmatprep.subr.mxu0 0.0
        %541 = vmatpush1.msra.mxu0 0.0
        %542 = vmatprep.subr.mxu0 0.0
        %543 = vmatpush1.msra.mxu0 0.0
        %544 = vmatprep.subr.mxu0 0.0
        %545 = vmatpush1.msra.mxu0 0.0
        %546 = vmatprep.subr.mxu0 0.0
        %547 = vmatpush1.msra.mxu0 0.0
        %548 = vmatprep.subr.mxu0 0.0
        %549 = vmatpush1.msra.mxu0 0.0
        %550 = vmatprep.subr.mxu0 0.0
        %551 = vmatpush1.msra.mxu0 0.0
        %552 = vmatprep.subr.mxu0 0.0
        %553 = vmatpush1.msra.mxu0 0.0
        %554 = vmatprep.subr.mxu0 0.0
        %555 = vmatpush1.msra.mxu0 0.0
        %556 = vmatprep.subr.mxu0 0.0
        %557 = vmatpush1.msra.mxu0 0.0
        %558 = vmatprep.subr.mxu0 0.0
        %559 = vmatpush1.msra.mxu0 0.0
        %560 = vmatprep.subr.mxu0 0.0
        %561 = vmatpush1.msra.mxu0 0.0
        %562 = vmatprep.subr.mxu0 0.0
        %563 = vmatpush1.msra.mxu0 0.0
        %564 = vmatprep.subr.mxu0 0.0
        %565 = vmatpush1.msra.mxu0 0.0
        %566 = vmatprep.mubr.f32.mxu0 0.0
        %567 = vmatmul.mubr.f32.gmra.mrb[0].mxu0 %v493
        %v568 = vpop.f32.mrb[0].mxu0
        %v569 = vadd.f32 0.0, %v568
        %v570 = vpop.f32.mrb[0].mxu0
        %v571 = vadd.f32 0.0, %v570
        %572 = vdwg.mxu0
        %v574 = vsel %vm491, %v466, 0
        %v577 = vsel %vm495, %v464, 0
        %v580 = vsel %vm495, %v465, 0
        %582 = vmatprep.subr.mxu0 %v580
        %583 = vmatpush1.msra.mxu0 %v577
        %584 = vmatprep.subr.mxu0 0.0
        %585 = vmatpush1.msra.mxu0 0.0
        %586 = vmatprep.subr.mxu0 0.0
        %587 = vmatpush1.msra.mxu0 0.0
        %588 = vmatprep.subr.mxu0 0.0
        %589 = vmatpush1.msra.mxu0 0.0
        %590 = vmatprep.subr.mxu0 0.0
        %591 = vmatpush1.msra.mxu0 0.0
        %592 = vmatprep.subr.mxu0 0.0
        %593 = vmatpush1.msra.mxu0 0.0
        %594 = vmatprep.subr.mxu0 0.0
        %595 = vmatpush1.msra.mxu0 0.0
        %596 = vmatprep.subr.mxu0 0.0
        %597 = vmatpush1.msra.mxu0 0.0
        %598 = vmatprep.subr.mxu0 0.0
        %599 = vmatpush1.msra.mxu0 0.0
        %600 = vmatprep.subr.mxu0 0.0
        %601 = vmatpush1.msra.mxu0 0.0
        %602 = vmatprep.subr.mxu0 0.0
        %603 = vmatpush1.msra.mxu0 0.0
        %604 = vmatprep.subr.mxu0 0.0
        %605 = vmatpush1.msra.mxu0 0.0
        %606 = vmatprep.subr.mxu0 0.0
        %607 = vmatpush1.msra.mxu0 0.0
        %608 = vmatprep.subr.mxu0 0.0
        %609 = vmatpush1.msra.mxu0 0.0
        %610 = vmatprep.subr.mxu0 0.0
        %611 = vmatpush1.msra.mxu0 0.0
        %612 = vmatprep.subr.mxu0 0.0
        %613 = vmatpush1.msra.mxu0 0.0
        %614 = vmatprep.subr.mxu0 0.0
        %615 = vmatpush1.msra.mxu0 0.0
        %616 = vmatprep.subr.mxu0 0.0
        %617 = vmatpush1.msra.mxu0 0.0
        %618 = vmatprep.subr.mxu0 0.0
        %619 = vmatpush1.msra.mxu0 0.0
        %620 = vmatprep.subr.mxu0 0.0
        %621 = vmatpush1.msra.mxu0 0.0
        %622 = vmatprep.subr.mxu0 0.0
        %623 = vmatpush1.msra.mxu0 0.0
        %624 = vmatprep.subr.mxu0 0.0
        %625 = vmatpush1.msra.mxu0 0.0
        %626 = vmatprep.subr.mxu0 0.0
        %627 = vmatpush1.msra.mxu0 0.0
        %628 = vmatprep.subr.mxu0 0.0
        %629 = vmatpush1.msra.mxu0 0.0
        %630 = vmatprep.subr.mxu0 0.0
        %631 = vmatpush1.msra.mxu0 0.0
        %632 = vmatprep.subr.mxu0 0.0
        %633 = vmatpush1.msra.mxu0 0.0
        %634 = vmatprep.subr.mxu0 0.0
        %635 = vmatpush1.msra.mxu0 0.0
        %636 = vmatprep.subr.mxu0 0.0
        %637 = vmatpush1.msra.mxu0 0.0
        %638 = vmatprep.subr.mxu0 0.0
        %639 = vmatpush1.msra.mxu0 0.0
        %640 = vmatprep.subr.mxu0 0.0
        %641 = vmatpush1.msra.mxu0 0.0
        %642 = vmatprep.subr.mxu0 0.0
        %643 = vmatpush1.msra.mxu0 0.0
        %644 = vmatprep.subr.mxu0 0.0
        %645 = vmatpush1.msra.mxu0 0.0
        %646 = vmatprep.mubr.f32.mxu0 0.0
        %647 = vmatmul.mubr.f32.gmra.mrb[0].mxu0 %v574
        %v648 = vpop.f32.mrb[0].mxu0
        %v649 = vadd.f32 %v569, %v648
        %v650 = vpop.f32.mrb[0].mxu0
        %v651 = vadd.f32 %v571, %v650
        %652 = vdwg.mxu0
        %653 = vrot.lane.b32.xlu0 %v439, 15
        %v654 = vpop.permute.xlu0 %653
        %655 = vrot.lane.b32.xlu0 %v441, 15
        %v656 = vpop.permute.xlu0 %655
        %vm657 = vcmp.lt.s32.totalorder %v448, 15
        %v658 = vsel %vm657, %v654, %v656
        %v659 = vsel %vm657, %v656, %v654
        %s660 = scalar_lea.vmem %s1, 2
        %v661 = vld [vmem:[%s660] ss:$8 sm:$0x3]
        %v663 = vlaneseq
        %v664 = vshrl.u32 %v663, 7
        %v665 = vsub.s32 0, %v664
        %v666 = vrot.slane %v661, %v665
        %v667 = vlaneseq
        %v668 = vshrl.u32 %v667, 7
        %v669 = vsub.s32 1, %v668
        %v670 = vrot.slane %v661, %v669
        %v673 = vmul.f32 %v666, %v659
        %v674 = vmul.f32 %v670, %v658
        %s675 = scalar_lea.vmem %s4, 4
        %v676 = vld [vmem:[%s675] sm:$0x3]
        %v678 = vsel %vm491, %v676, 0
        %v681 = vsel %vm495, %v673, 0
        %v684 = vsel %vm495, %v674, 0
        %686 = vmatprep.subr.mxu0 %v684
        %687 = vmatpush1.msra.mxu0 %v681
        %688 = vmatprep.subr.mxu0 0.0
        %689 = vmatpush1.msra.mxu0 0.0
        %690 = vmatprep.subr.mxu0 0.0
        %691 = vmatpush1.msra.mxu0 0.0
        %692 = vmatprep.subr.mxu0 0.0
        %693 = vmatpush1.msra.mxu0 0.0
        %694 = vmatprep.subr.mxu0 0.0
        %695 = vmatpush1.msra.mxu0 0.0
        %696 = vmatprep.subr.mxu0 0.0
        %697 = vmatpush1.msra.mxu0 0.0
        %698 = vmatprep.subr.mxu0 0.0
        %699 = vmatpush1.msra.mxu0 0.0
        %700 = vmatprep.subr.mxu0 0.0
        %701 = vmatpush1.msra.mxu0 0.0
        %702 = vmatprep.subr.mxu0 0.0
        %703 = vmatpush1.msra.mxu0 0.0
        %704 = vmatprep.subr.mxu0 0.0
        %705 = vmatpush1.msra.mxu0 0.0
        %706 = vmatprep.subr.mxu0 0.0
        %707 = vmatpush1.msra.mxu0 0.0
        %708 = vmatprep.subr.mxu0 0.0
        %709 = vmatpush1.msra.mxu0 0.0
        %710 = vmatprep.subr.mxu0 0.0
        %711 = vmatpush1.msra.mxu0 0.0
        %712 = vmatprep.subr.mxu0 0.0
        %713 = vmatpush1.msra.mxu0 0.0
        %714 = vmatprep.subr.mxu0 0.0
        %715 = vmatpush1.msra.mxu0 0.0
        %716 = vmatprep.subr.mxu0 0.0
        %717 = vmatpush1.msra.mxu0 0.0
        %718 = vmatprep.subr.mxu0 0.0
        %719 = vmatpush1.msra.mxu0 0.0
        %720 = vmatprep.subr.mxu0 0.0
        %721 = vmatpush1.msra.mxu0 0.0
        %722 = vmatprep.subr.mxu0 0.0
        %723 = vmatpush1.msra.mxu0 0.0
        %724 = vmatprep.subr.mxu0 0.0
        %725 = vmatpush1.msra.mxu0 0.0
        %726 = vmatprep.subr.mxu0 0.0
        %727 = vmatpush1.msra.mxu0 0.0
        %728 = vmatprep.subr.mxu0 0.0
        %729 = vmatpush1.msra.mxu0 0.0
        %730 = vmatprep.subr.mxu0 0.0
        %731 = vmatpush1.msra.mxu0 0.0
        %732 = vmatprep.subr.mxu0 0.0
        %733 = vmatpush1.msra.mxu0 0.0
        %734 = vmatprep.subr.mxu0 0.0
        %735 = vmatpush1.msra.mxu0 0.0
        %736 = vmatprep.subr.mxu0 0.0
        %737 = vmatpush1.msra.mxu0 0.0
        %738 = vmatprep.subr.mxu0 0.0
        %739 = vmatpush1.msra.mxu0 0.0
        %740 = vmatprep.subr.mxu0 0.0
        %741 = vmatpush1.msra.mxu0 0.0
        %742 = vmatprep.subr.mxu0 0.0
        %743 = vmatpush1.msra.mxu0 0.0
        %744 = vmatprep.subr.mxu0 0.0
        %745 = vmatpush1.msra.mxu0 0.0
        %746 = vmatprep.subr.mxu0 0.0
        %747 = vmatpush1.msra.mxu0 0.0
        %748 = vmatprep.subr.mxu0 0.0
        %749 = vmatpush1.msra.mxu0 0.0
        %750 = vmatprep.mubr.f32.mxu0 0.0
        %751 = vmatmul.mubr.f32.gmra.mrb[0].mxu0 %v678
        %v752 = vpop.f32.mrb[0].mxu0
        %v753 = vadd.f32 0.0, %v752
        %v754 = vpop.f32.mrb[0].mxu0
        %v755 = vadd.f32 0.0, %v754
        %756 = vdwg.mxu0
        %v757 = vadd.f32 %v649, %v753
        %v758 = vadd.f32 %v651, %v755
        %759 = vrot.lane.b32.xlu0 %v439, 1
        %v760 = vpop.permute.xlu0 %759
        %761 = vrot.lane.b32.xlu0 %v441, 1
        %v762 = vpop.permute.xlu0 %761
        %vm763 = vcmp.lt.s32.totalorder %v448, 1
        %v764 = vsel %vm763, %v760, %v762
        %v765 = vsel %vm763, %v762, %v760
        %s766 = scalar_lea.vmem %s1, 3
        %v767 = vld [vmem:[%s766] ss:$8 sm:$0x3]
        %v769 = vlaneseq
        %v770 = vshrl.u32 %v769, 7
        %v771 = vsub.s32 0, %v770
        %v772 = vrot.slane %v767, %v771
        %v773 = vlaneseq
        %v774 = vshrl.u32 %v773, 7
        %v775 = vsub.s32 1, %v774
        %v776 = vrot.slane %v767, %v775
        %v779 = vmul.f32 %v772, %v765
        %v780 = vmul.f32 %v776, %v764
        %s781 = scalar_lea.vmem %s4, 6
        %v782 = vld [vmem:[%s781] sm:$0x3]
        %v784 = vsel %vm491, %v782, 0
        %v787 = vsel %vm495, %v779, 0
        %v790 = vsel %vm495, %v780, 0
        %792 = vmatprep.subr.mxu0 %v790
        %793 = vmatpush1.msra.mxu0 %v787
        %794 = vmatprep.subr.mxu0 0.0
        %795 = vmatpush1.msra.mxu0 0.0
        %796 = vmatprep.subr.mxu0 0.0
        %797 = vmatpush1.msra.mxu0 0.0
        %798 = vmatprep.subr.mxu0 0.0
        %799 = vmatpush1.msra.mxu0 0.0
        %800 = vmatprep.subr.mxu0 0.0
        %801 = vmatpush1.msra.mxu0 0.0
        %802 = vmatprep.subr.mxu0 0.0
        %803 = vmatpush1.msra.mxu0 0.0
        %804 = vmatprep.subr.mxu0 0.0
        %805 = vmatpush1.msra.mxu0 0.0
        %806 = vmatprep.subr.mxu0 0.0
        %807 = vmatpush1.msra.mxu0 0.0
        %808 = vmatprep.subr.mxu0 0.0
        %809 = vmatpush1.msra.mxu0 0.0
        %810 = vmatprep.subr.mxu0 0.0
        %811 = vmatpush1.msra.mxu0 0.0
        %812 = vmatprep.subr.mxu0 0.0
        %813 = vmatpush1.msra.mxu0 0.0
        %814 = vmatprep.subr.mxu0 0.0
        %815 = vmatpush1.msra.mxu0 0.0
        %816 = vmatprep.subr.mxu0 0.0
        %817 = vmatpush1.msra.mxu0 0.0
        %818 = vmatprep.subr.mxu0 0.0
        %819 = vmatpush1.msra.mxu0 0.0
        %820 = vmatprep.subr.mxu0 0.0
        %821 = vmatpush1.msra.mxu0 0.0
        %822 = vmatprep.subr.mxu0 0.0
        %823 = vmatpush1.msra.mxu0 0.0
        %824 = vmatprep.subr.mxu0 0.0
        %825 = vmatpush1.msra.mxu0 0.0
        %826 = vmatprep.subr.mxu0 0.0
        %827 = vmatpush1.msra.mxu0 0.0
        %828 = vmatprep.subr.mxu0 0.0
        %829 = vmatpush1.msra.mxu0 0.0
        %830 = vmatprep.subr.mxu0 0.0
        %831 = vmatpush1.msra.mxu0 0.0
        %832 = vmatprep.subr.mxu0 0.0
        %833 = vmatpush1.msra.mxu0 0.0
        %834 = vmatprep.subr.mxu0 0.0
        %835 = vmatpush1.msra.mxu0 0.0
        %836 = vmatprep.subr.mxu0 0.0
        %837 = vmatpush1.msra.mxu0 0.0
        %838 = vmatprep.subr.mxu0 0.0
        %839 = vmatpush1.msra.mxu0 0.0
        %840 = vmatprep.subr.mxu0 0.0
        %841 = vmatpush1.msra.mxu0 0.0
        %842 = vmatprep.subr.mxu0 0.0
        %843 = vmatpush1.msra.mxu0 0.0
        %844 = vmatprep.subr.mxu0 0.0
        %845 = vmatpush1.msra.mxu0 0.0
        %846 = vmatprep.subr.mxu0 0.0
        %847 = vmatpush1.msra.mxu0 0.0
        %848 = vmatprep.subr.mxu0 0.0
        %849 = vmatpush1.msra.mxu0 0.0
        %850 = vmatprep.subr.mxu0 0.0
        %851 = vmatpush1.msra.mxu0 0.0
        %852 = vmatprep.subr.mxu0 0.0
        %853 = vmatpush1.msra.mxu0 0.0
        %854 = vmatprep.subr.mxu0 0.0
        %855 = vmatpush1.msra.mxu0 0.0
        %856 = vmatprep.mubr.f32.mxu0 0.0
        %857 = vmatmul.mubr.f32.gmra.mrb[0].mxu0 %v784
        %v858 = vpop.f32.mrb[0].mxu0
        %v859 = vadd.f32 0.0, %v858
        %v860 = vpop.f32.mrb[0].mxu0
        %v861 = vadd.f32 0.0, %v860
        %862 = vdwg.mxu0
        %v863 = vadd.f32 %v757, %v859
        %v864 = vadd.f32 %v758, %v861
        %s865 = scalar_lea.vmem %s4, 8
        %v866 = vld [vmem:[%s865] sm:$0x3]
        %v868 = vsel %vm491, %v866, 0
        %v871 = vsel %vm495, %v439, 0
        %v874 = vsel %vm495, %v441, 0
        %876 = vmatprep.subr.mxu0 %v874
        %877 = vmatpush1.msra.mxu0 %v871
        %878 = vmatprep.subr.mxu0 0.0
        %879 = vmatpush1.msra.mxu0 0.0
        %880 = vmatprep.subr.mxu0 0.0
        %881 = vmatpush1.msra.mxu0 0.0
        %882 = vmatprep.subr.mxu0 0.0
        %883 = vmatpush1.msra.mxu0 0.0
        %884 = vmatprep.subr.mxu0 0.0
        %885 = vmatpush1.msra.mxu0 0.0
        %886 = vmatprep.subr.mxu0 0.0
        %887 = vmatpush1.msra.mxu0 0.0
        %888 = vmatprep.subr.mxu0 0.0
        %889 = vmatpush1.msra.mxu0 0.0
        %890 = vmatprep.subr.mxu0 0.0
        %891 = vmatpush1.msra.mxu0 0.0
        %892 = vmatprep.subr.mxu0 0.0
        %893 = vmatpush1.msra.mxu0 0.0
        %894 = vmatprep.subr.mxu0 0.0
        %895 = vmatpush1.msra.mxu0 0.0
        %896 = vmatprep.subr.mxu0 0.0
        %897 = vmatpush1.msra.mxu0 0.0
        %898 = vmatprep.subr.mxu0 0.0
        %899 = vmatpush1.msra.mxu0 0.0
        %900 = vmatprep.subr.mxu0 0.0
        %901 = vmatpush1.msra.mxu0 0.0
        %902 = vmatprep.subr.mxu0 0.0
        %903 = vmatpush1.msra.mxu0 0.0
        %904 = vmatprep.subr.mxu0 0.0
        %905 = vmatpush1.msra.mxu0 0.0
        %906 = vmatprep.subr.mxu0 0.0
        %907 = vmatpush1.msra.mxu0 0.0
        %908 = vmatprep.subr.mxu0 0.0
        %909 = vmatpush1.msra.mxu0 0.0
        %910 = vmatprep.subr.mxu0 0.0
        %911 = vmatpush1.msra.mxu0 0.0
        %912 = vmatprep.subr.mxu0 0.0
        %913 = vmatpush1.msra.mxu0 0.0
        %914 = vmatprep.subr.mxu0 0.0
        %915 = vmatpush1.msra.mxu0 0.0
        %916 = vmatprep.subr.mxu0 0.0
        %917 = vmatpush1.msra.mxu0 0.0
        %918 = vmatprep.subr.mxu0 0.0
        %919 = vmatpush1.msra.mxu0 0.0
        %920 = vmatprep.subr.mxu0 0.0
        %921 = vmatpush1.msra.mxu0 0.0
        %922 = vmatprep.subr.mxu0 0.0
        %923 = vmatpush1.msra.mxu0 0.0
        %924 = vmatprep.subr.mxu0 0.0
        %925 = vmatpush1.msra.mxu0 0.0
        %926 = vmatprep.subr.mxu0 0.0
        %927 = vmatpush1.msra.mxu0 0.0
        %928 = vmatprep.subr.mxu0 0.0
        %929 = vmatpush1.msra.mxu0 0.0
        %930 = vmatprep.subr.mxu0 0.0
        %931 = vmatpush1.msra.mxu0 0.0
        %932 = vmatprep.subr.mxu0 0.0
        %933 = vmatpush1.msra.mxu0 0.0
        %934 = vmatprep.subr.mxu0 0.0
        %935 = vmatpush1.msra.mxu0 0.0
        %936 = vmatprep.subr.mxu0 0.0
        %937 = vmatpush1.msra.mxu0 0.0
        %938 = vmatprep.subr.mxu0 0.0
        %939 = vmatpush1.msra.mxu0 0.0
        %940 = vmatprep.mubr.f32.mxu0 0.0
        %941 = vmatmul.mubr.f32.gmra.mrb[0].mxu0 %v868
        %v942 = vpop.f32.mrb[0].mxu0
        %v943 = vadd.f32 0.0, %v942
        %v944 = vpop.f32.mrb[0].mxu0
        %v945 = vadd.f32 0.0, %v944
        %946 = vdwg.mxu0
        %v947 = vadd.f32 %v863, %v943
        %v948 = vadd.f32 %v864, %v945
        %949 = vrot.lane.b32.xlu0 %v439, 127
        %v950 = vpop.permute.xlu0 %949
        %951 = vrot.lane.b32.xlu0 %v441, 127
        %v952 = vpop.permute.xlu0 %951
        %vm953 = vcmp.lt.s32.totalorder %v448, 127
        %v954 = vsel %vm953, %v950, %v952
        %v955 = vsel %vm953, %v952, %v950
        %s956 = scalar_lea.vmem %s1, 5
        %v957 = vld [vmem:[%s956] ss:$8 sm:$0x3]
        %v959 = vlaneseq
        %v960 = vshrl.u32 %v959, 7
        %v961 = vsub.s32 0, %v960
        %v962 = vrot.slane %v957, %v961
        %v963 = vlaneseq
        %v964 = vshrl.u32 %v963, 7
        %v965 = vsub.s32 1, %v964
        %v966 = vrot.slane %v957, %v965
        %v969 = vmul.f32 %v962, %v954
        %v970 = vmul.f32 %v966, %v955
        %s971 = scalar_lea.vmem %s4, 10
        %v972 = vld [vmem:[%s971] sm:$0x3]
        %v974 = vsel %vm491, %v972, 0
        %v977 = vsel %vm495, %v969, 0
        %v980 = vsel %vm495, %v970, 0
        %982 = vmatprep.subr.mxu0 %v980
        %983 = vmatpush1.msra.mxu0 %v977
        %984 = vmatprep.subr.mxu0 0.0
        %985 = vmatpush1.msra.mxu0 0.0
        %986 = vmatprep.subr.mxu0 0.0
        %987 = vmatpush1.msra.mxu0 0.0
        %988 = vmatprep.subr.mxu0 0.0
        %989 = vmatpush1.msra.mxu0 0.0
        %990 = vmatprep.subr.mxu0 0.0
        %991 = vmatpush1.msra.mxu0 0.0
        %992 = vmatprep.subr.mxu0 0.0
        %993 = vmatpush1.msra.mxu0 0.0
        %994 = vmatprep.subr.mxu0 0.0
        %995 = vmatpush1.msra.mxu0 0.0
        %996 = vmatprep.subr.mxu0 0.0
        %997 = vmatpush1.msra.mxu0 0.0
        %998 = vmatprep.subr.mxu0 0.0
        %999 = vmatpush1.msra.mxu0 0.0
        %1000 = vmatprep.subr.mxu0 0.0
        %1001 = vmatpush1.msra.mxu0 0.0
        %1002 = vmatprep.subr.mxu0 0.0
        %1003 = vmatpush1.msra.mxu0 0.0
        %1004 = vmatprep.subr.mxu0 0.0
        %1005 = vmatpush1.msra.mxu0 0.0
        %1006 = vmatprep.subr.mxu0 0.0
        %1007 = vmatpush1.msra.mxu0 0.0
        %1008 = vmatprep.subr.mxu0 0.0
        %1009 = vmatpush1.msra.mxu0 0.0
        %1010 = vmatprep.subr.mxu0 0.0
        %1011 = vmatpush1.msra.mxu0 0.0
        %1012 = vmatprep.subr.mxu0 0.0
        %1013 = vmatpush1.msra.mxu0 0.0
        %1014 = vmatprep.subr.mxu0 0.0
        %1015 = vmatpush1.msra.mxu0 0.0
        %1016 = vmatprep.subr.mxu0 0.0
        %1017 = vmatpush1.msra.mxu0 0.0
        %1018 = vmatprep.subr.mxu0 0.0
        %1019 = vmatpush1.msra.mxu0 0.0
        %1020 = vmatprep.subr.mxu0 0.0
        %1021 = vmatpush1.msra.mxu0 0.0
        %1022 = vmatprep.subr.mxu0 0.0
        %1023 = vmatpush1.msra.mxu0 0.0
        %1024 = vmatprep.subr.mxu0 0.0
        %1025 = vmatpush1.msra.mxu0 0.0
        %1026 = vmatprep.subr.mxu0 0.0
        %1027 = vmatpush1.msra.mxu0 0.0
        %1028 = vmatprep.subr.mxu0 0.0
        %1029 = vmatpush1.msra.mxu0 0.0
        %1030 = vmatprep.subr.mxu0 0.0
        %1031 = vmatpush1.msra.mxu0 0.0
        %1032 = vmatprep.subr.mxu0 0.0
        %1033 = vmatpush1.msra.mxu0 0.0
        %1034 = vmatprep.subr.mxu0 0.0
        %1035 = vmatpush1.msra.mxu0 0.0
        %1036 = vmatprep.subr.mxu0 0.0
        %1037 = vmatpush1.msra.mxu0 0.0
        %1038 = vmatprep.subr.mxu0 0.0
        %1039 = vmatpush1.msra.mxu0 0.0
        %1040 = vmatprep.subr.mxu0 0.0
        %1041 = vmatpush1.msra.mxu0 0.0
        %1042 = vmatprep.subr.mxu0 0.0
        %1043 = vmatpush1.msra.mxu0 0.0
        %1044 = vmatprep.subr.mxu0 0.0
        %1045 = vmatpush1.msra.mxu0 0.0
        %1046 = vmatprep.mubr.f32.mxu0 0.0
        %1047 = vmatmul.mubr.f32.gmra.mrb[0].mxu0 %v974
        %v1048 = vpop.f32.mrb[0].mxu0
        %v1049 = vadd.f32 0.0, %v1048
        %v1050 = vpop.f32.mrb[0].mxu0
        %v1051 = vadd.f32 0.0, %v1050
        %1052 = vdwg.mxu0
        %v1053 = vadd.f32 %v947, %v1049
        %v1054 = vadd.f32 %v948, %v1051
        %1055 = vrot.lane.b32.xlu0 %v439, 113
        %v1056 = vpop.permute.xlu0 %1055
        %1057 = vrot.lane.b32.xlu0 %v441, 113
        %v1058 = vpop.permute.xlu0 %1057
        %vm1059 = vcmp.lt.s32.totalorder %v448, 113
        %v1060 = vsel %vm1059, %v1056, %v1058
        %v1061 = vsel %vm1059, %v1058, %v1056
        %s1062 = scalar_lea.vmem %s1, 6
        %v1063 = vld [vmem:[%s1062] ss:$8 sm:$0x3]
        %v1065 = vlaneseq
        %v1066 = vshrl.u32 %v1065, 7
        %v1067 = vsub.s32 0, %v1066
        %v1068 = vrot.slane %v1063, %v1067
        %v1069 = vlaneseq
        %v1070 = vshrl.u32 %v1069, 7
        %v1071 = vsub.s32 1, %v1070
        %v1072 = vrot.slane %v1063, %v1071
        %v1075 = vmul.f32 %v1068, %v1060
        %v1076 = vmul.f32 %v1072, %v1061
        %s1077 = scalar_lea.vmem %s4, 12
        %v1078 = vld [vmem:[%s1077] sm:$0x3]
        %v1080 = vsel %vm491, %v1078, 0
        %v1083 = vsel %vm495, %v1075, 0
        %v1086 = vsel %vm495, %v1076, 0
        %1088 = vmatprep.subr.mxu0 %v1086
        %1089 = vmatpush1.msra.mxu0 %v1083
        %1090 = vmatprep.subr.mxu0 0.0
        %1091 = vmatpush1.msra.mxu0 0.0
        %1092 = vmatprep.subr.mxu0 0.0
        %1093 = vmatpush1.msra.mxu0 0.0
        %1094 = vmatprep.subr.mxu0 0.0
        %1095 = vmatpush1.msra.mxu0 0.0
        %1096 = vmatprep.subr.mxu0 0.0
        %1097 = vmatpush1.msra.mxu0 0.0
        %1098 = vmatprep.subr.mxu0 0.0
        %1099 = vmatpush1.msra.mxu0 0.0
        %1100 = vmatprep.subr.mxu0 0.0
        %1101 = vmatpush1.msra.mxu0 0.0
        %1102 = vmatprep.subr.mxu0 0.0
        %1103 = vmatpush1.msra.mxu0 0.0
        %1104 = vmatprep.subr.mxu0 0.0
        %1105 = vmatpush1.msra.mxu0 0.0
        %1106 = vmatprep.subr.mxu0 0.0
        %1107 = vmatpush1.msra.mxu0 0.0
        %1108 = vmatprep.subr.mxu0 0.0
        %1109 = vmatpush1.msra.mxu0 0.0
        %1110 = vmatprep.subr.mxu0 0.0
        %1111 = vmatpush1.msra.mxu0 0.0
        %1112 = vmatprep.subr.mxu0 0.0
        %1113 = vmatpush1.msra.mxu0 0.0
        %1114 = vmatprep.subr.mxu0 0.0
        %1115 = vmatpush1.msra.mxu0 0.0
        %1116 = vmatprep.subr.mxu0 0.0
        %1117 = vmatpush1.msra.mxu0 0.0
        %1118 = vmatprep.subr.mxu0 0.0
        %1119 = vmatpush1.msra.mxu0 0.0
        %1120 = vmatprep.subr.mxu0 0.0
        %1121 = vmatpush1.msra.mxu0 0.0
        %1122 = vmatprep.subr.mxu0 0.0
        %1123 = vmatpush1.msra.mxu0 0.0
        %1124 = vmatprep.subr.mxu0 0.0
        %1125 = vmatpush1.msra.mxu0 0.0
        %1126 = vmatprep.subr.mxu0 0.0
        %1127 = vmatpush1.msra.mxu0 0.0
        %1128 = vmatprep.subr.mxu0 0.0
        %1129 = vmatpush1.msra.mxu0 0.0
        %1130 = vmatprep.subr.mxu0 0.0
        %1131 = vmatpush1.msra.mxu0 0.0
        %1132 = vmatprep.subr.mxu0 0.0
        %1133 = vmatpush1.msra.mxu0 0.0
        %1134 = vmatprep.subr.mxu0 0.0
        %1135 = vmatpush1.msra.mxu0 0.0
        %1136 = vmatprep.subr.mxu0 0.0
        %1137 = vmatpush1.msra.mxu0 0.0
        %1138 = vmatprep.subr.mxu0 0.0
        %1139 = vmatpush1.msra.mxu0 0.0
        %1140 = vmatprep.subr.mxu0 0.0
        %1141 = vmatpush1.msra.mxu0 0.0
        %1142 = vmatprep.subr.mxu0 0.0
        %1143 = vmatpush1.msra.mxu0 0.0
        %1144 = vmatprep.subr.mxu0 0.0
        %1145 = vmatpush1.msra.mxu0 0.0
        %1146 = vmatprep.subr.mxu0 0.0
        %1147 = vmatpush1.msra.mxu0 0.0
        %1148 = vmatprep.subr.mxu0 0.0
        %1149 = vmatpush1.msra.mxu0 0.0
        %1150 = vmatprep.subr.mxu0 0.0
        %1151 = vmatpush1.msra.mxu0 0.0
        %1152 = vmatprep.mubr.f32.mxu0 0.0
        %1153 = vmatmul.mubr.f32.gmra.mrb[0].mxu0 %v1080
        %v1154 = vpop.f32.mrb[0].mxu0
        %v1155 = vadd.f32 0.0, %v1154
        %v1156 = vpop.f32.mrb[0].mxu0
        %v1157 = vadd.f32 0.0, %v1156
        %1158 = vdwg.mxu0
        %v1159 = vadd.f32 %v1053, %v1155
        %v1160 = vadd.f32 %v1054, %v1157
        %1161 = vrot.lane.b32.xlu0 %v439, 112
        %v1162 = vpop.permute.xlu0 %1161
        %1163 = vrot.lane.b32.xlu0 %v441, 112
        %v1164 = vpop.permute.xlu0 %1163
        %vm1165 = vcmp.lt.s32.totalorder %v448, 112
        %v1166 = vsel %vm1165, %v1162, %v1164
        %v1167 = vsel %vm1165, %v1164, %v1162
        %s1168 = scalar_lea.vmem %s1, 7
        %v1169 = vld [vmem:[%s1168] ss:$8 sm:$0x3]
        %v1171 = vlaneseq
        %v1172 = vshrl.u32 %v1171, 7
        %v1173 = vsub.s32 0, %v1172
        %v1174 = vrot.slane %v1169, %v1173
        %v1175 = vlaneseq
        %v1176 = vshrl.u32 %v1175, 7
        %v1177 = vsub.s32 1, %v1176
        %v1178 = vrot.slane %v1169, %v1177
        %v1181 = vmul.f32 %v1174, %v1166
        %v1182 = vmul.f32 %v1178, %v1167
        %s1183 = scalar_lea.vmem %s4, 14
        %v1184 = vld [vmem:[%s1183] sm:$0x3]
        %v1186 = vsel %vm491, %v1184, 0
        %v1189 = vsel %vm495, %v1181, 0
        %v1192 = vsel %vm495, %v1182, 0
        %1194 = vmatprep.subr.mxu0 %v1192
        %1195 = vmatpush1.msra.mxu0 %v1189
        %1196 = vmatprep.subr.mxu0 0.0
        %1197 = vmatpush1.msra.mxu0 0.0
        %1198 = vmatprep.subr.mxu0 0.0
        %1199 = vmatpush1.msra.mxu0 0.0
        %1200 = vmatprep.subr.mxu0 0.0
        %1201 = vmatpush1.msra.mxu0 0.0
        %1202 = vmatprep.subr.mxu0 0.0
        %1203 = vmatpush1.msra.mxu0 0.0
        %1204 = vmatprep.subr.mxu0 0.0
        %1205 = vmatpush1.msra.mxu0 0.0
        %1206 = vmatprep.subr.mxu0 0.0
        %1207 = vmatpush1.msra.mxu0 0.0
        %1208 = vmatprep.subr.mxu0 0.0
        %1209 = vmatpush1.msra.mxu0 0.0
        %1210 = vmatprep.subr.mxu0 0.0
        %1211 = vmatpush1.msra.mxu0 0.0
        %1212 = vmatprep.subr.mxu0 0.0
        %1213 = vmatpush1.msra.mxu0 0.0
        %1214 = vmatprep.subr.mxu0 0.0
        %1215 = vmatpush1.msra.mxu0 0.0
        %1216 = vmatprep.subr.mxu0 0.0
        %1217 = vmatpush1.msra.mxu0 0.0
        %1218 = vmatprep.subr.mxu0 0.0
        %1219 = vmatpush1.msra.mxu0 0.0
        %1220 = vmatprep.subr.mxu0 0.0
        %1221 = vmatpush1.msra.mxu0 0.0
        %1222 = vmatprep.subr.mxu0 0.0
        %1223 = vmatpush1.msra.mxu0 0.0
        %1224 = vmatprep.subr.mxu0 0.0
        %1225 = vmatpush1.msra.mxu0 0.0
        %1226 = vmatprep.subr.mxu0 0.0
        %1227 = vmatpush1.msra.mxu0 0.0
        %1228 = vmatprep.subr.mxu0 0.0
        %1229 = vmatpush1.msra.mxu0 0.0
        %1230 = vmatprep.subr.mxu0 0.0
        %1231 = vmatpush1.msra.mxu0 0.0
        %1232 = vmatprep.subr.mxu0 0.0
        %1233 = vmatpush1.msra.mxu0 0.0
        %1234 = vmatprep.subr.mxu0 0.0
        %1235 = vmatpush1.msra.mxu0 0.0
        %1236 = vmatprep.subr.mxu0 0.0
        %1237 = vmatpush1.msra.mxu0 0.0
        %1238 = vmatprep.subr.mxu0 0.0
        %1239 = vmatpush1.msra.mxu0 0.0
        %1240 = vmatprep.subr.mxu0 0.0
        %1241 = vmatpush1.msra.mxu0 0.0
        %1242 = vmatprep.subr.mxu0 0.0
        %1243 = vmatpush1.msra.mxu0 0.0
        %1244 = vmatprep.subr.mxu0 0.0
        %1245 = vmatpush1.msra.mxu0 0.0
        %1246 = vmatprep.subr.mxu0 0.0
        %1247 = vmatpush1.msra.mxu0 0.0
        %1248 = vmatprep.subr.mxu0 0.0
        %1249 = vmatpush1.msra.mxu0 0.0
        %1250 = vmatprep.subr.mxu0 0.0
        %1251 = vmatpush1.msra.mxu0 0.0
        %1252 = vmatprep.subr.mxu0 0.0
        %1253 = vmatpush1.msra.mxu0 0.0
        %1254 = vmatprep.subr.mxu0 0.0
        %1255 = vmatpush1.msra.mxu0 0.0
        %1256 = vmatprep.subr.mxu0 0.0
        %1257 = vmatpush1.msra.mxu0 0.0
        %1258 = vmatprep.mubr.f32.mxu0 0.0
        %1259 = vmatmul.mubr.f32.gmra.mrb[0].mxu0 %v1186
        %v1260 = vpop.f32.mrb[0].mxu0
        %v1261 = vadd.f32 0.0, %v1260
        %v1262 = vpop.f32.mrb[0].mxu0
        %v1263 = vadd.f32 0.0, %v1262
        %1264 = vdwg.mxu0
        %v1265 = vadd.f32 %v1159, %v1261
        %v1266 = vadd.f32 %v1160, %v1263
        %1267 = vrot.lane.b32.xlu0 %v439, 111
        %v1268 = vpop.permute.xlu0 %1267
        %1269 = vrot.lane.b32.xlu0 %v441, 111
        %v1270 = vpop.permute.xlu0 %1269
        %vm1271 = vcmp.lt.s32.totalorder %v448, 111
        %v1272 = vsel %vm1271, %v1268, %v1270
        %v1273 = vsel %vm1271, %v1270, %v1268
        %s1274 = scalar_lea.vmem %s1, 16
        %v1275 = vld [vmem:[%s1274] ss:$8 sm:$0x3]
        %v1277 = vlaneseq
        %v1278 = vshrl.u32 %v1277, 7
        %v1279 = vsub.s32 0, %v1278
        %v1280 = vrot.slane %v1275, %v1279
        %v1281 = vlaneseq
        %v1282 = vshrl.u32 %v1281, 7
        %v1283 = vsub.s32 1, %v1282
        %v1284 = vrot.slane %v1275, %v1283
        %v1287 = vmul.f32 %v1280, %v1272
        %v1288 = vmul.f32 %v1284, %v1273
        %s1289 = scalar_lea.vmem %s4, 16
        %v1290 = vld [vmem:[%s1289] sm:$0x3]
        %v1292 = vsel %vm491, %v1290, 0
        %v1295 = vsel %vm495, %v1287, 0
        %v1298 = vsel %vm495, %v1288, 0
        %1300 = vmatprep.subr.mxu0 %v1298
        %1301 = vmatpush1.msra.mxu0 %v1295
        %1302 = vmatprep.subr.mxu0 0.0
        %1303 = vmatpush1.msra.mxu0 0.0
        %1304 = vmatprep.subr.mxu0 0.0
        %1305 = vmatpush1.msra.mxu0 0.0
        %1306 = vmatprep.subr.mxu0 0.0
        %1307 = vmatpush1.msra.mxu0 0.0
        %1308 = vmatprep.subr.mxu0 0.0
        %1309 = vmatpush1.msra.mxu0 0.0
        %1310 = vmatprep.subr.mxu0 0.0
        %1311 = vmatpush1.msra.mxu0 0.0
        %1312 = vmatprep.subr.mxu0 0.0
        %1313 = vmatpush1.msra.mxu0 0.0
        %1314 = vmatprep.subr.mxu0 0.0
        %1315 = vmatpush1.msra.mxu0 0.0
        %1316 = vmatprep.subr.mxu0 0.0
        %1317 = vmatpush1.msra.mxu0 0.0
        %1318 = vmatprep.subr.mxu0 0.0
        %1319 = vmatpush1.msra.mxu0 0.0
        %1320 = vmatprep.subr.mxu0 0.0
        %1321 = vmatpush1.msra.mxu0 0.0
        %1322 = vmatprep.subr.mxu0 0.0
        %1323 = vmatpush1.msra.mxu0 0.0
        %1324 = vmatprep.subr.mxu0 0.0
        %1325 = vmatpush1.msra.mxu0 0.0
        %1326 = vmatprep.subr.mxu0 0.0
        %1327 = vmatpush1.msra.mxu0 0.0
        %1328 = vmatprep.subr.mxu0 0.0
        %1329 = vmatpush1.msra.mxu0 0.0
        %1330 = vmatprep.subr.mxu0 0.0
        %1331 = vmatpush1.msra.mxu0 0.0
        %1332 = vmatprep.subr.mxu0 0.0
        %1333 = vmatpush1.msra.mxu0 0.0
        %1334 = vmatprep.subr.mxu0 0.0
        %1335 = vmatpush1.msra.mxu0 0.0
        %1336 = vmatprep.subr.mxu0 0.0
        %1337 = vmatpush1.msra.mxu0 0.0
        %1338 = vmatprep.subr.mxu0 0.0
        %1339 = vmatpush1.msra.mxu0 0.0
        %1340 = vmatprep.subr.mxu0 0.0
        %1341 = vmatpush1.msra.mxu0 0.0
        %1342 = vmatprep.subr.mxu0 0.0
        %1343 = vmatpush1.msra.mxu0 0.0
        %1344 = vmatprep.subr.mxu0 0.0
        %1345 = vmatpush1.msra.mxu0 0.0
        %1346 = vmatprep.subr.mxu0 0.0
        %1347 = vmatpush1.msra.mxu0 0.0
        %1348 = vmatprep.subr.mxu0 0.0
        %1349 = vmatpush1.msra.mxu0 0.0
        %1350 = vmatprep.subr.mxu0 0.0
        %1351 = vmatpush1.msra.mxu0 0.0
        %1352 = vmatprep.subr.mxu0 0.0
        %1353 = vmatpush1.msra.mxu0 0.0
        %1354 = vmatprep.subr.mxu0 0.0
        %1355 = vmatpush1.msra.mxu0 0.0
        %1356 = vmatprep.subr.mxu0 0.0
        %1357 = vmatpush1.msra.mxu0 0.0
        %1358 = vmatprep.subr.mxu0 0.0
        %1359 = vmatpush1.msra.mxu0 0.0
        %1360 = vmatprep.subr.mxu0 0.0
        %1361 = vmatpush1.msra.mxu0 0.0
        %1362 = vmatprep.subr.mxu0 0.0
        %1363 = vmatpush1.msra.mxu0 0.0
        %1364 = vmatprep.mubr.f32.mxu0 0.0
        %1365 = vmatmul.mubr.f32.gmra.mrb[0].mxu0 %v1292
        %v1366 = vpop.f32.mrb[0].mxu0
        %v1367 = vadd.f32 0.0, %v1366
        %v1368 = vpop.f32.mrb[0].mxu0
        %v1369 = vadd.f32 0.0, %v1368
        %1370 = vdwg.mxu0
        %v1371 = vadd.f32 %v1265, %v1367
        %v1372 = vadd.f32 %v1266, %v1369
        %v1374 = vsel %vm363, %v359, 0
        %1376 = vmatprep.subr.mxu0 %v370
        %1377 = vmatpush1.msra.mxu0 %v368
        %1378 = vmatprep.subr.mxu0 0.0
        %1379 = vmatpush1.msra.mxu0 0.0
        %1380 = vmatprep.subr.mxu0 0.0
        %1381 = vmatpush1.msra.mxu0 0.0
        %1382 = vmatprep.subr.mxu0 0.0
        %1383 = vmatpush1.msra.mxu0 0.0
        %1384 = vmatprep.subr.mxu0 0.0
        %1385 = vmatpush1.msra.mxu0 0.0
        %1386 = vmatprep.subr.mxu0 0.0
        %1387 = vmatpush1.msra.mxu0 0.0
        %1388 = vmatprep.subr.mxu0 0.0
        %1389 = vmatpush1.msra.mxu0 0.0
        %1390 = vmatprep.subr.mxu0 0.0
        %1391 = vmatpush1.msra.mxu0 0.0
        %1392 = vmatprep.subr.mxu0 0.0
        %1393 = vmatpush1.msra.mxu0 0.0
        %1394 = vmatprep.subr.mxu0 0.0
        %1395 = vmatpush1.msra.mxu0 0.0
        %1396 = vmatprep.subr.mxu0 0.0
        %1397 = vmatpush1.msra.mxu0 0.0
        %1398 = vmatprep.subr.mxu0 0.0
        %1399 = vmatpush1.msra.mxu0 0.0
        %1400 = vmatprep.subr.mxu0 0.0
        %1401 = vmatpush1.msra.mxu0 0.0
        %1402 = vmatprep.subr.mxu0 0.0
        %1403 = vmatpush1.msra.mxu0 0.0
        %1404 = vmatprep.subr.mxu0 0.0
        %1405 = vmatpush1.msra.mxu0 0.0
        %1406 = vmatprep.subr.mxu0 0.0
        %1407 = vmatpush1.msra.mxu0 0.0
        %1408 = vmatprep.subr.mxu0 0.0
        %1409 = vmatpush1.msra.mxu0 0.0
        %1410 = vmatprep.subr.mxu0 0.0
        %1411 = vmatpush1.msra.mxu0 0.0
        %1412 = vmatprep.subr.mxu0 0.0
        %1413 = vmatpush1.msra.mxu0 0.0
        %1414 = vmatprep.subr.mxu0 0.0
        %1415 = vmatpush1.msra.mxu0 0.0
        %1416 = vmatprep.subr.mxu0 0.0
        %1417 = vmatpush1.msra.mxu0 0.0
        %1418 = vmatprep.subr.mxu0 0.0
        %1419 = vmatpush1.msra.mxu0 0.0
        %1420 = vmatprep.subr.mxu0 0.0
        %1421 = vmatpush1.msra.mxu0 0.0
        %1422 = vmatprep.subr.mxu0 0.0
        %1423 = vmatpush1.msra.mxu0 0.0
        %1424 = vmatprep.subr.mxu0 0.0
        %1425 = vmatpush1.msra.mxu0 0.0
        %1426 = vmatprep.subr.mxu0 0.0
        %1427 = vmatpush1.msra.mxu0 0.0
        %1428 = vmatprep.subr.mxu0 0.0
        %1429 = vmatpush1.msra.mxu0 0.0
        %1430 = vmatprep.subr.mxu0 0.0
        %1431 = vmatpush1.msra.mxu0 0.0
        %1432 = vmatprep.subr.mxu0 0.0
        %1433 = vmatpush1.msra.mxu0 0.0
        %1434 = vmatprep.subr.mxu0 0.0
        %1435 = vmatpush1.msra.mxu0 0.0
        %1436 = vmatprep.subr.mxu0 0.0
        %1437 = vmatpush1.msra.mxu0 0.0
        %1438 = vmatprep.subr.mxu0 0.0
        %1439 = vmatpush1.msra.mxu0 0.0
        %1440 = vmatprep.mubr.f32.mxu0 0.0
        %1441 = vmatmul.mubr.f32.gmra.mrb[0].mxu0 %v1374
        %v1442 = vpop.f32.mrb[0].mxu0
        %v1443 = vadd.f32 %v1371, %v1442
        %v1444 = vpop.f32.mrb[0].mxu0
        %v1445 = vadd.f32 %v1372, %v1444
        %1446 = vdwg.mxu0
        %v1447 = vld [vmem:[%s5] sm:$0x3]
        %1449 = vset.pattern.permute.xlu0 0
        %1450 = vperm.xlu0 %1449, %v1447
        %v1451 = vpop.permute.xlu0 %1450
        %v1453 = vadd.f32 %v1443, %v1451
        %v1454 = vadd.f32 %v1445, %v1451
        %1455 = vrot.lane.b32.xlu0 %v1453, 17
        %v1456 = vpop.permute.xlu0 %1455
        %1457 = vrot.lane.b32.xlu0 %v1454, 17
        %v1458 = vpop.permute.xlu0 %1457
        %v1459 = vsel %vm449, %v1456, %v1458
        %v1460 = vsel %vm449, %v1458, %v1456
        %v1461 = vmul.f32 %v457, %v1460
        %v1462 = vmul.f32 %v461, %v1459
        %v1463 = vld [vmem:[%s6] sm:$0x3]
        %v1464 = vld [vmem:[%s8] sm:$0x3]
        %1465 = vrot.lane.b32.xlu0 %v1453, 16
        %v1466 = vpop.permute.xlu0 %1465
        %1467 = vrot.lane.b32.xlu0 %v1454, 16
        %v1468 = vpop.permute.xlu0 %1467
        %v1469 = vsel %vm471, %v1466, %v1468
        %v1470 = vsel %vm471, %v1468, %v1466
        %v1471 = vmul.f32 %v480, %v1470
        %v1472 = vmul.f32 %v484, %v1469
        %s1473 = scalar_lea.vmem %s6, 2
        %v1474 = vld [vmem:[%s1473] sm:$0x3]
        %v1476 = vsel %vm491, %v1474, 0
        %v1479 = vsel %vm495, %v1471, 0
        %v1482 = vsel %vm495, %v1472, 0
        %1484 = vmatprep.subr.mxu0 %v1482
        %1485 = vmatpush1.msra.mxu0 %v1479
        %1486 = vmatprep.subr.mxu0 0.0
        %1487 = vmatpush1.msra.mxu0 0.0
        %1488 = vmatprep.subr.mxu0 0.0
        %1489 = vmatpush1.msra.mxu0 0.0
        %1490 = vmatprep.subr.mxu0 0.0
        %1491 = vmatpush1.msra.mxu0 0.0
        %1492 = vmatprep.subr.mxu0 0.0
        %1493 = vmatpush1.msra.mxu0 0.0
        %1494 = vmatprep.subr.mxu0 0.0
        %1495 = vmatpush1.msra.mxu0 0.0
        %1496 = vmatprep.subr.mxu0 0.0
        %1497 = vmatpush1.msra.mxu0 0.0
        %1498 = vmatprep.subr.mxu0 0.0
        %1499 = vmatpush1.msra.mxu0 0.0
        %1500 = vmatprep.subr.mxu0 0.0
        %1501 = vmatpush1.msra.mxu0 0.0
        %1502 = vmatprep.subr.mxu0 0.0
        %1503 = vmatpush1.msra.mxu0 0.0
        %1504 = vmatprep.subr.mxu0 0.0
        %1505 = vmatpush1.msra.mxu0 0.0
        %1506 = vmatprep.subr.mxu0 0.0
        %1507 = vmatpush1.msra.mxu0 0.0
        %1508 = vmatprep.subr.mxu0 0.0
        %1509 = vmatpush1.msra.mxu0 0.0
        %1510 = vmatprep.subr.mxu0 0.0
        %1511 = vmatpush1.msra.mxu0 0.0
        %1512 = vmatprep.subr.mxu0 0.0
        %1513 = vmatpush1.msra.mxu0 0.0
        %1514 = vmatprep.subr.mxu0 0.0
        %1515 = vmatpush1.msra.mxu0 0.0
        %1516 = vmatprep.subr.mxu0 0.0
        %1517 = vmatpush1.msra.mxu0 0.0
        %1518 = vmatprep.subr.mxu0 0.0
        %1519 = vmatpush1.msra.mxu0 0.0
        %1520 = vmatprep.subr.mxu0 0.0
        %1521 = vmatpush1.msra.mxu0 0.0
        %1522 = vmatprep.subr.mxu0 0.0
        %1523 = vmatpush1.msra.mxu0 0.0
        %1524 = vmatprep.subr.mxu0 0.0
        %1525 = vmatpush1.msra.mxu0 0.0
        %1526 = vmatprep.subr.mxu0 0.0
        %1527 = vmatpush1.msra.mxu0 0.0
        %1528 = vmatprep.subr.mxu0 0.0
        %1529 = vmatpush1.msra.mxu0 0.0
        %1530 = vmatprep.subr.mxu0 0.0
        %1531 = vmatpush1.msra.mxu0 0.0
        %1532 = vmatprep.subr.mxu0 0.0
        %1533 = vmatpush1.msra.mxu0 0.0
        %1534 = vmatprep.subr.mxu0 0.0
        %1535 = vmatpush1.msra.mxu0 0.0
        %1536 = vmatprep.subr.mxu0 0.0
        %1537 = vmatpush1.msra.mxu0 0.0
        %1538 = vmatprep.subr.mxu0 0.0
        %1539 = vmatpush1.msra.mxu0 0.0
        %1540 = vmatprep.subr.mxu0 0.0
        %1541 = vmatpush1.msra.mxu0 0.0
        %1542 = vmatprep.subr.mxu0 0.0
        %1543 = vmatpush1.msra.mxu0 0.0
        %1544 = vmatprep.subr.mxu0 0.0
        %1545 = vmatpush1.msra.mxu0 0.0
        %1546 = vmatprep.subr.mxu0 0.0
        %1547 = vmatpush1.msra.mxu0 0.0
        %1548 = vmatprep.mubr.f32.mxu0 0.0
        %1549 = vmatmul.mubr.f32.gmra.mrb[0].mxu0 %v1476
        %v1550 = vpop.f32.mrb[0].mxu0
        %v1551 = vadd.f32 0.0, %v1550
        %v1552 = vpop.f32.mrb[0].mxu0
        %v1553 = vadd.f32 0.0, %v1552
        %1554 = vdwg.mxu0
        %v1556 = vsel %vm491, %v1463, 0
        %v1559 = vsel %vm495, %v1461, 0
        %v1562 = vsel %vm495, %v1462, 0
        %1564 = vmatprep.subr.mxu0 %v1562
        %1565 = vmatpush1.msra.mxu0 %v1559
        %1566 = vmatprep.subr.mxu0 0.0
        %1567 = vmatpush1.msra.mxu0 0.0
        %1568 = vmatprep.subr.mxu0 0.0
        %1569 = vmatpush1.msra.mxu0 0.0
        %1570 = vmatprep.subr.mxu0 0.0
        %1571 = vmatpush1.msra.mxu0 0.0
        %1572 = vmatprep.subr.mxu0 0.0
        %1573 = vmatpush1.msra.mxu0 0.0
        %1574 = vmatprep.subr.mxu0 0.0
        %1575 = vmatpush1.msra.mxu0 0.0
        %1576 = vmatprep.subr.mxu0 0.0
        %1577 = vmatpush1.msra.mxu0 0.0
        %1578 = vmatprep.subr.mxu0 0.0
        %1579 = vmatpush1.msra.mxu0 0.0
        %1580 = vmatprep.subr.mxu0 0.0
        %1581 = vmatpush1.msra.mxu0 0.0
        %1582 = vmatprep.subr.mxu0 0.0
        %1583 = vmatpush1.msra.mxu0 0.0
        %1584 = vmatprep.subr.mxu0 0.0
        %1585 = vmatpush1.msra.mxu0 0.0
        %1586 = vmatprep.subr.mxu0 0.0
        %1587 = vmatpush1.msra.mxu0 0.0
        %1588 = vmatprep.subr.mxu0 0.0
        %1589 = vmatpush1.msra.mxu0 0.0
        %1590 = vmatprep.subr.mxu0 0.0
        %1591 = vmatpush1.msra.mxu0 0.0
        %1592 = vmatprep.subr.mxu0 0.0
        %1593 = vmatpush1.msra.mxu0 0.0
        %1594 = vmatprep.subr.mxu0 0.0
        %1595 = vmatpush1.msra.mxu0 0.0
        %1596 = vmatprep.subr.mxu0 0.0
        %1597 = vmatpush1.msra.mxu0 0.0
        %1598 = vmatprep.subr.mxu0 0.0
        %1599 = vmatpush1.msra.mxu0 0.0
        %1600 = vmatprep.subr.mxu0 0.0
        %1601 = vmatpush1.msra.mxu0 0.0
        %1602 = vmatprep.subr.mxu0 0.0
        %1603 = vmatpush1.msra.mxu0 0.0
        %1604 = vmatprep.subr.mxu0 0.0
        %1605 = vmatpush1.msra.mxu0 0.0
        %1606 = vmatprep.subr.mxu0 0.0
        %1607 = vmatpush1.msra.mxu0 0.0
        %1608 = vmatprep.subr.mxu0 0.0
        %1609 = vmatpush1.msra.mxu0 0.0
        %1610 = vmatprep.subr.mxu0 0.0
        %1611 = vmatpush1.msra.mxu0 0.0
        %1612 = vmatprep.subr.mxu0 0.0
        %1613 = vmatpush1.msra.mxu0 0.0
        %1614 = vmatprep.subr.mxu0 0.0
        %1615 = vmatpush1.msra.mxu0 0.0
        %1616 = vmatprep.subr.mxu0 0.0
        %1617 = vmatpush1.msra.mxu0 0.0
        %1618 = vmatprep.subr.mxu0 0.0
        %1619 = vmatpush1.msra.mxu0 0.0
        %1620 = vmatprep.subr.mxu0 0.0
        %1621 = vmatpush1.msra.mxu0 0.0
        %1622 = vmatprep.subr.mxu0 0.0
        %1623 = vmatpush1.msra.mxu0 0.0
        %1624 = vmatprep.subr.mxu0 0.0
        %1625 = vmatpush1.msra.mxu0 0.0
        %1626 = vmatprep.subr.mxu0 0.0
        %1627 = vmatpush1.msra.mxu0 0.0
        %1628 = vmatprep.mubr.f32.mxu0 0.0
        %1629 = vmatmul.mubr.f32.gmra.mrb[0].mxu0 %v1556
        %v1630 = vpop.f32.mrb[0].mxu0
        %v1631 = vadd.f32 %v1551, %v1630
        %v1632 = vpop.f32.mrb[0].mxu0
        %v1633 = vadd.f32 %v1553, %v1632
        %1634 = vdwg.mxu0
        %s1635 = scalar_lea.vmem %s8, 2
        %v1636 = vld [vmem:[%s1635] sm:$0x3]
        %v1638 = vsel %vm491, %v1636, 0
        %1640 = vmatprep.subr.mxu0 %v1482
        %1641 = vmatpush1.msra.mxu0 %v1479
        %1642 = vmatprep.subr.mxu0 0.0
        %1643 = vmatpush1.msra.mxu0 0.0
        %1644 = vmatprep.subr.mxu0 0.0
        %1645 = vmatpush1.msra.mxu0 0.0
        %1646 = vmatprep.subr.mxu0 0.0
        %1647 = vmatpush1.msra.mxu0 0.0
        %1648 = vmatprep.subr.mxu0 0.0
        %1649 = vmatpush1.msra.mxu0 0.0
        %1650 = vmatprep.subr.mxu0 0.0
        %1651 = vmatpush1.msra.mxu0 0.0
        %1652 = vmatprep.subr.mxu0 0.0
        %1653 = vmatpush1.msra.mxu0 0.0
        %1654 = vmatprep.subr.mxu0 0.0
        %1655 = vmatpush1.msra.mxu0 0.0
        %1656 = vmatprep.subr.mxu0 0.0
        %1657 = vmatpush1.msra.mxu0 0.0
        %1658 = vmatprep.subr.mxu0 0.0
        %1659 = vmatpush1.msra.mxu0 0.0
        %1660 = vmatprep.subr.mxu0 0.0
        %1661 = vmatpush1.msra.mxu0 0.0
        %1662 = vmatprep.subr.mxu0 0.0
        %1663 = vmatpush1.msra.mxu0 0.0
        %1664 = vmatprep.subr.mxu0 0.0
        %1665 = vmatpush1.msra.mxu0 0.0
        %1666 = vmatprep.subr.mxu0 0.0
        %1667 = vmatpush1.msra.mxu0 0.0
        %1668 = vmatprep.subr.mxu0 0.0
        %1669 = vmatpush1.msra.mxu0 0.0
        %1670 = vmatprep.subr.mxu0 0.0
        %1671 = vmatpush1.msra.mxu0 0.0
        %1672 = vmatprep.subr.mxu0 0.0
        %1673 = vmatpush1.msra.mxu0 0.0
        %1674 = vmatprep.subr.mxu0 0.0
        %1675 = vmatpush1.msra.mxu0 0.0
        %1676 = vmatprep.subr.mxu0 0.0
        %1677 = vmatpush1.msra.mxu0 0.0
        %1678 = vmatprep.subr.mxu0 0.0
        %1679 = vmatpush1.msra.mxu0 0.0
        %1680 = vmatprep.subr.mxu0 0.0
        %1681 = vmatpush1.msra.mxu0 0.0
        %1682 = vmatprep.subr.mxu0 0.0
        %1683 = vmatpush1.msra.mxu0 0.0
        %1684 = vmatprep.subr.mxu0 0.0
        %1685 = vmatpush1.msra.mxu0 0.0
        %1686 = vmatprep.subr.mxu0 0.0
        %1687 = vmatpush1.msra.mxu0 0.0
        %1688 = vmatprep.subr.mxu0 0.0
        %1689 = vmatpush1.msra.mxu0 0.0
        %1690 = vmatprep.subr.mxu0 0.0
        %1691 = vmatpush1.msra.mxu0 0.0
        %1692 = vmatprep.subr.mxu0 0.0
        %1693 = vmatpush1.msra.mxu0 0.0
        %1694 = vmatprep.subr.mxu0 0.0
        %1695 = vmatpush1.msra.mxu0 0.0
        %1696 = vmatprep.subr.mxu0 0.0
        %1697 = vmatpush1.msra.mxu0 0.0
        %1698 = vmatprep.subr.mxu0 0.0
        %1699 = vmatpush1.msra.mxu0 0.0
        %1700 = vmatprep.subr.mxu0 0.0
        %1701 = vmatpush1.msra.mxu0 0.0
        %1702 = vmatprep.subr.mxu0 0.0
        %1703 = vmatpush1.msra.mxu0 0.0
        %1704 = vmatprep.mubr.f32.mxu0 0.0
        %1705 = vmatmul.mubr.f32.gmra.mrb[0].mxu0 %v1638
        %v1706 = vpop.f32.mrb[0].mxu0
        %v1707 = vadd.f32 0.0, %v1706
        %v1708 = vpop.f32.mrb[0].mxu0
        %v1709 = vadd.f32 0.0, %v1708
        %1710 = vdwg.mxu0
        %v1712 = vsel %vm491, %v1464, 0
        %1714 = vmatprep.subr.mxu0 %v1562
        %1715 = vmatpush1.msra.mxu0 %v1559
        %1716 = vmatprep.subr.mxu0 0.0
        %1717 = vmatpush1.msra.mxu0 0.0
        %1718 = vmatprep.subr.mxu0 0.0
        %1719 = vmatpush1.msra.mxu0 0.0
        %1720 = vmatprep.subr.mxu0 0.0
        %1721 = vmatpush1.msra.mxu0 0.0
        %1722 = vmatprep.subr.mxu0 0.0
        %1723 = vmatpush1.msra.mxu0 0.0
        %1724 = vmatprep.subr.mxu0 0.0
        %1725 = vmatpush1.msra.mxu0 0.0
        %1726 = vmatprep.subr.mxu0 0.0
        %1727 = vmatpush1.msra.mxu0 0.0
        %1728 = vmatprep.subr.mxu0 0.0
        %1729 = vmatpush1.msra.mxu0 0.0
        %1730 = vmatprep.subr.mxu0 0.0
        %1731 = vmatpush1.msra.mxu0 0.0
        %1732 = vmatprep.subr.mxu0 0.0
        %1733 = vmatpush1.msra.mxu0 0.0
        %1734 = vmatprep.subr.mxu0 0.0
        %1735 = vmatpush1.msra.mxu0 0.0
        %1736 = vmatprep.subr.mxu0 0.0
        %1737 = vmatpush1.msra.mxu0 0.0
        %1738 = vmatprep.subr.mxu0 0.0
        %1739 = vmatpush1.msra.mxu0 0.0
        %1740 = vmatprep.subr.mxu0 0.0
        %1741 = vmatpush1.msra.mxu0 0.0
        %1742 = vmatprep.subr.mxu0 0.0
        %1743 = vmatpush1.msra.mxu0 0.0
        %1744 = vmatprep.subr.mxu0 0.0
        %1745 = vmatpush1.msra.mxu0 0.0
        %1746 = vmatprep.subr.mxu0 0.0
        %1747 = vmatpush1.msra.mxu0 0.0
        %1748 = vmatprep.subr.mxu0 0.0
        %1749 = vmatpush1.msra.mxu0 0.0
        %1750 = vmatprep.subr.mxu0 0.0
        %1751 = vmatpush1.msra.mxu0 0.0
        %1752 = vmatprep.subr.mxu0 0.0
        %1753 = vmatpush1.msra.mxu0 0.0
        %1754 = vmatprep.subr.mxu0 0.0
        %1755 = vmatpush1.msra.mxu0 0.0
        %1756 = vmatprep.subr.mxu0 0.0
        %1757 = vmatpush1.msra.mxu0 0.0
        %1758 = vmatprep.subr.mxu0 0.0
        %1759 = vmatpush1.msra.mxu0 0.0
        %1760 = vmatprep.subr.mxu0 0.0
        %1761 = vmatpush1.msra.mxu0 0.0
        %1762 = vmatprep.subr.mxu0 0.0
        %1763 = vmatpush1.msra.mxu0 0.0
        %1764 = vmatprep.subr.mxu0 0.0
        %1765 = vmatpush1.msra.mxu0 0.0
        %1766 = vmatprep.subr.mxu0 0.0
        %1767 = vmatpush1.msra.mxu0 0.0
        %1768 = vmatprep.subr.mxu0 0.0
        %1769 = vmatpush1.msra.mxu0 0.0
        %1770 = vmatprep.subr.mxu0 0.0
        %1771 = vmatpush1.msra.mxu0 0.0
        %1772 = vmatprep.subr.mxu0 0.0
        %1773 = vmatpush1.msra.mxu0 0.0
        %1774 = vmatprep.subr.mxu0 0.0
        %1775 = vmatpush1.msra.mxu0 0.0
        %1776 = vmatprep.subr.mxu0 0.0
        %1777 = vmatpush1.msra.mxu0 0.0
        %1778 = vmatprep.mubr.f32.mxu0 0.0
        %1779 = vmatmul.mubr.f32.gmra.mrb[0].mxu0 %v1712
        %v1780 = vpop.f32.mrb[0].mxu0
        %v1781 = vadd.f32 %v1707, %v1780
        %v1782 = vpop.f32.mrb[0].mxu0
        %v1783 = vadd.f32 %v1709, %v1782
        %1784 = vdwg.mxu0
        %1785 = vrot.lane.b32.xlu0 %v1453, 15
        %v1786 = vpop.permute.xlu0 %1785
        %1787 = vrot.lane.b32.xlu0 %v1454, 15
        %v1788 = vpop.permute.xlu0 %1787
        %v1789 = vsel %vm657, %v1786, %v1788
        %v1790 = vsel %vm657, %v1788, %v1786
        %v1791 = vmul.f32 %v666, %v1790
        %v1792 = vmul.f32 %v670, %v1789
        %s1793 = scalar_lea.vmem %s6, 4
        %v1794 = vld [vmem:[%s1793] sm:$0x3]
        %v1796 = vsel %vm491, %v1794, 0
        %v1799 = vsel %vm495, %v1791, 0
        %v1802 = vsel %vm495, %v1792, 0
        %1804 = vmatprep.subr.mxu0 %v1802
        %1805 = vmatpush1.msra.mxu0 %v1799
        %1806 = vmatprep.subr.mxu0 0.0
        %1807 = vmatpush1.msra.mxu0 0.0
        %1808 = vmatprep.subr.mxu0 0.0
        %1809 = vmatpush1.msra.mxu0 0.0
        %1810 = vmatprep.subr.mxu0 0.0
        %1811 = vmatpush1.msra.mxu0 0.0
        %1812 = vmatprep.subr.mxu0 0.0
        %1813 = vmatpush1.msra.mxu0 0.0
        %1814 = vmatprep.subr.mxu0 0.0
        %1815 = vmatpush1.msra.mxu0 0.0
        %1816 = vmatprep.subr.mxu0 0.0
        %1817 = vmatpush1.msra.mxu0 0.0
        %1818 = vmatprep.subr.mxu0 0.0
        %1819 = vmatpush1.msra.mxu0 0.0
        %1820 = vmatprep.subr.mxu0 0.0
        %1821 = vmatpush1.msra.mxu0 0.0
        %1822 = vmatprep.subr.mxu0 0.0
        %1823 = vmatpush1.msra.mxu0 0.0
        %1824 = vmatprep.subr.mxu0 0.0
        %1825 = vmatpush1.msra.mxu0 0.0
        %1826 = vmatprep.subr.mxu0 0.0
        %1827 = vmatpush1.msra.mxu0 0.0
        %1828 = vmatprep.subr.mxu0 0.0
        %1829 = vmatpush1.msra.mxu0 0.0
        %1830 = vmatprep.subr.mxu0 0.0
        %1831 = vmatpush1.msra.mxu0 0.0
        %1832 = vmatprep.subr.mxu0 0.0
        %1833 = vmatpush1.msra.mxu0 0.0
        %1834 = vmatprep.subr.mxu0 0.0
        %1835 = vmatpush1.msra.mxu0 0.0
        %1836 = vmatprep.subr.mxu0 0.0
        %1837 = vmatpush1.msra.mxu0 0.0
        %1838 = vmatprep.subr.mxu0 0.0
        %1839 = vmatpush1.msra.mxu0 0.0
        %1840 = vmatprep.subr.mxu0 0.0
        %1841 = vmatpush1.msra.mxu0 0.0
        %1842 = vmatprep.subr.mxu0 0.0
        %1843 = vmatpush1.msra.mxu0 0.0
        %1844 = vmatprep.subr.mxu0 0.0
        %1845 = vmatpush1.msra.mxu0 0.0
        %1846 = vmatprep.subr.mxu0 0.0
        %1847 = vmatpush1.msra.mxu0 0.0
        %1848 = vmatprep.subr.mxu0 0.0
        %1849 = vmatpush1.msra.mxu0 0.0
        %1850 = vmatprep.subr.mxu0 0.0
        %1851 = vmatpush1.msra.mxu0 0.0
        %1852 = vmatprep.subr.mxu0 0.0
        %1853 = vmatpush1.msra.mxu0 0.0
        %1854 = vmatprep.subr.mxu0 0.0
        %1855 = vmatpush1.msra.mxu0 0.0
        %1856 = vmatprep.subr.mxu0 0.0
        %1857 = vmatpush1.msra.mxu0 0.0
        %1858 = vmatprep.subr.mxu0 0.0
        %1859 = vmatpush1.msra.mxu0 0.0
        %1860 = vmatprep.subr.mxu0 0.0
        %1861 = vmatpush1.msra.mxu0 0.0
        %1862 = vmatprep.subr.mxu0 0.0
        %1863 = vmatpush1.msra.mxu0 0.0
        %1864 = vmatprep.subr.mxu0 0.0
        %1865 = vmatpush1.msra.mxu0 0.0
        %1866 = vmatprep.subr.mxu0 0.0
        %1867 = vmatpush1.msra.mxu0 0.0
        %1868 = vmatprep.mubr.f32.mxu0 0.0
        %1869 = vmatmul.mubr.f32.gmra.mrb[0].mxu0 %v1796
        %v1870 = vpop.f32.mrb[0].mxu0
        %v1871 = vadd.f32 0.0, %v1870
        %v1872 = vpop.f32.mrb[0].mxu0
        %v1873 = vadd.f32 0.0, %v1872
        %1874 = vdwg.mxu0
        %v1875 = vadd.f32 %v1631, %v1871
        %v1876 = vadd.f32 %v1633, %v1873
        %s1877 = scalar_lea.vmem %s8, 4
        %v1878 = vld [vmem:[%s1877] sm:$0x3]
        %v1880 = vsel %vm491, %v1878, 0
        %1882 = vmatprep.subr.mxu0 %v1802
        %1883 = vmatpush1.msra.mxu0 %v1799
        %1884 = vmatprep.subr.mxu0 0.0
        %1885 = vmatpush1.msra.mxu0 0.0
        %1886 = vmatprep.subr.mxu0 0.0
        %1887 = vmatpush1.msra.mxu0 0.0
        %1888 = vmatprep.subr.mxu0 0.0
        %1889 = vmatpush1.msra.mxu0 0.0
        %1890 = vmatprep.subr.mxu0 0.0
        %1891 = vmatpush1.msra.mxu0 0.0
        %1892 = vmatprep.subr.mxu0 0.0
        %1893 = vmatpush1.msra.mxu0 0.0
        %1894 = vmatprep.subr.mxu0 0.0
        %1895 = vmatpush1.msra.mxu0 0.0
        %1896 = vmatprep.subr.mxu0 0.0
        %1897 = vmatpush1.msra.mxu0 0.0
        %1898 = vmatprep.subr.mxu0 0.0
        %1899 = vmatpush1.msra.mxu0 0.0
        %1900 = vmatprep.subr.mxu0 0.0
        %1901 = vmatpush1.msra.mxu0 0.0
        %1902 = vmatprep.subr.mxu0 0.0
        %1903 = vmatpush1.msra.mxu0 0.0
        %1904 = vmatprep.subr.mxu0 0.0
        %1905 = vmatpush1.msra.mxu0 0.0
        %1906 = vmatprep.subr.mxu0 0.0
        %1907 = vmatpush1.msra.mxu0 0.0
        %1908 = vmatprep.subr.mxu0 0.0
        %1909 = vmatpush1.msra.mxu0 0.0
        %1910 = vmatprep.subr.mxu0 0.0
        %1911 = vmatpush1.msra.mxu0 0.0
        %1912 = vmatprep.subr.mxu0 0.0
        %1913 = vmatpush1.msra.mxu0 0.0
        %1914 = vmatprep.subr.mxu0 0.0
        %1915 = vmatpush1.msra.mxu0 0.0
        %1916 = vmatprep.subr.mxu0 0.0
        %1917 = vmatpush1.msra.mxu0 0.0
        %1918 = vmatprep.subr.mxu0 0.0
        %1919 = vmatpush1.msra.mxu0 0.0
        %1920 = vmatprep.subr.mxu0 0.0
        %1921 = vmatpush1.msra.mxu0 0.0
        %1922 = vmatprep.subr.mxu0 0.0
        %1923 = vmatpush1.msra.mxu0 0.0
        %1924 = vmatprep.subr.mxu0 0.0
        %1925 = vmatpush1.msra.mxu0 0.0
        %1926 = vmatprep.subr.mxu0 0.0
        %1927 = vmatpush1.msra.mxu0 0.0
        %1928 = vmatprep.subr.mxu0 0.0
        %1929 = vmatpush1.msra.mxu0 0.0
        %1930 = vmatprep.subr.mxu0 0.0
        %1931 = vmatpush1.msra.mxu0 0.0
        %1932 = vmatprep.subr.mxu0 0.0
        %1933 = vmatpush1.msra.mxu0 0.0
        %1934 = vmatprep.subr.mxu0 0.0
        %1935 = vmatpush1.msra.mxu0 0.0
        %1936 = vmatprep.subr.mxu0 0.0
        %1937 = vmatpush1.msra.mxu0 0.0
        %1938 = vmatprep.subr.mxu0 0.0
        %1939 = vmatpush1.msra.mxu0 0.0
        %1940 = vmatprep.subr.mxu0 0.0
        %1941 = vmatpush1.msra.mxu0 0.0
        %1942 = vmatprep.subr.mxu0 0.0
        %1943 = vmatpush1.msra.mxu0 0.0
        %1944 = vmatprep.subr.mxu0 0.0
        %1945 = vmatpush1.msra.mxu0 0.0
        %1946 = vmatprep.mubr.f32.mxu0 0.0
        %1947 = vmatmul.mubr.f32.gmra.mrb[0].mxu0 %v1880
        %v1948 = vpop.f32.mrb[0].mxu0
        %v1949 = vadd.f32 0.0, %v1948
        %v1950 = vpop.f32.mrb[0].mxu0
        %v1951 = vadd.f32 0.0, %v1950
        %1952 = vdwg.mxu0
        %v1953 = vadd.f32 %v1781, %v1949
        %v1954 = vadd.f32 %v1783, %v1951
        %1955 = vrot.lane.b32.xlu0 %v1453, 1
        %v1956 = vpop.permute.xlu0 %1955
        %1957 = vrot.lane.b32.xlu0 %v1454, 1
        %v1958 = vpop.permute.xlu0 %1957
        %v1959 = vsel %vm763, %v1956, %v1958
        %v1960 = vsel %vm763, %v1958, %v1956
        %v1961 = vmul.f32 %v772, %v1960
        %v1962 = vmul.f32 %v776, %v1959
        %s1963 = scalar_lea.vmem %s6, 6
        %v1964 = vld [vmem:[%s1963] sm:$0x3]
        %v1966 = vsel %vm491, %v1964, 0
        %v1969 = vsel %vm495, %v1961, 0
        %v1972 = vsel %vm495, %v1962, 0
        %1974 = vmatprep.subr.mxu0 %v1972
        %1975 = vmatpush1.msra.mxu0 %v1969
        %1976 = vmatprep.subr.mxu0 0.0
        %1977 = vmatpush1.msra.mxu0 0.0
        %1978 = vmatprep.subr.mxu0 0.0
        %1979 = vmatpush1.msra.mxu0 0.0
        %1980 = vmatprep.subr.mxu0 0.0
        %1981 = vmatpush1.msra.mxu0 0.0
        %1982 = vmatprep.subr.mxu0 0.0
        %1983 = vmatpush1.msra.mxu0 0.0
        %1984 = vmatprep.subr.mxu0 0.0
        %1985 = vmatpush1.msra.mxu0 0.0
        %1986 = vmatprep.subr.mxu0 0.0
        %1987 = vmatpush1.msra.mxu0 0.0
        %1988 = vmatprep.subr.mxu0 0.0
        %1989 = vmatpush1.msra.mxu0 0.0
        %1990 = vmatprep.subr.mxu0 0.0
        %1991 = vmatpush1.msra.mxu0 0.0
        %1992 = vmatprep.subr.mxu0 0.0
        %1993 = vmatpush1.msra.mxu0 0.0
        %1994 = vmatprep.subr.mxu0 0.0
        %1995 = vmatpush1.msra.mxu0 0.0
        %1996 = vmatprep.subr.mxu0 0.0
        %1997 = vmatpush1.msra.mxu0 0.0
        %1998 = vmatprep.subr.mxu0 0.0
        %1999 = vmatpush1.msra.mxu0 0.0
        %2000 = vmatprep.subr.mxu0 0.0
        %2001 = vmatpush1.msra.mxu0 0.0
        %2002 = vmatprep.subr.mxu0 0.0
        %2003 = vmatpush1.msra.mxu0 0.0
        %2004 = vmatprep.subr.mxu0 0.0
        %2005 = vmatpush1.msra.mxu0 0.0
        %2006 = vmatprep.subr.mxu0 0.0
        %2007 = vmatpush1.msra.mxu0 0.0
        %2008 = vmatprep.subr.mxu0 0.0
        %2009 = vmatpush1.msra.mxu0 0.0
        %2010 = vmatprep.subr.mxu0 0.0
        %2011 = vmatpush1.msra.mxu0 0.0
        %2012 = vmatprep.subr.mxu0 0.0
        %2013 = vmatpush1.msra.mxu0 0.0
        %2014 = vmatprep.subr.mxu0 0.0
        %2015 = vmatpush1.msra.mxu0 0.0
        %2016 = vmatprep.subr.mxu0 0.0
        %2017 = vmatpush1.msra.mxu0 0.0
        %2018 = vmatprep.subr.mxu0 0.0
        %2019 = vmatpush1.msra.mxu0 0.0
        %2020 = vmatprep.subr.mxu0 0.0
        %2021 = vmatpush1.msra.mxu0 0.0
        %2022 = vmatprep.subr.mxu0 0.0
        %2023 = vmatpush1.msra.mxu0 0.0
        %2024 = vmatprep.subr.mxu0 0.0
        %2025 = vmatpush1.msra.mxu0 0.0
        %2026 = vmatprep.subr.mxu0 0.0
        %2027 = vmatpush1.msra.mxu0 0.0
        %2028 = vmatprep.subr.mxu0 0.0
        %2029 = vmatpush1.msra.mxu0 0.0
        %2030 = vmatprep.subr.mxu0 0.0
        %2031 = vmatpush1.msra.mxu0 0.0
        %2032 = vmatprep.subr.mxu0 0.0
        %2033 = vmatpush1.msra.mxu0 0.0
        %2034 = vmatprep.subr.mxu0 0.0
        %2035 = vmatpush1.msra.mxu0 0.0
        %2036 = vmatprep.subr.mxu0 0.0
        %2037 = vmatpush1.msra.mxu0 0.0
        %2038 = vmatprep.mubr.f32.mxu0 0.0
        %2039 = vmatmul.mubr.f32.gmra.mrb[0].mxu0 %v1966
        %v2040 = vpop.f32.mrb[0].mxu0
        %v2041 = vadd.f32 0.0, %v2040
        %v2042 = vpop.f32.mrb[0].mxu0
        %v2043 = vadd.f32 0.0, %v2042
        %2044 = vdwg.mxu0
        %v2045 = vadd.f32 %v1875, %v2041
        %v2046 = vadd.f32 %v1876, %v2043
        %s2047 = scalar_lea.vmem %s8, 6
        %v2048 = vld [vmem:[%s2047] sm:$0x3]
        %v2050 = vsel %vm491, %v2048, 0
        %2052 = vmatprep.subr.mxu0 %v1972
        %2053 = vmatpush1.msra.mxu0 %v1969
        %2054 = vmatprep.subr.mxu0 0.0
        %2055 = vmatpush1.msra.mxu0 0.0
        %2056 = vmatprep.subr.mxu0 0.0
        %2057 = vmatpush1.msra.mxu0 0.0
        %2058 = vmatprep.subr.mxu0 0.0
        %2059 = vmatpush1.msra.mxu0 0.0
        %2060 = vmatprep.subr.mxu0 0.0
        %2061 = vmatpush1.msra.mxu0 0.0
        %2062 = vmatprep.subr.mxu0 0.0
        %2063 = vmatpush1.msra.mxu0 0.0
        %2064 = vmatprep.subr.mxu0 0.0
        %2065 = vmatpush1.msra.mxu0 0.0
        %2066 = vmatprep.subr.mxu0 0.0
        %2067 = vmatpush1.msra.mxu0 0.0
        %2068 = vmatprep.subr.mxu0 0.0
        %2069 = vmatpush1.msra.mxu0 0.0
        %2070 = vmatprep.subr.mxu0 0.0
        %2071 = vmatpush1.msra.mxu0 0.0
        %2072 = vmatprep.subr.mxu0 0.0
        %2073 = vmatpush1.msra.mxu0 0.0
        %2074 = vmatprep.subr.mxu0 0.0
        %2075 = vmatpush1.msra.mxu0 0.0
        %2076 = vmatprep.subr.mxu0 0.0
        %2077 = vmatpush1.msra.mxu0 0.0
        %2078 = vmatprep.subr.mxu0 0.0
        %2079 = vmatpush1.msra.mxu0 0.0
        %2080 = vmatprep.subr.mxu0 0.0
        %2081 = vmatpush1.msra.mxu0 0.0
        %2082 = vmatprep.subr.mxu0 0.0
        %2083 = vmatpush1.msra.mxu0 0.0
        %2084 = vmatprep.subr.mxu0 0.0
        %2085 = vmatpush1.msra.mxu0 0.0
        %2086 = vmatprep.subr.mxu0 0.0
        %2087 = vmatpush1.msra.mxu0 0.0
        %2088 = vmatprep.subr.mxu0 0.0
        %2089 = vmatpush1.msra.mxu0 0.0
        %2090 = vmatprep.subr.mxu0 0.0
        %2091 = vmatpush1.msra.mxu0 0.0
        %2092 = vmatprep.subr.mxu0 0.0
        %2093 = vmatpush1.msra.mxu0 0.0
        %2094 = vmatprep.subr.mxu0 0.0
        %2095 = vmatpush1.msra.mxu0 0.0
        %2096 = vmatprep.subr.mxu0 0.0
        %2097 = vmatpush1.msra.mxu0 0.0
        %2098 = vmatprep.subr.mxu0 0.0
        %2099 = vmatpush1.msra.mxu0 0.0
        %2100 = vmatprep.subr.mxu0 0.0
        %2101 = vmatpush1.msra.mxu0 0.0
        %2102 = vmatprep.subr.mxu0 0.0
        %2103 = vmatpush1.msra.mxu0 0.0
        %2104 = vmatprep.subr.mxu0 0.0
        %2105 = vmatpush1.msra.mxu0 0.0
        %2106 = vmatprep.subr.mxu0 0.0
        %2107 = vmatpush1.msra.mxu0 0.0
        %2108 = vmatprep.subr.mxu0 0.0
        %2109 = vmatpush1.msra.mxu0 0.0
        %2110 = vmatprep.subr.mxu0 0.0
        %2111 = vmatpush1.msra.mxu0 0.0
        %2112 = vmatprep.subr.mxu0 0.0
        %2113 = vmatpush1.msra.mxu0 0.0
        %2114 = vmatprep.subr.mxu0 0.0
        %2115 = vmatpush1.msra.mxu0 0.0
        %2116 = vmatprep.mubr.f32.mxu0 0.0
        %2117 = vmatmul.mubr.f32.gmra.mrb[0].mxu0 %v2050
        %v2118 = vpop.f32.mrb[0].mxu0
        %v2119 = vadd.f32 0.0, %v2118
        %v2120 = vpop.f32.mrb[0].mxu0
        %v2121 = vadd.f32 0.0, %v2120
        %2122 = vdwg.mxu0
        %v2123 = vadd.f32 %v1953, %v2119
        %v2124 = vadd.f32 %v1954, %v2121
        %s2125 = scalar_lea.vmem %s6, 8
        %v2126 = vld [vmem:[%s2125] sm:$0x3]
        %v2128 = vsel %vm491, %v2126, 0
        %v2131 = vsel %vm495, %v1453, 0
        %v2134 = vsel %vm495, %v1454, 0
        %2136 = vmatprep.subr.mxu0 %v2134
        %2137 = vmatpush1.msra.mxu0 %v2131
        %2138 = vmatprep.subr.mxu0 0.0
        %2139 = vmatpush1.msra.mxu0 0.0
        %2140 = vmatprep.subr.mxu0 0.0
        %2141 = vmatpush1.msra.mxu0 0.0
        %2142 = vmatprep.subr.mxu0 0.0
        %2143 = vmatpush1.msra.mxu0 0.0
        %2144 = vmatprep.subr.mxu0 0.0
        %2145 = vmatpush1.msra.mxu0 0.0
        %2146 = vmatprep.subr.mxu0 0.0
        %2147 = vmatpush1.msra.mxu0 0.0
        %2148 = vmatprep.subr.mxu0 0.0
        %2149 = vmatpush1.msra.mxu0 0.0
        %2150 = vmatprep.subr.mxu0 0.0
        %2151 = vmatpush1.msra.mxu0 0.0
        %2152 = vmatprep.subr.mxu0 0.0
        %2153 = vmatpush1.msra.mxu0 0.0
        %2154 = vmatprep.subr.mxu0 0.0
        %2155 = vmatpush1.msra.mxu0 0.0
        %2156 = vmatprep.subr.mxu0 0.0
        %2157 = vmatpush1.msra.mxu0 0.0
        %2158 = vmatprep.subr.mxu0 0.0
        %2159 = vmatpush1.msra.mxu0 0.0
        %2160 = vmatprep.subr.mxu0 0.0
        %2161 = vmatpush1.msra.mxu0 0.0
        %2162 = vmatprep.subr.mxu0 0.0
        %2163 = vmatpush1.msra.mxu0 0.0
        %2164 = vmatprep.subr.mxu0 0.0
        %2165 = vmatpush1.msra.mxu0 0.0
        %2166 = vmatprep.subr.mxu0 0.0
        %2167 = vmatpush1.msra.mxu0 0.0
        %2168 = vmatprep.subr.mxu0 0.0
        %2169 = vmatpush1.msra.mxu0 0.0
        %2170 = vmatprep.subr.mxu0 0.0
        %2171 = vmatpush1.msra.mxu0 0.0
        %2172 = vmatprep.subr.mxu0 0.0
        %2173 = vmatpush1.msra.mxu0 0.0
        %2174 = vmatprep.subr.mxu0 0.0
        %2175 = vmatpush1.msra.mxu0 0.0
        %2176 = vmatprep.subr.mxu0 0.0
        %2177 = vmatpush1.msra.mxu0 0.0
        %2178 = vmatprep.subr.mxu0 0.0
        %2179 = vmatpush1.msra.mxu0 0.0
        %2180 = vmatprep.subr.mxu0 0.0
        %2181 = vmatpush1.msra.mxu0 0.0
        %2182 = vmatprep.subr.mxu0 0.0
        %2183 = vmatpush1.msra.mxu0 0.0
        %2184 = vmatprep.subr.mxu0 0.0
        %2185 = vmatpush1.msra.mxu0 0.0
        %2186 = vmatprep.subr.mxu0 0.0
        %2187 = vmatpush1.msra.mxu0 0.0
        %2188 = vmatprep.subr.mxu0 0.0
        %2189 = vmatpush1.msra.mxu0 0.0
        %2190 = vmatprep.subr.mxu0 0.0
        %2191 = vmatpush1.msra.mxu0 0.0
        %2192 = vmatprep.subr.mxu0 0.0
        %2193 = vmatpush1.msra.mxu0 0.0
        %2194 = vmatprep.subr.mxu0 0.0
        %2195 = vmatpush1.msra.mxu0 0.0
        %2196 = vmatprep.subr.mxu0 0.0
        %2197 = vmatpush1.msra.mxu0 0.0
        %2198 = vmatprep.subr.mxu0 0.0
        %2199 = vmatpush1.msra.mxu0 0.0
        %2200 = vmatprep.mubr.f32.mxu0 0.0
        %2201 = vmatmul.mubr.f32.gmra.mrb[0].mxu0 %v2128
        %v2202 = vpop.f32.mrb[0].mxu0
        %v2203 = vadd.f32 0.0, %v2202
        %v2204 = vpop.f32.mrb[0].mxu0
        %v2205 = vadd.f32 0.0, %v2204
        %2206 = vdwg.mxu0
        %v2207 = vadd.f32 %v2045, %v2203
        %v2208 = vadd.f32 %v2046, %v2205
        %s2209 = scalar_lea.vmem %s8, 8
        %v2210 = vld [vmem:[%s2209] sm:$0x3]
        %v2212 = vsel %vm491, %v2210, 0
        %2214 = vmatprep.subr.mxu0 %v2134
        %2215 = vmatpush1.msra.mxu0 %v2131
        %2216 = vmatprep.subr.mxu0 0.0
        %2217 = vmatpush1.msra.mxu0 0.0
        %2218 = vmatprep.subr.mxu0 0.0
        %2219 = vmatpush1.msra.mxu0 0.0
        %2220 = vmatprep.subr.mxu0 0.0
        %2221 = vmatpush1.msra.mxu0 0.0
        %2222 = vmatprep.subr.mxu0 0.0
        %2223 = vmatpush1.msra.mxu0 0.0
        %2224 = vmatprep.subr.mxu0 0.0
        %2225 = vmatpush1.msra.mxu0 0.0
        %2226 = vmatprep.subr.mxu0 0.0
        %2227 = vmatpush1.msra.mxu0 0.0
        %2228 = vmatprep.subr.mxu0 0.0
        %2229 = vmatpush1.msra.mxu0 0.0
        %2230 = vmatprep.subr.mxu0 0.0
        %2231 = vmatpush1.msra.mxu0 0.0
        %2232 = vmatprep.subr.mxu0 0.0
        %2233 = vmatpush1.msra.mxu0 0.0
        %2234 = vmatprep.subr.mxu0 0.0
        %2235 = vmatpush1.msra.mxu0 0.0
        %2236 = vmatprep.subr.mxu0 0.0
        %2237 = vmatpush1.msra.mxu0 0.0
        %2238 = vmatprep.subr.mxu0 0.0
        %2239 = vmatpush1.msra.mxu0 0.0
        %2240 = vmatprep.subr.mxu0 0.0
        %2241 = vmatpush1.msra.mxu0 0.0
        %2242 = vmatprep.subr.mxu0 0.0
        %2243 = vmatpush1.msra.mxu0 0.0
        %2244 = vmatprep.subr.mxu0 0.0
        %2245 = vmatpush1.msra.mxu0 0.0
        %2246 = vmatprep.subr.mxu0 0.0
        %2247 = vmatpush1.msra.mxu0 0.0
        %2248 = vmatprep.subr.mxu0 0.0
        %2249 = vmatpush1.msra.mxu0 0.0
        %2250 = vmatprep.subr.mxu0 0.0
        %2251 = vmatpush1.msra.mxu0 0.0
        %2252 = vmatprep.subr.mxu0 0.0
        %2253 = vmatpush1.msra.mxu0 0.0
        %2254 = vmatprep.subr.mxu0 0.0
        %2255 = vmatpush1.msra.mxu0 0.0
        %2256 = vmatprep.subr.mxu0 0.0
        %2257 = vmatpush1.msra.mxu0 0.0
        %2258 = vmatprep.subr.mxu0 0.0
        %2259 = vmatpush1.msra.mxu0 0.0
        %2260 = vmatprep.subr.mxu0 0.0
        %2261 = vmatpush1.msra.mxu0 0.0
        %2262 = vmatprep.subr.mxu0 0.0
        %2263 = vmatpush1.msra.mxu0 0.0
        %2264 = vmatprep.subr.mxu0 0.0
        %2265 = vmatpush1.msra.mxu0 0.0
        %2266 = vmatprep.subr.mxu0 0.0
        %2267 = vmatpush1.msra.mxu0 0.0
        %2268 = vmatprep.subr.mxu0 0.0
        %2269 = vmatpush1.msra.mxu0 0.0
        %2270 = vmatprep.subr.mxu0 0.0
        %2271 = vmatpush1.msra.mxu0 0.0
        %2272 = vmatprep.subr.mxu0 0.0
        %2273 = vmatpush1.msra.mxu0 0.0
        %2274 = vmatprep.subr.mxu0 0.0
        %2275 = vmatpush1.msra.mxu0 0.0
        %2276 = vmatprep.subr.mxu0 0.0
        %2277 = vmatpush1.msra.mxu0 0.0
        %2278 = vmatprep.mubr.f32.mxu0 0.0
        %2279 = vmatmul.mubr.f32.gmra.mrb[0].mxu0 %v2212
        %v2280 = vpop.f32.mrb[0].mxu0
        %v2281 = vadd.f32 0.0, %v2280
        %v2282 = vpop.f32.mrb[0].mxu0
        %v2283 = vadd.f32 0.0, %v2282
        %2284 = vdwg.mxu0
        %v2285 = vadd.f32 %v2123, %v2281
        %v2286 = vadd.f32 %v2124, %v2283
        %2287 = vrot.lane.b32.xlu0 %v1453, 127
        %v2288 = vpop.permute.xlu0 %2287
        %2289 = vrot.lane.b32.xlu0 %v1454, 127
        %v2290 = vpop.permute.xlu0 %2289
        %v2291 = vsel %vm953, %v2288, %v2290
        %v2292 = vsel %vm953, %v2290, %v2288
        %v2293 = vmul.f32 %v962, %v2291
        %v2294 = vmul.f32 %v966, %v2292
        %s2295 = scalar_lea.vmem %s6, 10
        %v2296 = vld [vmem:[%s2295] sm:$0x3]
        %v2298 = vsel %vm491, %v2296, 0
        %v2301 = vsel %vm495, %v2293, 0
        %v2304 = vsel %vm495, %v2294, 0
        %2306 = vmatprep.subr.mxu0 %v2304
        %2307 = vmatpush1.msra.mxu0 %v2301
        %2308 = vmatprep.subr.mxu0 0.0
        %2309 = vmatpush1.msra.mxu0 0.0
        %2310 = vmatprep.subr.mxu0 0.0
        %2311 = vmatpush1.msra.mxu0 0.0
        %2312 = vmatprep.subr.mxu0 0.0
        %2313 = vmatpush1.msra.mxu0 0.0
        %2314 = vmatprep.subr.mxu0 0.0
        %2315 = vmatpush1.msra.mxu0 0.0
        %2316 = vmatprep.subr.mxu0 0.0
        %2317 = vmatpush1.msra.mxu0 0.0
        %2318 = vmatprep.subr.mxu0 0.0
        %2319 = vmatpush1.msra.mxu0 0.0
        %2320 = vmatprep.subr.mxu0 0.0
        %2321 = vmatpush1.msra.mxu0 0.0
        %2322 = vmatprep.subr.mxu0 0.0
        %2323 = vmatpush1.msra.mxu0 0.0
        %2324 = vmatprep.subr.mxu0 0.0
        %2325 = vmatpush1.msra.mxu0 0.0
        %2326 = vmatprep.subr.mxu0 0.0
        %2327 = vmatpush1.msra.mxu0 0.0
        %2328 = vmatprep.subr.mxu0 0.0
        %2329 = vmatpush1.msra.mxu0 0.0
        %2330 = vmatprep.subr.mxu0 0.0
        %2331 = vmatpush1.msra.mxu0 0.0
        %2332 = vmatprep.subr.mxu0 0.0
        %2333 = vmatpush1.msra.mxu0 0.0
        %2334 = vmatprep.subr.mxu0 0.0
        %2335 = vmatpush1.msra.mxu0 0.0
        %2336 = vmatprep.subr.mxu0 0.0
        %2337 = vmatpush1.msra.mxu0 0.0
        %2338 = vmatprep.subr.mxu0 0.0
        %2339 = vmatpush1.msra.mxu0 0.0
        %2340 = vmatprep.subr.mxu0 0.0
        %2341 = vmatpush1.msra.mxu0 0.0
        %2342 = vmatprep.subr.mxu0 0.0
        %2343 = vmatpush1.msra.mxu0 0.0
        %2344 = vmatprep.subr.mxu0 0.0
        %2345 = vmatpush1.msra.mxu0 0.0
        %2346 = vmatprep.subr.mxu0 0.0
        %2347 = vmatpush1.msra.mxu0 0.0
        %2348 = vmatprep.subr.mxu0 0.0
        %2349 = vmatpush1.msra.mxu0 0.0
        %2350 = vmatprep.subr.mxu0 0.0
        %2351 = vmatpush1.msra.mxu0 0.0
        %2352 = vmatprep.subr.mxu0 0.0
        %2353 = vmatpush1.msra.mxu0 0.0
        %2354 = vmatprep.subr.mxu0 0.0
        %2355 = vmatpush1.msra.mxu0 0.0
        %2356 = vmatprep.subr.mxu0 0.0
        %2357 = vmatpush1.msra.mxu0 0.0
        %2358 = vmatprep.subr.mxu0 0.0
        %2359 = vmatpush1.msra.mxu0 0.0
        %2360 = vmatprep.subr.mxu0 0.0
        %2361 = vmatpush1.msra.mxu0 0.0
        %2362 = vmatprep.subr.mxu0 0.0
        %2363 = vmatpush1.msra.mxu0 0.0
        %2364 = vmatprep.subr.mxu0 0.0
        %2365 = vmatpush1.msra.mxu0 0.0
        %2366 = vmatprep.subr.mxu0 0.0
        %2367 = vmatpush1.msra.mxu0 0.0
        %2368 = vmatprep.subr.mxu0 0.0
        %2369 = vmatpush1.msra.mxu0 0.0
        %2370 = vmatprep.mubr.f32.mxu0 0.0
        %2371 = vmatmul.mubr.f32.gmra.mrb[0].mxu0 %v2298
        %v2372 = vpop.f32.mrb[0].mxu0
        %v2373 = vadd.f32 0.0, %v2372
        %v2374 = vpop.f32.mrb[0].mxu0
        %v2375 = vadd.f32 0.0, %v2374
        %2376 = vdwg.mxu0
        %v2377 = vadd.f32 %v2207, %v2373
        %v2378 = vadd.f32 %v2208, %v2375
        %s2379 = scalar_lea.vmem %s8, 10
        %v2380 = vld [vmem:[%s2379] sm:$0x3]
        %v2382 = vsel %vm491, %v2380, 0
        %2384 = vmatprep.subr.mxu0 %v2304
        %2385 = vmatpush1.msra.mxu0 %v2301
        %2386 = vmatprep.subr.mxu0 0.0
        %2387 = vmatpush1.msra.mxu0 0.0
        %2388 = vmatprep.subr.mxu0 0.0
        %2389 = vmatpush1.msra.mxu0 0.0
        %2390 = vmatprep.subr.mxu0 0.0
        %2391 = vmatpush1.msra.mxu0 0.0
        %2392 = vmatprep.subr.mxu0 0.0
        %2393 = vmatpush1.msra.mxu0 0.0
        %2394 = vmatprep.subr.mxu0 0.0
        %2395 = vmatpush1.msra.mxu0 0.0
        %2396 = vmatprep.subr.mxu0 0.0
        %2397 = vmatpush1.msra.mxu0 0.0
        %2398 = vmatprep.subr.mxu0 0.0
        %2399 = vmatpush1.msra.mxu0 0.0
        %2400 = vmatprep.subr.mxu0 0.0
        %2401 = vmatpush1.msra.mxu0 0.0
        %2402 = vmatprep.subr.mxu0 0.0
        %2403 = vmatpush1.msra.mxu0 0.0
        %2404 = vmatprep.subr.mxu0 0.0
        %2405 = vmatpush1.msra.mxu0 0.0
        %2406 = vmatprep.subr.mxu0 0.0
        %2407 = vmatpush1.msra.mxu0 0.0
        %2408 = vmatprep.subr.mxu0 0.0
        %2409 = vmatpush1.msra.mxu0 0.0
        %2410 = vmatprep.subr.mxu0 0.0
        %2411 = vmatpush1.msra.mxu0 0.0
        %2412 = vmatprep.subr.mxu0 0.0
        %2413 = vmatpush1.msra.mxu0 0.0
        %2414 = vmatprep.subr.mxu0 0.0
        %2415 = vmatpush1.msra.mxu0 0.0
        %2416 = vmatprep.subr.mxu0 0.0
        %2417 = vmatpush1.msra.mxu0 0.0
        %2418 = vmatprep.subr.mxu0 0.0
        %2419 = vmatpush1.msra.mxu0 0.0
        %2420 = vmatprep.subr.mxu0 0.0
        %2421 = vmatpush1.msra.mxu0 0.0
        %2422 = vmatprep.subr.mxu0 0.0
        %2423 = vmatpush1.msra.mxu0 0.0
        %2424 = vmatprep.subr.mxu0 0.0
        %2425 = vmatpush1.msra.mxu0 0.0
        %2426 = vmatprep.subr.mxu0 0.0
        %2427 = vmatpush1.msra.mxu0 0.0
        %2428 = vmatprep.subr.mxu0 0.0
        %2429 = vmatpush1.msra.mxu0 0.0
        %2430 = vmatprep.subr.mxu0 0.0
        %2431 = vmatpush1.msra.mxu0 0.0
        %2432 = vmatprep.subr.mxu0 0.0
        %2433 = vmatpush1.msra.mxu0 0.0
        %2434 = vmatprep.subr.mxu0 0.0
        %2435 = vmatpush1.msra.mxu0 0.0
        %2436 = vmatprep.subr.mxu0 0.0
        %2437 = vmatpush1.msra.mxu0 0.0
        %2438 = vmatprep.subr.mxu0 0.0
        %2439 = vmatpush1.msra.mxu0 0.0
        %2440 = vmatprep.subr.mxu0 0.0
        %2441 = vmatpush1.msra.mxu0 0.0
        %2442 = vmatprep.subr.mxu0 0.0
        %2443 = vmatpush1.msra.mxu0 0.0
        %2444 = vmatprep.subr.mxu0 0.0
        %2445 = vmatpush1.msra.mxu0 0.0
        %2446 = vmatprep.subr.mxu0 0.0
        %2447 = vmatpush1.msra.mxu0 0.0
        %2448 = vmatprep.mubr.f32.mxu0 0.0
        %2449 = vmatmul.mubr.f32.gmra.mrb[0].mxu0 %v2382
        %v2450 = vpop.f32.mrb[0].mxu0
        %v2451 = vadd.f32 0.0, %v2450
        %v2452 = vpop.f32.mrb[0].mxu0
        %v2453 = vadd.f32 0.0, %v2452
        %2454 = vdwg.mxu0
        %v2455 = vadd.f32 %v2285, %v2451
        %v2456 = vadd.f32 %v2286, %v2453
        %2457 = vrot.lane.b32.xlu0 %v1453, 113
        %v2458 = vpop.permute.xlu0 %2457
        %2459 = vrot.lane.b32.xlu0 %v1454, 113
        %v2460 = vpop.permute.xlu0 %2459
        %v2461 = vsel %vm1059, %v2458, %v2460
        %v2462 = vsel %vm1059, %v2460, %v2458
        %v2463 = vmul.f32 %v1068, %v2461
        %v2464 = vmul.f32 %v1072, %v2462
        %s2465 = scalar_lea.vmem %s6, 12
        %v2466 = vld [vmem:[%s2465] sm:$0x3]
        %v2468 = vsel %vm491, %v2466, 0
        %v2471 = vsel %vm495, %v2463, 0
        %v2474 = vsel %vm495, %v2464, 0
        %2476 = vmatprep.subr.mxu0 %v2474
        %2477 = vmatpush1.msra.mxu0 %v2471
        %2478 = vmatprep.subr.mxu0 0.0
        %2479 = vmatpush1.msra.mxu0 0.0
        %2480 = vmatprep.subr.mxu0 0.0
        %2481 = vmatpush1.msra.mxu0 0.0
        %2482 = vmatprep.subr.mxu0 0.0
        %2483 = vmatpush1.msra.mxu0 0.0
        %2484 = vmatprep.subr.mxu0 0.0
        %2485 = vmatpush1.msra.mxu0 0.0
        %2486 = vmatprep.subr.mxu0 0.0
        %2487 = vmatpush1.msra.mxu0 0.0
        %2488 = vmatprep.subr.mxu0 0.0
        %2489 = vmatpush1.msra.mxu0 0.0
        %2490 = vmatprep.subr.mxu0 0.0
        %2491 = vmatpush1.msra.mxu0 0.0
        %2492 = vmatprep.subr.mxu0 0.0
        %2493 = vmatpush1.msra.mxu0 0.0
        %2494 = vmatprep.subr.mxu0 0.0
        %2495 = vmatpush1.msra.mxu0 0.0
        %2496 = vmatprep.subr.mxu0 0.0
        %2497 = vmatpush1.msra.mxu0 0.0
        %2498 = vmatprep.subr.mxu0 0.0
        %2499 = vmatpush1.msra.mxu0 0.0
        %2500 = vmatprep.subr.mxu0 0.0
        %2501 = vmatpush1.msra.mxu0 0.0
        %2502 = vmatprep.subr.mxu0 0.0
        %2503 = vmatpush1.msra.mxu0 0.0
        %2504 = vmatprep.subr.mxu0 0.0
        %2505 = vmatpush1.msra.mxu0 0.0
        %2506 = vmatprep.subr.mxu0 0.0
        %2507 = vmatpush1.msra.mxu0 0.0
        %2508 = vmatprep.subr.mxu0 0.0
        %2509 = vmatpush1.msra.mxu0 0.0
        %2510 = vmatprep.subr.mxu0 0.0
        %2511 = vmatpush1.msra.mxu0 0.0
        %2512 = vmatprep.subr.mxu0 0.0
        %2513 = vmatpush1.msra.mxu0 0.0
        %2514 = vmatprep.subr.mxu0 0.0
        %2515 = vmatpush1.msra.mxu0 0.0
        %2516 = vmatprep.subr.mxu0 0.0
        %2517 = vmatpush1.msra.mxu0 0.0
        %2518 = vmatprep.subr.mxu0 0.0
        %2519 = vmatpush1.msra.mxu0 0.0
        %2520 = vmatprep.subr.mxu0 0.0
        %2521 = vmatpush1.msra.mxu0 0.0
        %2522 = vmatprep.subr.mxu0 0.0
        %2523 = vmatpush1.msra.mxu0 0.0
        %2524 = vmatprep.subr.mxu0 0.0
        %2525 = vmatpush1.msra.mxu0 0.0
        %2526 = vmatprep.subr.mxu0 0.0
        %2527 = vmatpush1.msra.mxu0 0.0
        %2528 = vmatprep.subr.mxu0 0.0
        %2529 = vmatpush1.msra.mxu0 0.0
        %2530 = vmatprep.subr.mxu0 0.0
        %2531 = vmatpush1.msra.mxu0 0.0
        %2532 = vmatprep.subr.mxu0 0.0
        %2533 = vmatpush1.msra.mxu0 0.0
        %2534 = vmatprep.subr.mxu0 0.0
        %2535 = vmatpush1.msra.mxu0 0.0
        %2536 = vmatprep.subr.mxu0 0.0
        %2537 = vmatpush1.msra.mxu0 0.0
        %2538 = vmatprep.subr.mxu0 0.0
        %2539 = vmatpush1.msra.mxu0 0.0
        %2540 = vmatprep.mubr.f32.mxu0 0.0
        %2541 = vmatmul.mubr.f32.gmra.mrb[0].mxu0 %v2468
        %v2542 = vpop.f32.mrb[0].mxu0
        %v2543 = vadd.f32 0.0, %v2542
        %v2544 = vpop.f32.mrb[0].mxu0
        %v2545 = vadd.f32 0.0, %v2544
        %2546 = vdwg.mxu0
        %v2547 = vadd.f32 %v2377, %v2543
        %v2548 = vadd.f32 %v2378, %v2545
        %s2549 = scalar_lea.vmem %s8, 12
        %v2550 = vld [vmem:[%s2549] sm:$0x3]
        %v2552 = vsel %vm491, %v2550, 0
        %2554 = vmatprep.subr.mxu0 %v2474
        %2555 = vmatpush1.msra.mxu0 %v2471
        %2556 = vmatprep.subr.mxu0 0.0
        %2557 = vmatpush1.msra.mxu0 0.0
        %2558 = vmatprep.subr.mxu0 0.0
        %2559 = vmatpush1.msra.mxu0 0.0
        %2560 = vmatprep.subr.mxu0 0.0
        %2561 = vmatpush1.msra.mxu0 0.0
        %2562 = vmatprep.subr.mxu0 0.0
        %2563 = vmatpush1.msra.mxu0 0.0
        %2564 = vmatprep.subr.mxu0 0.0
        %2565 = vmatpush1.msra.mxu0 0.0
        %2566 = vmatprep.subr.mxu0 0.0
        %2567 = vmatpush1.msra.mxu0 0.0
        %2568 = vmatprep.subr.mxu0 0.0
        %2569 = vmatpush1.msra.mxu0 0.0
        %2570 = vmatprep.subr.mxu0 0.0
        %2571 = vmatpush1.msra.mxu0 0.0
        %2572 = vmatprep.subr.mxu0 0.0
        %2573 = vmatpush1.msra.mxu0 0.0
        %2574 = vmatprep.subr.mxu0 0.0
        %2575 = vmatpush1.msra.mxu0 0.0
        %2576 = vmatprep.subr.mxu0 0.0
        %2577 = vmatpush1.msra.mxu0 0.0
        %2578 = vmatprep.subr.mxu0 0.0
        %2579 = vmatpush1.msra.mxu0 0.0
        %2580 = vmatprep.subr.mxu0 0.0
        %2581 = vmatpush1.msra.mxu0 0.0
        %2582 = vmatprep.subr.mxu0 0.0
        %2583 = vmatpush1.msra.mxu0 0.0
        %2584 = vmatprep.subr.mxu0 0.0
        %2585 = vmatpush1.msra.mxu0 0.0
        %2586 = vmatprep.subr.mxu0 0.0
        %2587 = vmatpush1.msra.mxu0 0.0
        %2588 = vmatprep.subr.mxu0 0.0
        %2589 = vmatpush1.msra.mxu0 0.0
        %2590 = vmatprep.subr.mxu0 0.0
        %2591 = vmatpush1.msra.mxu0 0.0
        %2592 = vmatprep.subr.mxu0 0.0
        %2593 = vmatpush1.msra.mxu0 0.0
        %2594 = vmatprep.subr.mxu0 0.0
        %2595 = vmatpush1.msra.mxu0 0.0
        %2596 = vmatprep.subr.mxu0 0.0
        %2597 = vmatpush1.msra.mxu0 0.0
        %2598 = vmatprep.subr.mxu0 0.0
        %2599 = vmatpush1.msra.mxu0 0.0
        %2600 = vmatprep.subr.mxu0 0.0
        %2601 = vmatpush1.msra.mxu0 0.0
        %2602 = vmatprep.subr.mxu0 0.0
        %2603 = vmatpush1.msra.mxu0 0.0
        %2604 = vmatprep.subr.mxu0 0.0
        %2605 = vmatpush1.msra.mxu0 0.0
        %2606 = vmatprep.subr.mxu0 0.0
        %2607 = vmatpush1.msra.mxu0 0.0
        %2608 = vmatprep.subr.mxu0 0.0
        %2609 = vmatpush1.msra.mxu0 0.0
        %2610 = vmatprep.subr.mxu0 0.0
        %2611 = vmatpush1.msra.mxu0 0.0
        %2612 = vmatprep.subr.mxu0 0.0
        %2613 = vmatpush1.msra.mxu0 0.0
        %2614 = vmatprep.subr.mxu0 0.0
        %2615 = vmatpush1.msra.mxu0 0.0
        %2616 = vmatprep.subr.mxu0 0.0
        %2617 = vmatpush1.msra.mxu0 0.0
        %2618 = vmatprep.mubr.f32.mxu0 0.0
        %2619 = vmatmul.mubr.f32.gmra.mrb[0].mxu0 %v2552
        %v2620 = vpop.f32.mrb[0].mxu0
        %v2621 = vadd.f32 0.0, %v2620
        %v2622 = vpop.f32.mrb[0].mxu0
        %v2623 = vadd.f32 0.0, %v2622
        %2624 = vdwg.mxu0
        %v2625 = vadd.f32 %v2455, %v2621
        %v2626 = vadd.f32 %v2456, %v2623
        %2627 = vrot.lane.b32.xlu0 %v1453, 112
        %v2628 = vpop.permute.xlu0 %2627
        %2629 = vrot.lane.b32.xlu0 %v1454, 112
        %v2630 = vpop.permute.xlu0 %2629
        %v2631 = vsel %vm1165, %v2628, %v2630
        %v2632 = vsel %vm1165, %v2630, %v2628
        %v2633 = vmul.f32 %v1174, %v2631
        %v2634 = vmul.f32 %v1178, %v2632
        %s2635 = scalar_lea.vmem %s6, 14
        %v2636 = vld [vmem:[%s2635] sm:$0x3]
        %v2638 = vsel %vm491, %v2636, 0
        %v2641 = vsel %vm495, %v2633, 0
        %v2644 = vsel %vm495, %v2634, 0
        %2646 = vmatprep.subr.mxu0 %v2644
        %2647 = vmatpush1.msra.mxu0 %v2641
        %2648 = vmatprep.subr.mxu0 0.0
        %2649 = vmatpush1.msra.mxu0 0.0
        %2650 = vmatprep.subr.mxu0 0.0
        %2651 = vmatpush1.msra.mxu0 0.0
        %2652 = vmatprep.subr.mxu0 0.0
        %2653 = vmatpush1.msra.mxu0 0.0
        %2654 = vmatprep.subr.mxu0 0.0
        %2655 = vmatpush1.msra.mxu0 0.0
        %2656 = vmatprep.subr.mxu0 0.0
        %2657 = vmatpush1.msra.mxu0 0.0
        %2658 = vmatprep.subr.mxu0 0.0
        %2659 = vmatpush1.msra.mxu0 0.0
        %2660 = vmatprep.subr.mxu0 0.0
        %2661 = vmatpush1.msra.mxu0 0.0
        %2662 = vmatprep.subr.mxu0 0.0
        %2663 = vmatpush1.msra.mxu0 0.0
        %2664 = vmatprep.subr.mxu0 0.0
        %2665 = vmatpush1.msra.mxu0 0.0
        %2666 = vmatprep.subr.mxu0 0.0
        %2667 = vmatpush1.msra.mxu0 0.0
        %2668 = vmatprep.subr.mxu0 0.0
        %2669 = vmatpush1.msra.mxu0 0.0
        %2670 = vmatprep.subr.mxu0 0.0
        %2671 = vmatpush1.msra.mxu0 0.0
        %2672 = vmatprep.subr.mxu0 0.0
        %2673 = vmatpush1.msra.mxu0 0.0
        %2674 = vmatprep.subr.mxu0 0.0
        %2675 = vmatpush1.msra.mxu0 0.0
        %2676 = vmatprep.subr.mxu0 0.0
        %2677 = vmatpush1.msra.mxu0 0.0
        %2678 = vmatprep.subr.mxu0 0.0
        %2679 = vmatpush1.msra.mxu0 0.0
        %2680 = vmatprep.subr.mxu0 0.0
        %2681 = vmatpush1.msra.mxu0 0.0
        %2682 = vmatprep.subr.mxu0 0.0
        %2683 = vmatpush1.msra.mxu0 0.0
        %2684 = vmatprep.subr.mxu0 0.0
        %2685 = vmatpush1.msra.mxu0 0.0
        %2686 = vmatprep.subr.mxu0 0.0
        %2687 = vmatpush1.msra.mxu0 0.0
        %2688 = vmatprep.subr.mxu0 0.0
        %2689 = vmatpush1.msra.mxu0 0.0
        %2690 = vmatprep.subr.mxu0 0.0
        %2691 = vmatpush1.msra.mxu0 0.0
        %2692 = vmatprep.subr.mxu0 0.0
        %2693 = vmatpush1.msra.mxu0 0.0
        %2694 = vmatprep.subr.mxu0 0.0
        %2695 = vmatpush1.msra.mxu0 0.0
        %2696 = vmatprep.subr.mxu0 0.0
        %2697 = vmatpush1.msra.mxu0 0.0
        %2698 = vmatprep.subr.mxu0 0.0
        %2699 = vmatpush1.msra.mxu0 0.0
        %2700 = vmatprep.subr.mxu0 0.0
        %2701 = vmatpush1.msra.mxu0 0.0
        %2702 = vmatprep.subr.mxu0 0.0
        %2703 = vmatpush1.msra.mxu0 0.0
        %2704 = vmatprep.subr.mxu0 0.0
        %2705 = vmatpush1.msra.mxu0 0.0
        %2706 = vmatprep.subr.mxu0 0.0
        %2707 = vmatpush1.msra.mxu0 0.0
        %2708 = vmatprep.subr.mxu0 0.0
        %2709 = vmatpush1.msra.mxu0 0.0
        %2710 = vmatprep.mubr.f32.mxu0 0.0
        %2711 = vmatmul.mubr.f32.gmra.mrb[0].mxu0 %v2638
        %v2712 = vpop.f32.mrb[0].mxu0
        %v2713 = vadd.f32 0.0, %v2712
        %v2714 = vpop.f32.mrb[0].mxu0
        %v2715 = vadd.f32 0.0, %v2714
        %2716 = vdwg.mxu0
        %v2717 = vadd.f32 %v2547, %v2713
        %v2718 = vadd.f32 %v2548, %v2715
        %s2719 = scalar_lea.vmem %s8, 14
        %v2720 = vld [vmem:[%s2719] sm:$0x3]
        %v2722 = vsel %vm491, %v2720, 0
        %2724 = vmatprep.subr.mxu0 %v2644
        %2725 = vmatpush1.msra.mxu0 %v2641
        %2726 = vmatprep.subr.mxu0 0.0
        %2727 = vmatpush1.msra.mxu0 0.0
        %2728 = vmatprep.subr.mxu0 0.0
        %2729 = vmatpush1.msra.mxu0 0.0
        %2730 = vmatprep.subr.mxu0 0.0
        %2731 = vmatpush1.msra.mxu0 0.0
        %2732 = vmatprep.subr.mxu0 0.0
        %2733 = vmatpush1.msra.mxu0 0.0
        %2734 = vmatprep.subr.mxu0 0.0
        %2735 = vmatpush1.msra.mxu0 0.0
        %2736 = vmatprep.subr.mxu0 0.0
        %2737 = vmatpush1.msra.mxu0 0.0
        %2738 = vmatprep.subr.mxu0 0.0
        %2739 = vmatpush1.msra.mxu0 0.0
        %2740 = vmatprep.subr.mxu0 0.0
        %2741 = vmatpush1.msra.mxu0 0.0
        %2742 = vmatprep.subr.mxu0 0.0
        %2743 = vmatpush1.msra.mxu0 0.0
        %2744 = vmatprep.subr.mxu0 0.0
        %2745 = vmatpush1.msra.mxu0 0.0
        %2746 = vmatprep.subr.mxu0 0.0
        %2747 = vmatpush1.msra.mxu0 0.0
        %2748 = vmatprep.subr.mxu0 0.0
        %2749 = vmatpush1.msra.mxu0 0.0
        %2750 = vmatprep.subr.mxu0 0.0
        %2751 = vmatpush1.msra.mxu0 0.0
        %2752 = vmatprep.subr.mxu0 0.0
        %2753 = vmatpush1.msra.mxu0 0.0
        %2754 = vmatprep.subr.mxu0 0.0
        %2755 = vmatpush1.msra.mxu0 0.0
        %2756 = vmatprep.subr.mxu0 0.0
        %2757 = vmatpush1.msra.mxu0 0.0
        %2758 = vmatprep.subr.mxu0 0.0
        %2759 = vmatpush1.msra.mxu0 0.0
        %2760 = vmatprep.subr.mxu0 0.0
        %2761 = vmatpush1.msra.mxu0 0.0
        %2762 = vmatprep.subr.mxu0 0.0
        %2763 = vmatpush1.msra.mxu0 0.0
        %2764 = vmatprep.subr.mxu0 0.0
        %2765 = vmatpush1.msra.mxu0 0.0
        %2766 = vmatprep.subr.mxu0 0.0
        %2767 = vmatpush1.msra.mxu0 0.0
        %2768 = vmatprep.subr.mxu0 0.0
        %2769 = vmatpush1.msra.mxu0 0.0
        %2770 = vmatprep.subr.mxu0 0.0
        %2771 = vmatpush1.msra.mxu0 0.0
        %2772 = vmatprep.subr.mxu0 0.0
        %2773 = vmatpush1.msra.mxu0 0.0
        %2774 = vmatprep.subr.mxu0 0.0
        %2775 = vmatpush1.msra.mxu0 0.0
        %2776 = vmatprep.subr.mxu0 0.0
        %2777 = vmatpush1.msra.mxu0 0.0
        %2778 = vmatprep.subr.mxu0 0.0
        %2779 = vmatpush1.msra.mxu0 0.0
        %2780 = vmatprep.subr.mxu0 0.0
        %2781 = vmatpush1.msra.mxu0 0.0
        %2782 = vmatprep.subr.mxu0 0.0
        %2783 = vmatpush1.msra.mxu0 0.0
        %2784 = vmatprep.subr.mxu0 0.0
        %2785 = vmatpush1.msra.mxu0 0.0
        %2786 = vmatprep.subr.mxu0 0.0
        %2787 = vmatpush1.msra.mxu0 0.0
        %2788 = vmatprep.mubr.f32.mxu0 0.0
        %2789 = vmatmul.mubr.f32.gmra.mrb[0].mxu0 %v2722
        %v2790 = vpop.f32.mrb[0].mxu0
        %v2791 = vadd.f32 0.0, %v2790
        %v2792 = vpop.f32.mrb[0].mxu0
        %v2793 = vadd.f32 0.0, %v2792
        %2794 = vdwg.mxu0
        %v2795 = vadd.f32 %v2625, %v2791
        %v2796 = vadd.f32 %v2626, %v2793
        %2797 = vrot.lane.b32.xlu0 %v1453, 111
        %v2798 = vpop.permute.xlu0 %2797
        %2799 = vrot.lane.b32.xlu0 %v1454, 111
        %v2800 = vpop.permute.xlu0 %2799
        %v2801 = vsel %vm1271, %v2798, %v2800
        %v2802 = vsel %vm1271, %v2800, %v2798
        %v2803 = vmul.f32 %v1280, %v2801
        %v2804 = vmul.f32 %v1284, %v2802
        %s2805 = scalar_lea.vmem %s6, 16
        %v2806 = vld [vmem:[%s2805] sm:$0x3]
        %v2808 = vsel %vm491, %v2806, 0
        %v2811 = vsel %vm495, %v2803, 0
        %v2814 = vsel %vm495, %v2804, 0
        %2816 = vmatprep.subr.mxu0 %v2814
        %2817 = vmatpush1.msra.mxu0 %v2811
        %2818 = vmatprep.subr.mxu0 0.0
        %2819 = vmatpush1.msra.mxu0 0.0
        %2820 = vmatprep.subr.mxu0 0.0
        %2821 = vmatpush1.msra.mxu0 0.0
        %2822 = vmatprep.subr.mxu0 0.0
        %2823 = vmatpush1.msra.mxu0 0.0
        %2824 = vmatprep.subr.mxu0 0.0
        %2825 = vmatpush1.msra.mxu0 0.0
        %2826 = vmatprep.subr.mxu0 0.0
        %2827 = vmatpush1.msra.mxu0 0.0
        %2828 = vmatprep.subr.mxu0 0.0
        %2829 = vmatpush1.msra.mxu0 0.0
        %2830 = vmatprep.subr.mxu0 0.0
        %2831 = vmatpush1.msra.mxu0 0.0
        %2832 = vmatprep.subr.mxu0 0.0
        %2833 = vmatpush1.msra.mxu0 0.0
        %2834 = vmatprep.subr.mxu0 0.0
        %2835 = vmatpush1.msra.mxu0 0.0
        %2836 = vmatprep.subr.mxu0 0.0
        %2837 = vmatpush1.msra.mxu0 0.0
        %2838 = vmatprep.subr.mxu0 0.0
        %2839 = vmatpush1.msra.mxu0 0.0
        %2840 = vmatprep.subr.mxu0 0.0
        %2841 = vmatpush1.msra.mxu0 0.0
        %2842 = vmatprep.subr.mxu0 0.0
        %2843 = vmatpush1.msra.mxu0 0.0
        %2844 = vmatprep.subr.mxu0 0.0
        %2845 = vmatpush1.msra.mxu0 0.0
        %2846 = vmatprep.subr.mxu0 0.0
        %2847 = vmatpush1.msra.mxu0 0.0
        %2848 = vmatprep.subr.mxu0 0.0
        %2849 = vmatpush1.msra.mxu0 0.0
        %2850 = vmatprep.subr.mxu0 0.0
        %2851 = vmatpush1.msra.mxu0 0.0
        %2852 = vmatprep.subr.mxu0 0.0
        %2853 = vmatpush1.msra.mxu0 0.0
        %2854 = vmatprep.subr.mxu0 0.0
        %2855 = vmatpush1.msra.mxu0 0.0
        %2856 = vmatprep.subr.mxu0 0.0
        %2857 = vmatpush1.msra.mxu0 0.0
        %2858 = vmatprep.subr.mxu0 0.0
        %2859 = vmatpush1.msra.mxu0 0.0
        %2860 = vmatprep.subr.mxu0 0.0
        %2861 = vmatpush1.msra.mxu0 0.0
        %2862 = vmatprep.subr.mxu0 0.0
        %2863 = vmatpush1.msra.mxu0 0.0
        %2864 = vmatprep.subr.mxu0 0.0
        %2865 = vmatpush1.msra.mxu0 0.0
        %2866 = vmatprep.subr.mxu0 0.0
        %2867 = vmatpush1.msra.mxu0 0.0
        %2868 = vmatprep.subr.mxu0 0.0
        %2869 = vmatpush1.msra.mxu0 0.0
        %2870 = vmatprep.subr.mxu0 0.0
        %2871 = vmatpush1.msra.mxu0 0.0
        %2872 = vmatprep.subr.mxu0 0.0
        %2873 = vmatpush1.msra.mxu0 0.0
        %2874 = vmatprep.subr.mxu0 0.0
        %2875 = vmatpush1.msra.mxu0 0.0
        %2876 = vmatprep.subr.mxu0 0.0
        %2877 = vmatpush1.msra.mxu0 0.0
        %2878 = vmatprep.subr.mxu0 0.0
        %2879 = vmatpush1.msra.mxu0 0.0
        %2880 = vmatprep.mubr.f32.mxu0 0.0
        %2881 = vmatmul.mubr.f32.gmra.mrb[0].mxu0 %v2808
        %v2882 = vpop.f32.mrb[0].mxu0
        %v2883 = vadd.f32 0.0, %v2882
        %v2884 = vpop.f32.mrb[0].mxu0
        %v2885 = vadd.f32 0.0, %v2884
        %2886 = vdwg.mxu0
        %v2887 = vadd.f32 %v2717, %v2883
        %v2888 = vadd.f32 %v2718, %v2885
        %s2889 = scalar_lea.vmem %s8, 16
        %v2890 = vld [vmem:[%s2889] sm:$0x3]
        %v2892 = vsel %vm491, %v2890, 0
        %2894 = vmatprep.subr.mxu0 %v2814
        %2895 = vmatpush1.msra.mxu0 %v2811
        %2896 = vmatprep.subr.mxu0 0.0
        %2897 = vmatpush1.msra.mxu0 0.0
        %2898 = vmatprep.subr.mxu0 0.0
        %2899 = vmatpush1.msra.mxu0 0.0
        %2900 = vmatprep.subr.mxu0 0.0
        %2901 = vmatpush1.msra.mxu0 0.0
        %2902 = vmatprep.subr.mxu0 0.0
        %2903 = vmatpush1.msra.mxu0 0.0
        %2904 = vmatprep.subr.mxu0 0.0
        %2905 = vmatpush1.msra.mxu0 0.0
        %2906 = vmatprep.subr.mxu0 0.0
        %2907 = vmatpush1.msra.mxu0 0.0
        %2908 = vmatprep.subr.mxu0 0.0
        %2909 = vmatpush1.msra.mxu0 0.0
        %2910 = vmatprep.subr.mxu0 0.0
        %2911 = vmatpush1.msra.mxu0 0.0
        %2912 = vmatprep.subr.mxu0 0.0
        %2913 = vmatpush1.msra.mxu0 0.0
        %2914 = vmatprep.subr.mxu0 0.0
        %2915 = vmatpush1.msra.mxu0 0.0
        %2916 = vmatprep.subr.mxu0 0.0
        %2917 = vmatpush1.msra.mxu0 0.0
        %2918 = vmatprep.subr.mxu0 0.0
        %2919 = vmatpush1.msra.mxu0 0.0
        %2920 = vmatprep.subr.mxu0 0.0
        %2921 = vmatpush1.msra.mxu0 0.0
        %2922 = vmatprep.subr.mxu0 0.0
        %2923 = vmatpush1.msra.mxu0 0.0
        %2924 = vmatprep.subr.mxu0 0.0
        %2925 = vmatpush1.msra.mxu0 0.0
        %2926 = vmatprep.subr.mxu0 0.0
        %2927 = vmatpush1.msra.mxu0 0.0
        %2928 = vmatprep.subr.mxu0 0.0
        %2929 = vmatpush1.msra.mxu0 0.0
        %2930 = vmatprep.subr.mxu0 0.0
        %2931 = vmatpush1.msra.mxu0 0.0
        %2932 = vmatprep.subr.mxu0 0.0
        %2933 = vmatpush1.msra.mxu0 0.0
        %2934 = vmatprep.subr.mxu0 0.0
        %2935 = vmatpush1.msra.mxu0 0.0
        %2936 = vmatprep.subr.mxu0 0.0
        %2937 = vmatpush1.msra.mxu0 0.0
        %2938 = vmatprep.subr.mxu0 0.0
        %2939 = vmatpush1.msra.mxu0 0.0
        %2940 = vmatprep.subr.mxu0 0.0
        %2941 = vmatpush1.msra.mxu0 0.0
        %2942 = vmatprep.subr.mxu0 0.0
        %2943 = vmatpush1.msra.mxu0 0.0
        %2944 = vmatprep.subr.mxu0 0.0
        %2945 = vmatpush1.msra.mxu0 0.0
        %2946 = vmatprep.subr.mxu0 0.0
        %2947 = vmatpush1.msra.mxu0 0.0
        %2948 = vmatprep.subr.mxu0 0.0
        %2949 = vmatpush1.msra.mxu0 0.0
        %2950 = vmatprep.subr.mxu0 0.0
        %2951 = vmatpush1.msra.mxu0 0.0
        %2952 = vmatprep.subr.mxu0 0.0
        %2953 = vmatpush1.msra.mxu0 0.0
        %2954 = vmatprep.subr.mxu0 0.0
        %2955 = vmatpush1.msra.mxu0 0.0
        %2956 = vmatprep.subr.mxu0 0.0
        %2957 = vmatpush1.msra.mxu0 0.0
        %2958 = vmatprep.mubr.f32.mxu0 0.0
        %2959 = vmatmul.mubr.f32.gmra.mrb[0].mxu0 %v2892
        %v2960 = vpop.f32.mrb[0].mxu0
        %v2961 = vadd.f32 0.0, %v2960
        %v2962 = vpop.f32.mrb[0].mxu0
        %v2963 = vadd.f32 0.0, %v2962
        %2964 = vdwg.mxu0
        %v2965 = vadd.f32 %v2795, %v2961
        %v2966 = vadd.f32 %v2796, %v2963
        %v2967 = vld [vmem:[%s7] sm:$0x3]
        %2969 = vset.pattern.permute.xlu0 0
        %2970 = vperm.xlu0 %2969, %v2967
        %v2971 = vpop.permute.xlu0 %2970
        %v2973 = vadd.f32 %v2887, %v2971
        %v2974 = vadd.f32 %v2888, %v2971
        %v2975 = vxor.u32 %v2973, 2147483648
        %v2976 = vxor.u32 %v2974, 2147483648
        %v2977 = vmul.f32 %v2975, 1.442695
        %v2978 = vpow.pop %v2977
        %v2979 = vmul.f32 %v2976, 1.442695
        %v2980 = vpow.pop %v2979
        %v2981 = vadd.f32 %v2978, 1.0
        %v2982 = vadd.f32 %v2980, 1.0
        %v2983 = vrcp.pop %v2981
        %v2984 = vmul.f32 1.0, %v2983
        %v2985 = vrcp.pop %v2982
        %v2986 = vmul.f32 1.0, %v2985
        %v2987 = vmul.f32 %v2984, 2.0
        %v2988 = vmul.f32 %v2986, 2.0
        %v2989 = vsub.f32 %v2987, 1.0
        %v2990 = vsub.f32 %v2988, 1.0
        %v2991 = vmul.f32 %v2989, 0.8
        %v2992 = vmul.f32 %v2990, 0.8
        %v2993 = vmul.f32 %v2991, 1.442695
        %v2994 = vpow.pop %v2993
        %v2995 = vmul.f32 %v2992, 1.442695
        %v2996 = vpow.pop %v2995
        %v2997 = vmul.f32 %v439, %v2994
        %v2998 = vmul.f32 %v441, %v2996
        %v2999 = vadd.f32 %v2997, %v2965
        %v3000 = vadd.f32 %v2998, %v2966
        %v3001 = vld [vmem:[%s9] sm:$0x3]
        %3003 = vset.pattern.permute.xlu0 0
        %3004 = vperm.xlu0 %3003, %v3001
        %v3005 = vpop.permute.xlu0 %3004
        %v3007 = vadd.f32 %v2999, %v3005
        %v3008 = vadd.f32 %v3000, %v3005
        %v3009 = vcombine.low %v1453, %v1454
        %3011 = vst [vmem:[%s352] sm:$0x33] %v3009
        %v3014 = vcombine.low %v3007, %v3008
        %v3015 = vrot.slane %v3014, 6
        %3017 = vst [vmem:[%s352] sm:$0xcc] %v3015
        %s3018 = sand.u32 %s247, 1
        %s3019 = scalar_lea.sflag [#allocation3], %s3018
        %s3020 = sand.u32 %s247, 1
        %s3021 = smul.addr %s3020, 8
        %s3022 = scalar_lea.vmem [#allocation2], %s3021
        // Predicated region
        $region61: #{tpu_custom_call.1} parent=59 // pred_check
          %p3023 = pneg %p257
        $region62: #{tpu_custom_call.1} parent=59 // pred_check_branch
          %3025 = sbr.rel (%p3023) target = $region64
        $region63: #{tpu_custom_call.1} parent=59 // pred_region
          %s3027 = ssub.s32 128, 128
          %3028 = vsyncadd %s3019, %s3027
          %s3029 = smul.addr %s24, 2
          %s3030 = smul.addr %s3029, 64
          %s3031 = scalar_lea.hbm %s10, %s3030
          %s3033 = sshll.u32 %s3022, 4
          %s3034 = int_to_ptr.vmem [resolvable:$true] %s3033
          %3036 = dma.vmem_to_hbm [thread:$0]  %s3034, 128, %s3031, %s3019
        $region64: #{tpu_custom_call.1} parent=59 // pred_fallthru
          _
      $region60: #{tpu_custom_call.1} parent=5 // pred_fallthru
        _
      %p3037 = scmp.le.s32.totalorder 2, %s19
      // Predicated region
      $region65: #{tpu_custom_call.1} parent=5 // pred_check
        %p3038 = pneg %p3037
      $region66: #{tpu_custom_call.1} parent=5 // pred_check_branch
        %3040 = sbr.rel (%p3038) target = $region68
      $region67: #{tpu_custom_call.1} parent=5 // pred_region
        %s3041 = ssub.s32 %s19, 2
        // Predicated region
        $region69: #{tpu_custom_call.1} parent=67 // pred_check
          %p3042 = pneg %p263
        $region70: #{tpu_custom_call.1} parent=67 // pred_check_branch
          %3044 = sbr.rel (%p3042) target = $region72
        $region71: #{tpu_custom_call.1} parent=67 // pred_region
          %s3045 = sand.u32 %s248, 1
          %s3046 = scalar_lea.sflag [#allocation3], %s3045
          %s3047 = sand.u32 %s248, 1
          %s3048 = smul.addr %s3047, 8
          %s3049 = scalar_lea.vmem [#allocation2], %s3048
          %3050 = dma.done %s3046, 128
        $region72: #{tpu_custom_call.1} parent=67 // pred_fallthru
          _
      $region68: #{tpu_custom_call.1} parent=5 // pred_fallthru
        _
    $region6: #{tpu_custom_call.1} parent=1 // loop_footer
      %s23 = sadd.s32 1, %s19
    $region7: #{tpu_custom_call.1} parent=1 // loop_footer_branch
      %18 = sbr.rel target = $region3
    $region8: #{tpu_custom_call.1} parent=1 // loop_exit
      _
    %3051 = vsyncpa [#allocation3], 1
    %s3052 = scalar_lea.sflag [#allocation3], 1
    %3053 = vsyncpa %s3052, 1

</llo_original>
